<compile_context>
chip_gen: v7x
topology: tpu7x:2x2x1
jax: 0.10.0
libtpu: 0.0.40
codegen_flags: <defaults>
</compile_context>

<pallas_src>
import jax
import jax.numpy as jnp
from jax.experimental import pallas as pl
from jax.experimental.pallas import tpu as pltpu

GP = 128  # padded per-gate lane width (>= hidden_size and >= embed_dim, multiple of 128)


# ----------------------------------------------------------------------------
# Single fused kernel: embedding gather + 2-layer LSTM + classifier head.
# ----------------------------------------------------------------------------
def net_kernel(ids_ref,                 # SMEM (T, B) int32 token ids (q1)
               embed_ref,               # VMEM (V, GP)  lane-padded embedding table
               w0_ref, b0_ref,          # layer 0: (2*GP, 4*GP), (1, 4*GP)
               w1_ref, b1_ref,          # layer 1: (2*GP, 4*GP), (1, 4*GP)
               fc1w_ref, fc1b_ref,      # (GP, 128), (1, 128)
               fc2w_ref, fc2b_ref,      # (128, 1), (1, 1)
               out_ref):                # (B, 1)
    T, B = ids_ref.shape

    w0 = w0_ref[...]
    w1 = w1_ref[...]
    # Hoist bias broadcasts out of the unrolled time loop (JAX does not CSE them).
    b0 = jnp.broadcast_to(b0_ref[...], (B, 4 * GP))
    b1 = jnp.broadcast_to(b1_ref[...], (B, 4 * GP))

    # Recurrent state lives in vregs; only the final hidden is ever stored.
    h0 = jnp.zeros((B, GP), jnp.float32)
    c0 = jnp.zeros((B, GP), jnp.float32)
    h1 = jnp.zeros((B, GP), jnp.float32)
    c1 = jnp.zeros((B, GP), jnp.float32)

    def cell(xh, c, w, b):
        # One merged matmul per cell; gate columns are padded to GP lanes so each
        # gate slice below is a whole-vreg (128-lane) slice.
        gates = jnp.dot(xh, w, preferred_element_type=jnp.float32) + b
        i = jax.nn.sigmoid(gates[:, 0 * GP:1 * GP])
        f = jax.nn.sigmoid(gates[:, 1 * GP:2 * GP])
        g = jnp.tanh(gates[:, 2 * GP:3 * GP])
        o = jax.nn.sigmoid(gates[:, 3 * GP:4 * GP])
        c_new = f * c + i * g
        h_new = o * jnp.tanh(c_new)
        return h_new, c_new

    # T is small & static -> unrolled Python loop (LLO-visible schedule).
    for t in range(T):
        # In-kernel embedding gather: one (1, GP) dynamic row load per token.
        x_t = jnp.concatenate(
            [embed_ref[pl.ds(ids_ref[t, b], 1), :] for b in range(B)], axis=0)
        h0, c0 = cell(jnp.concatenate([x_t, h0], axis=1), c0, w0, b0)
        h1, c1 = cell(jnp.concatenate([h0, h1], axis=1), c1, w1, b1)

    # Head: fc1 -> ReLU -> dropout(eval: identity) -> fc2 -> sigmoid.
    # TODO(synk): nn.Dropout(0.5) training-mode mask (pltpu.prng_random_bits) not
    # implemented; eval mode is identity, matching the stated semantics.
    z = jnp.dot(h1, fc1w_ref[...], preferred_element_type=jnp.float32) + fc1b_ref[...]
    z = jnp.maximum(z, 0.0)
    logit = jnp.dot(z, fc2w_ref[...], preferred_element_type=jnp.float32) + fc2b_ref[...]
    out_ref[...] = jax.nn.sigmoid(logit)


# ----------------------------------------------------------------------------
# Parameter preparation (done once, outside the hot path): pad gate columns to
# 128 lanes, stack Wih/Whh into one (2*GP, 4*GP) matrix per layer, pad the
# embedding table and fc1 weight to 128-lane widths.
# ----------------------------------------------------------------------------
def _pad_gate_cols(w, H):
    # (rows, 4H) -> (rows, 4*GP); PyTorch gate order [i, f, g, o], gate k placed
    # at lanes [k*GP, k*GP + H).
    rows = w.shape[0]
    w4 = w.reshape(rows, 4, H)
    return jnp.zeros((rows, 4, GP), jnp.float32).at[:, :, :H].set(w4).reshape(rows, 4 * GP)


def _stack_cell_weights(wih, whh, H):
    # -> (2*GP, 4*GP): rows [0, in_dim) hold Wih, rows [GP, GP+H) hold Whh, rest zero,
    # so padded lanes of x / h never contribute.
    n_in = wih.shape[0]
    W = jnp.zeros((2 * GP, 4 * GP), jnp.float32)
    W = W.at[:n_in].set(_pad_gate_cols(wih, H))
    W = W.at[GP:GP + H].set(_pad_gate_cols(whh, H))
    return W


def prepare_fused_params(params):
    H = params["whh0"].shape[0]
    E = params["wih0"].shape[0]
    V = params["embed"].shape[0]
    assert E <= GP and H <= GP
    return {
        "embed": jnp.zeros((V, GP), jnp.float32).at[:, :E].set(params["embed"]),
        "w0": _stack_cell_weights(params["wih0"], params["whh0"], H),
        "b0": _pad_gate_cols(params["b0"], H),
        "w1": _stack_cell_weights(params["wih1"], params["whh1"], H),
        "b1": _pad_gate_cols(params["b1"], H),
        "fc1_w": jnp.zeros((GP, 128), jnp.float32).at[:H].set(params["fc1_w"]),
        "fc1_b": params["fc1_b"],
        "fc2_w": params["fc2_w"],
        "fc2_b": params["fc2_b"],
    }


# ----------------------------------------------------------------------------
# Forward: one fused pallas_call.  q2 is accepted for API parity but unused --
# the PyTorch forward computes q2's LSTM hidden and then discards it, so the
# output is identical without it.
# ----------------------------------------------------------------------------
def net_forward(q1, q2, fused):
    del q2  # dead branch in the reference module (bidirectional=False)
    T, B = q1.shape
    vmem = pl.BlockSpec(memory_space=pltpu.MemorySpace.VMEM)
    smem = pl.BlockSpec(memory_space=pltpu.MemorySpace.SMEM)
    return pl.pallas_call(
        net_kernel,
        out_shape=jax.ShapeDtypeStruct((B, 1), jnp.float32),
        in_specs=[smem] + [vmem] * 9,
        out_specs=vmem,
    )(q1.astype(jnp.int32), fused["embed"],
      fused["w0"], fused["b0"], fused["w1"], fused["b1"],
      fused["fc1_w"], fused["fc1_b"], fused["fc2_w"], fused["fc2_b"])


def init_params(key, vocab, embed_dim, hidden):
    ks = jax.random.split(key, 12)
    s = 0.1
    H = hidden
    return {
        "embed": jax.random.normal(ks[0], (vocab, embed_dim), jnp.float32) * s,
        # LSTM layer 0 (input = embed_dim); b = b_ih + b_hh folded together.
        "wih0": jax.random.normal(ks[1], (embed_dim, 4 * H), jnp.float32) * s,
        "whh0": jax.random.normal(ks[2], (H, 4 * H), jnp.float32) * s,
        "b0":   jax.random.normal(ks[3], (1, 4 * H), jnp.float32) * s,
        # LSTM layer 1 (input = hidden).
        "wih1": jax.random.normal(ks[4], (H, 4 * H), jnp.float32) * s,
        "whh1": jax.random.normal(ks[5], (H, 4 * H), jnp.float32) * s,
        "b1":   jax.random.normal(ks[6], (1, 4 * H), jnp.float32) * s,
        # Head.
        "fc1_w": jax.random.normal(ks[7], (H, 128), jnp.float32) * s,
        "fc1_b": jax.random.normal(ks[8], (1, 128), jnp.float32) * s,
        "fc2_w": jax.random.normal(ks[9], (128, 1), jnp.float32) * s,
        "fc2_b": jax.random.normal(ks[10], (1, 1), jnp.float32) * s,
    }


if __name__ == "__main__":
    VOCAB, EMBED_DIM, HIDDEN = 50, 32, 32
    SEQ_LEN, BATCH = 8, 4

    key = jax.random.PRNGKey(0)
    kp, kq1, kq2 = jax.random.split(key, 3)
    params = init_params(kp, VOCAB, EMBED_DIM, HIDDEN)
    fused = prepare_fused_params(params)   # one-time weight padding/stacking

    q1 = jax.random.randint(kq1, (SEQ_LEN, BATCH), 0, VOCAB, dtype=jnp.int32)
    q2 = jax.random.randint(kq2, (SEQ_LEN, BATCH), 0, VOCAB, dtype=jnp.int32)

    fwd = jax.jit(net_forward)
    out = jax.block_until_ready(fwd(q1, q2, fused))

    assert out.shape == (BATCH, 1)
    assert bool(jnp.all((out >= 0.0) & (out <= 1.0)))
    print("KERNEL_OK")
</pallas_src>

<mosaic_0001>
module attributes {stable_mosaic.version = 11 : i64} {
  func.func @net_kernel(%arg0: memref<8x4xi32, #tpu.memory_space<smem>>, %arg1: memref<50x128xf32, #tpu.memory_space<vmem>>, %arg2: memref<256x512xf32, #tpu.memory_space<vmem>>, %arg3: memref<1x512xf32, #tpu.memory_space<vmem>>, %arg4: memref<256x512xf32, #tpu.memory_space<vmem>>, %arg5: memref<1x512xf32, #tpu.memory_space<vmem>>, %arg6: memref<128x128xf32, #tpu.memory_space<vmem>>, %arg7: memref<1x128xf32, #tpu.memory_space<vmem>>, %arg8: memref<128x1xf32, #tpu.memory_space<vmem>>, %arg9: memref<1x1xf32, #tpu.memory_space<vmem>>, %arg10: memref<4x1xf32, #tpu.memory_space<vmem>>) attributes {dimension_semantics = [], scalar_prefetch = 0 : i64, scratch_operands = 0 : i64, tpu.core_type = #tpu.core_type<tc>} {
    %c0 = arith.constant 0 : index
    %c0_0 = arith.constant 0 : index
    %0 = vector.load %arg2[%c0, %c0_0] : memref<256x512xf32, #tpu.memory_space<vmem>>, vector<256x512xf32>
    %c0_1 = arith.constant 0 : index
    %c0_2 = arith.constant 0 : index
    %1 = vector.load %arg4[%c0_1, %c0_2] : memref<256x512xf32, #tpu.memory_space<vmem>>, vector<256x512xf32>
    %c0_3 = arith.constant 0 : index
    %c0_4 = arith.constant 0 : index
    %2 = vector.load %arg3[%c0_3, %c0_4] : memref<1x512xf32, #tpu.memory_space<vmem>>, vector<1x512xf32>
    %3 = vector.shape_cast %2 : vector<1x512xf32> to vector<1x512xf32>
    %4 = vector.broadcast %3 : vector<1x512xf32> to vector<4x512xf32>
    %c0_5 = arith.constant 0 : index
    %c0_6 = arith.constant 0 : index
    %5 = vector.load %arg5[%c0_5, %c0_6] : memref<1x512xf32, #tpu.memory_space<vmem>>, vector<1x512xf32>
    %6 = vector.shape_cast %5 : vector<1x512xf32> to vector<1x512xf32>
    %7 = vector.broadcast %6 : vector<1x512xf32> to vector<4x512xf32>
    %cst = arith.constant 0.000000e+00 : f32
    %8 = vector.broadcast %cst : f32 to vector<4x128xf32>
    %cst_7 = arith.constant 0.000000e+00 : f32
    %9 = vector.broadcast %cst_7 : f32 to vector<4x128xf32>
    %cst_8 = arith.constant 0.000000e+00 : f32
    %10 = vector.broadcast %cst_8 : f32 to vector<4x128xf32>
    %cst_9 = arith.constant 0.000000e+00 : f32
    %11 = vector.broadcast %cst_9 : f32 to vector<4x128xf32>
    %c0_10 = arith.constant 0 : index
    %c0_11 = arith.constant 0 : index
    %12 = memref.load %arg0[%c0_10, %c0_11] : memref<8x4xi32, #tpu.memory_space<smem>>
    %13 = arith.index_cast %12 : i32 to index
    %c0_12 = arith.constant 0 : index
    %14 = vector.load %arg1[%13, %c0_12] : memref<50x128xf32, #tpu.memory_space<vmem>>, vector<1x128xf32>
    %c0_13 = arith.constant 0 : index
    %c1 = arith.constant 1 : index
    %15 = memref.load %arg0[%c0_13, %c1] : memref<8x4xi32, #tpu.memory_space<smem>>
    %16 = arith.index_cast %15 : i32 to index
    %c0_14 = arith.constant 0 : index
    %17 = vector.load %arg1[%16, %c0_14] : memref<50x128xf32, #tpu.memory_space<vmem>>, vector<1x128xf32>
    %c0_15 = arith.constant 0 : index
    %c2 = arith.constant 2 : index
    %18 = memref.load %arg0[%c0_15, %c2] : memref<8x4xi32, #tpu.memory_space<smem>>
    %19 = arith.index_cast %18 : i32 to index
    %c0_16 = arith.constant 0 : index
    %20 = vector.load %arg1[%19, %c0_16] : memref<50x128xf32, #tpu.memory_space<vmem>>, vector<1x128xf32>
    %c0_17 = arith.constant 0 : index
    %c3 = arith.constant 3 : index
    %21 = memref.load %arg0[%c0_17, %c3] : memref<8x4xi32, #tpu.memory_space<smem>>
    %22 = arith.index_cast %21 : i32 to index
    %c0_18 = arith.constant 0 : index
    %23 = vector.load %arg1[%22, %c0_18] : memref<50x128xf32, #tpu.memory_space<vmem>>, vector<1x128xf32>
    %24 = tpu.concatenate %14, %17, %20, %23 in 0 : vector<1x128xf32>, vector<1x128xf32>, vector<1x128xf32>, vector<1x128xf32> -> vector<4x128xf32>
    %25 = tpu.concatenate %24, %8 in 1 : vector<4x128xf32>, vector<4x128xf32> -> vector<4x256xf32>
    %cst_19 = arith.constant dense<0.000000e+00> : vector<4x512xf32>
    %26 = tpu.matmul %25, %0, %cst_19 {dimension_numbers = #tpu.dot_dimension_numbers<[1], [0], [0], [1], [0, 0, 1, 1], [], []>} : vector<4x256xf32>, vector<256x512xf32>, vector<4x512xf32> -> vector<4x512xf32>
    %27 = arith.addf %26, %4 : vector<4x512xf32>
    %28 = vector.extract_strided_slice %27 {offsets = [0, 0], sizes = [4, 128], strides = [1, 1]} : vector<4x512xf32> to vector<4x128xf32>
    %29 = arith.negf %28 : vector<4x128xf32>
    %30 = math.exp %29 : vector<4x128xf32>
    %cst_20 = arith.constant 1.000000e+00 : f32
    %31 = vector.broadcast %cst_20 : f32 to vector<4x128xf32>
    %32 = arith.addf %31, %30 : vector<4x128xf32>
    %33 = arith.divf %31, %32 : vector<4x128xf32>
    %34 = vector.extract_strided_slice %27 {offsets = [0, 128], sizes = [4, 128], strides = [1, 1]} : vector<4x512xf32> to vector<4x128xf32>
    %35 = arith.negf %34 : vector<4x128xf32>
    %36 = math.exp %35 : vector<4x128xf32>
    %cst_21 = arith.constant 1.000000e+00 : f32
    %37 = vector.broadcast %cst_21 : f32 to vector<4x128xf32>
    %38 = arith.addf %37, %36 : vector<4x128xf32>
    %39 = arith.divf %37, %38 : vector<4x128xf32>
    %40 = vector.extract_strided_slice %27 {offsets = [0, 256], sizes = [4, 128], strides = [1, 1]} : vector<4x512xf32> to vector<4x128xf32>
    %41 = math.tanh %40 : vector<4x128xf32>
    %42 = vector.extract_strided_slice %27 {offsets = [0, 384], sizes = [4, 128], strides = [1, 1]} : vector<4x512xf32> to vector<4x128xf32>
    %43 = arith.negf %42 : vector<4x128xf32>
    %44 = math.exp %43 : vector<4x128xf32>
    %cst_22 = arith.constant 1.000000e+00 : f32
    %45 = vector.broadcast %cst_22 : f32 to vector<4x128xf32>
    %46 = arith.addf %45, %44 : vector<4x128xf32>
    %47 = arith.divf %45, %46 : vector<4x128xf32>
    %48 = arith.mulf %39, %9 : vector<4x128xf32>
    %49 = arith.mulf %33, %41 : vector<4x128xf32>
    %50 = arith.addf %48, %49 : vector<4x128xf32>
    %51 = math.tanh %50 : vector<4x128xf32>
    %52 = arith.mulf %47, %51 : vector<4x128xf32>
    %53 = tpu.concatenate %52, %10 in 1 : vector<4x128xf32>, vector<4x128xf32> -> vector<4x256xf32>
    %cst_23 = arith.constant dense<0.000000e+00> : vector<4x512xf32>
    %54 = tpu.matmul %53, %1, %cst_23 {dimension_numbers = #tpu.dot_dimension_numbers<[1], [0], [0], [1], [0, 0, 1, 1], [], []>} : vector<4x256xf32>, vector<256x512xf32>, vector<4x512xf32> -> vector<4x512xf32>
    %55 = arith.addf %54, %7 : vector<4x512xf32>
    %56 = vector.extract_strided_slice %55 {offsets = [0, 0], sizes = [4, 128], strides = [1, 1]} : vector<4x512xf32> to vector<4x128xf32>
    %57 = arith.negf %56 : vector<4x128xf32>
    %58 = math.exp %57 : vector<4x128xf32>
    %cst_24 = arith.constant 1.000000e+00 : f32
    %59 = vector.broadcast %cst_24 : f32 to vector<4x128xf32>
    %60 = arith.addf %59, %58 : vector<4x128xf32>
    %61 = arith.divf %59, %60 : vector<4x128xf32>
    %62 = vector.extract_strided_slice %55 {offsets = [0, 128], sizes = [4, 128], strides = [1, 1]} : vector<4x512xf32> to vector<4x128xf32>
    %63 = arith.negf %62 : vector<4x128xf32>
    %64 = math.exp %63 : vector<4x128xf32>
    %cst_25 = arith.constant 1.000000e+00 : f32
    %65 = vector.broadcast %cst_25 : f32 to vector<4x128xf32>
    %66 = arith.addf %65, %64 : vector<4x128xf32>
    %67 = arith.divf %65, %66 : vector<4x128xf32>
    %68 = vector.extract_strided_slice %55 {offsets = [0, 256], sizes = [4, 128], strides = [1, 1]} : vector<4x512xf32> to vector<4x128xf32>
    %69 = math.tanh %68 : vector<4x128xf32>
    %70 = vector.extract_strided_slice %55 {offsets = [0, 384], sizes = [4, 128], strides = [1, 1]} : vector<4x512xf32> to vector<4x128xf32>
    %71 = arith.negf %70 : vector<4x128xf32>
    %72 = math.exp %71 : vector<4x128xf32>
    %cst_26 = arith.constant 1.000000e+00 : f32
    %73 = vector.broadcast %cst_26 : f32 to vector<4x128xf32>
    %74 = arith.addf %73, %72 : vector<4x128xf32>
    %75 = arith.divf %73, %74 : vector<4x128xf32>
    %76 = arith.mulf %67, %11 : vector<4x128xf32>
    %77 = arith.mulf %61, %69 : vector<4x128xf32>
    %78 = arith.addf %76, %77 : vector<4x128xf32>
    %79 = math.tanh %78 : vector<4x128xf32>
    %80 = arith.mulf %75, %79 : vector<4x128xf32>
    %c1_27 = arith.constant 1 : index
    %c0_28 = arith.constant 0 : index
    %81 = memref.load %arg0[%c1_27, %c0_28] : memref<8x4xi32, #tpu.memory_space<smem>>
    %82 = arith.index_cast %81 : i32 to index
    %c0_29 = arith.constant 0 : index
    %83 = vector.load %arg1[%82, %c0_29] : memref<50x128xf32, #tpu.memory_space<vmem>>, vector<1x128xf32>
    %c1_30 = arith.constant 1 : index
    %c1_31 = arith.constant 1 : index
    %84 = memref.load %arg0[%c1_30, %c1_31] : memref<8x4xi32, #tpu.memory_space<smem>>
    %85 = arith.index_cast %84 : i32 to index
    %c0_32 = arith.constant 0 : index
    %86 = vector.load %arg1[%85, %c0_32] : memref<50x128xf32, #tpu.memory_space<vmem>>, vector<1x128xf32>
    %c1_33 = arith.constant 1 : index
    %c2_34 = arith.constant 2 : index
    %87 = memref.load %arg0[%c1_33, %c2_34] : memref<8x4xi32, #tpu.memory_space<smem>>
    %88 = arith.index_cast %87 : i32 to index
    %c0_35 = arith.constant 0 : index
    %89 = vector.load %arg1[%88, %c0_35] : memref<50x128xf32, #tpu.memory_space<vmem>>, vector<1x128xf32>
    %c1_36 = arith.constant 1 : index
    %c3_37 = arith.constant 3 : index
    %90 = memref.load %arg0[%c1_36, %c3_37] : memref<8x4xi32, #tpu.memory_space<smem>>
    %91 = arith.index_cast %90 : i32 to index
    %c0_38 = arith.constant 0 : index
    %92 = vector.load %arg1[%91, %c0_38] : memref<50x128xf32, #tpu.memory_space<vmem>>, vector<1x128xf32>
    %93 = tpu.concatenate %83, %86, %89, %92 in 0 : vector<1x128xf32>, vector<1x128xf32>, vector<1x128xf32>, vector<1x128xf32> -> vector<4x128xf32>
    %94 = tpu.concatenate %93, %52 in 1 : vector<4x128xf32>, vector<4x128xf32> -> vector<4x256xf32>
    %cst_39 = arith.constant dense<0.000000e+00> : vector<4x512xf32>
    %95 = tpu.matmul %94, %0, %cst_39 {dimension_numbers = #tpu.dot_dimension_numbers<[1], [0], [0], [1], [0, 0, 1, 1], [], []>} : vector<4x256xf32>, vector<256x512xf32>, vector<4x512xf32> -> vector<4x512xf32>
    %96 = arith.addf %95, %4 : vector<4x512xf32>
    %97 = vector.extract_strided_slice %96 {offsets = [0, 0], sizes = [4, 128], strides = [1, 1]} : vector<4x512xf32> to vector<4x128xf32>
    %98 = arith.negf %97 : vector<4x128xf32>
    %99 = math.exp %98 : vector<4x128xf32>
    %cst_40 = arith.constant 1.000000e+00 : f32
    %100 = vector.broadcast %cst_40 : f32 to vector<4x128xf32>
    %101 = arith.addf %100, %99 : vector<4x128xf32>
    %102 = arith.divf %100, %101 : vector<4x128xf32>
    %103 = vector.extract_strided_slice %96 {offsets = [0, 128], sizes = [4, 128], strides = [1, 1]} : vector<4x512xf32> to vector<4x128xf32>
    %104 = arith.negf %103 : vector<4x128xf32>
    %105 = math.exp %104 : vector<4x128xf32>
    %cst_41 = arith.constant 1.000000e+00 : f32
    %106 = vector.broadcast %cst_41 : f32 to vector<4x128xf32>
    %107 = arith.addf %106, %105 : vector<4x128xf32>
    %108 = arith.divf %106, %107 : vector<4x128xf32>
    %109 = vector.extract_strided_slice %96 {offsets = [0, 256], sizes = [4, 128], strides = [1, 1]} : vector<4x512xf32> to vector<4x128xf32>
    %110 = math.tanh %109 : vector<4x128xf32>
    %111 = vector.extract_strided_slice %96 {offsets = [0, 384], sizes = [4, 128], strides = [1, 1]} : vector<4x512xf32> to vector<4x128xf32>
    %112 = arith.negf %111 : vector<4x128xf32>
    %113 = math.exp %112 : vector<4x128xf32>
    %cst_42 = arith.constant 1.000000e+00 : f32
    %114 = vector.broadcast %cst_42 : f32 to vector<4x128xf32>
    %115 = arith.addf %114, %113 : vector<4x128xf32>
    %116 = arith.divf %114, %115 : vector<4x128xf32>
    %117 = arith.mulf %108, %50 : vector<4x128xf32>
    %118 = arith.mulf %102, %110 : vector<4x128xf32>
    %119 = arith.addf %117, %118 : vector<4x128xf32>
    %120 = math.tanh %119 : vector<4x128xf32>
    %121 = arith.mulf %116, %120 : vector<4x128xf32>
    %122 = tpu.concatenate %121, %80 in 1 : vector<4x128xf32>, vector<4x128xf32> -> vector<4x256xf32>
    %cst_43 = arith.constant dense<0.000000e+00> : vector<4x512xf32>
    %123 = tpu.matmul %122, %1, %cst_43 {dimension_numbers = #tpu.dot_dimension_numbers<[1], [0], [0], [1], [0, 0, 1, 1], [], []>} : vector<4x256xf32>, vector<256x512xf32>, vector<4x512xf32> -> vector<4x512xf32>
    %124 = arith.addf %123, %7 : vector<4x512xf32>
    %125 = vector.extract_strided_slice %124 {offsets = [0, 0], sizes = [4, 128], strides = [1, 1]} : vector<4x512xf32> to vector<4x128xf32>
    %126 = arith.negf %125 : vector<4x128xf32>
    %127 = math.exp %126 : vector<4x128xf32>
    %cst_44 = arith.constant 1.000000e+00 : f32
    %128 = vector.broadcast %cst_44 : f32 to vector<4x128xf32>
    %129 = arith.addf %128, %127 : vector<4x128xf32>
    %130 = arith.divf %128, %129 : vector<4x128xf32>
    %131 = vector.extract_strided_slice %124 {offsets = [0, 128], sizes = [4, 128], strides = [1, 1]} : vector<4x512xf32> to vector<4x128xf32>
    %132 = arith.negf %131 : vector<4x128xf32>
    %133 = math.exp %132 : vector<4x128xf32>
    %cst_45 = arith.constant 1.000000e+00 : f32
    %134 = vector.broadcast %cst_45 : f32 to vector<4x128xf32>
    %135 = arith.addf %134, %133 : vector<4x128xf32>
    %136 = arith.divf %134, %135 : vector<4x128xf32>
    %137 = vector.extract_strided_slice %124 {offsets = [0, 256], sizes = [4, 128], strides = [1, 1]} : vector<4x512xf32> to vector<4x128xf32>
    %138 = math.tanh %137 : vector<4x128xf32>
    %139 = vector.extract_strided_slice %124 {offsets = [0, 384], sizes = [4, 128], strides = [1, 1]} : vector<4x512xf32> to vector<4x128xf32>
    %140 = arith.negf %139 : vector<4x128xf32>
    %141 = math.exp %140 : vector<4x128xf32>
    %cst_46 = arith.constant 1.000000e+00 : f32
    %142 = vector.broadcast %cst_46 : f32 to vector<4x128xf32>
    %143 = arith.addf %142, %141 : vector<4x128xf32>
    %144 = arith.divf %142, %143 : vector<4x128xf32>
    %145 = arith.mulf %136, %78 : vector<4x128xf32>
    %146 = arith.mulf %130, %138 : vector<4x128xf32>
    %147 = arith.addf %145, %146 : vector<4x128xf32>
    %148 = math.tanh %147 : vector<4x128xf32>
    %149 = arith.mulf %144, %148 : vector<4x128xf32>
    %c2_47 = arith.constant 2 : index
    %c0_48 = arith.constant 0 : index
    %150 = memref.load %arg0[%c2_47, %c0_48] : memref<8x4xi32, #tpu.memory_space<smem>>
    %151 = arith.index_cast %150 : i32 to index
    %c0_49 = arith.constant 0 : index
    %152 = vector.load %arg1[%151, %c0_49] : memref<50x128xf32, #tpu.memory_space<vmem>>, vector<1x128xf32>
    %c2_50 = arith.constant 2 : index
    %c1_51 = arith.constant 1 : index
    %153 = memref.load %arg0[%c2_50, %c1_51] : memref<8x4xi32, #tpu.memory_space<smem>>
    %154 = arith.index_cast %153 : i32 to index
    %c0_52 = arith.constant 0 : index
    %155 = vector.load %arg1[%154, %c0_52] : memref<50x128xf32, #tpu.memory_space<vmem>>, vector<1x128xf32>
    %c2_53 = arith.constant 2 : index
    %c2_54 = arith.constant 2 : index
    %156 = memref.load %arg0[%c2_53, %c2_54] : memref<8x4xi32, #tpu.memory_space<smem>>
    %157 = arith.index_cast %156 : i32 to index
    %c0_55 = arith.constant 0 : index
    %158 = vector.load %arg1[%157, %c0_55] : memref<50x128xf32, #tpu.memory_space<vmem>>, vector<1x128xf32>
    %c2_56 = arith.constant 2 : index
    %c3_57 = arith.constant 3 : index
    %159 = memref.load %arg0[%c2_56, %c3_57] : memref<8x4xi32, #tpu.memory_space<smem>>
    %160 = arith.index_cast %159 : i32 to index
    %c0_58 = arith.constant 0 : index
    %161 = vector.load %arg1[%160, %c0_58] : memref<50x128xf32, #tpu.memory_space<vmem>>, vector<1x128xf32>
    %162 = tpu.concatenate %152, %155, %158, %161 in 0 : vector<1x128xf32>, vector<1x128xf32>, vector<1x128xf32>, vector<1x128xf32> -> vector<4x128xf32>
    %163 = tpu.concatenate %162, %121 in 1 : vector<4x128xf32>, vector<4x128xf32> -> vector<4x256xf32>
    %cst_59 = arith.constant dense<0.000000e+00> : vector<4x512xf32>
    %164 = tpu.matmul %163, %0, %cst_59 {dimension_numbers = #tpu.dot_dimension_numbers<[1], [0], [0], [1], [0, 0, 1, 1], [], []>} : vector<4x256xf32>, vector<256x512xf32>, vector<4x512xf32> -> vector<4x512xf32>
    %165 = arith.addf %164, %4 : vector<4x512xf32>
    %166 = vector.extract_strided_slice %165 {offsets = [0, 0], sizes = [4, 128], strides = [1, 1]} : vector<4x512xf32> to vector<4x128xf32>
    %167 = arith.negf %166 : vector<4x128xf32>
    %168 = math.exp %167 : vector<4x128xf32>
    %cst_60 = arith.constant 1.000000e+00 : f32
    %169 = vector.broadcast %cst_60 : f32 to vector<4x128xf32>
    %170 = arith.addf %169, %168 : vector<4x128xf32>
    %171 = arith.divf %169, %170 : vector<4x128xf32>
    %172 = vector.extract_strided_slice %165 {offsets = [0, 128], sizes = [4, 128], strides = [1, 1]} : vector<4x512xf32> to vector<4x128xf32>
    %173 = arith.negf %172 : vector<4x128xf32>
    %174 = math.exp %173 : vector<4x128xf32>
    %cst_61 = arith.constant 1.000000e+00 : f32
    %175 = vector.broadcast %cst_61 : f32 to vector<4x128xf32>
    %176 = arith.addf %175, %174 : vector<4x128xf32>
    %177 = arith.divf %175, %176 : vector<4x128xf32>
    %178 = vector.extract_strided_slice %165 {offsets = [0, 256], sizes = [4, 128], strides = [1, 1]} : vector<4x512xf32> to vector<4x128xf32>
    %179 = math.tanh %178 : vector<4x128xf32>
    %180 = vector.extract_strided_slice %165 {offsets = [0, 384], sizes = [4, 128], strides = [1, 1]} : vector<4x512xf32> to vector<4x128xf32>
    %181 = arith.negf %180 : vector<4x128xf32>
    %182 = math.exp %181 : vector<4x128xf32>
    %cst_62 = arith.constant 1.000000e+00 : f32
    %183 = vector.broadcast %cst_62 : f32 to vector<4x128xf32>
    %184 = arith.addf %183, %182 : vector<4x128xf32>
    %185 = arith.divf %183, %184 : vector<4x128xf32>
    %186 = arith.mulf %177, %119 : vector<4x128xf32>
    %187 = arith.mulf %171, %179 : vector<4x128xf32>
    %188 = arith.addf %186, %187 : vector<4x128xf32>
    %189 = math.tanh %188 : vector<4x128xf32>
    %190 = arith.mulf %185, %189 : vector<4x128xf32>
    %191 = tpu.concatenate %190, %149 in 1 : vector<4x128xf32>, vector<4x128xf32> -> vector<4x256xf32>
    %cst_63 = arith.constant dense<0.000000e+00> : vector<4x512xf32>
    %192 = tpu.matmul %191, %1, %cst_63 {dimension_numbers = #tpu.dot_dimension_numbers<[1], [0], [0], [1], [0, 0, 1, 1], [], []>} : vector<4x256xf32>, vector<256x512xf32>, vector<4x512xf32> -> vector<4x512xf32>
    %193 = arith.addf %192, %7 : vector<4x512xf32>
    %194 = vector.extract_strided_slice %193 {offsets = [0, 0], sizes = [4, 128], strides = [1, 1]} : vector<4x512xf32> to vector<4x128xf32>
    %195 = arith.negf %194 : vector<4x128xf32>
    %196 = math.exp %195 : vector<4x128xf32>
    %cst_64 = arith.constant 1.000000e+00 : f32
    %197 = vector.broadcast %cst_64 : f32 to vector<4x128xf32>
    %198 = arith.addf %197, %196 : vector<4x128xf32>
    %199 = arith.divf %197, %198 : vector<4x128xf32>
    %200 = vector.extract_strided_slice %193 {offsets = [0, 128], sizes = [4, 128], strides = [1, 1]} : vector<4x512xf32> to vector<4x128xf32>
    %201 = arith.negf %200 : vector<4x128xf32>
    %202 = math.exp %201 : vector<4x128xf32>
    %cst_65 = arith.constant 1.000000e+00 : f32
    %203 = vector.broadcast %cst_65 : f32 to vector<4x128xf32>
    %204 = arith.addf %203, %202 : vector<4x128xf32>
    %205 = arith.divf %203, %204 : vector<4x128xf32>
    %206 = vector.extract_strided_slice %193 {offsets = [0, 256], sizes = [4, 128], strides = [1, 1]} : vector<4x512xf32> to vector<4x128xf32>
    %207 = math.tanh %206 : vector<4x128xf32>
    %208 = vector.extract_strided_slice %193 {offsets = [0, 384], sizes = [4, 128], strides = [1, 1]} : vector<4x512xf32> to vector<4x128xf32>
    %209 = arith.negf %208 : vector<4x128xf32>
    %210 = math.exp %209 : vector<4x128xf32>
    %cst_66 = arith.constant 1.000000e+00 : f32
    %211 = vector.broadcast %cst_66 : f32 to vector<4x128xf32>
    %212 = arith.addf %211, %210 : vector<4x128xf32>
    %213 = arith.divf %211, %212 : vector<4x128xf32>
    %214 = arith.mulf %205, %147 : vector<4x128xf32>
    %215 = arith.mulf %199, %207 : vector<4x128xf32>
    %216 = arith.addf %214, %215 : vector<4x128xf32>
    %217 = math.tanh %216 : vector<4x128xf32>
    %218 = arith.mulf %213, %217 : vector<4x128xf32>
    %c3_67 = arith.constant 3 : index
    %c0_68 = arith.constant 0 : index
    %219 = memref.load %arg0[%c3_67, %c0_68] : memref<8x4xi32, #tpu.memory_space<smem>>
    %220 = arith.index_cast %219 : i32 to index
    %c0_69 = arith.constant 0 : index
    %221 = vector.load %arg1[%220, %c0_69] : memref<50x128xf32, #tpu.memory_space<vmem>>, vector<1x128xf32>
    %c3_70 = arith.constant 3 : index
    %c1_71 = arith.constant 1 : index
    %222 = memref.load %arg0[%c3_70, %c1_71] : memref<8x4xi32, #tpu.memory_space<smem>>
    %223 = arith.index_cast %222 : i32 to index
    %c0_72 = arith.constant 0 : index
    %224 = vector.load %arg1[%223, %c0_72] : memref<50x128xf32, #tpu.memory_space<vmem>>, vector<1x128xf32>
    %c3_73 = arith.constant 3 : index
    %c2_74 = arith.constant 2 : index
    %225 = memref.load %arg0[%c3_73, %c2_74] : memref<8x4xi32, #tpu.memory_space<smem>>
    %226 = arith.index_cast %225 : i32 to index
    %c0_75 = arith.constant 0 : index
    %227 = vector.load %arg1[%226, %c0_75] : memref<50x128xf32, #tpu.memory_space<vmem>>, vector<1x128xf32>
    %c3_76 = arith.constant 3 : index
    %c3_77 = arith.constant 3 : index
    %228 = memref.load %arg0[%c3_76, %c3_77] : memref<8x4xi32, #tpu.memory_space<smem>>
    %229 = arith.index_cast %228 : i32 to index
    %c0_78 = arith.constant 0 : index
    %230 = vector.load %arg1[%229, %c0_78] : memref<50x128xf32, #tpu.memory_space<vmem>>, vector<1x128xf32>
    %231 = tpu.concatenate %221, %224, %227, %230 in 0 : vector<1x128xf32>, vector<1x128xf32>, vector<1x128xf32>, vector<1x128xf32> -> vector<4x128xf32>
    %232 = tpu.concatenate %231, %190 in 1 : vector<4x128xf32>, vector<4x128xf32> -> vector<4x256xf32>
    %cst_79 = arith.constant dense<0.000000e+00> : vector<4x512xf32>
    %233 = tpu.matmul %232, %0, %cst_79 {dimension_numbers = #tpu.dot_dimension_numbers<[1], [0], [0], [1], [0, 0, 1, 1], [], []>} : vector<4x256xf32>, vector<256x512xf32>, vector<4x512xf32> -> vector<4x512xf32>
    %234 = arith.addf %233, %4 : vector<4x512xf32>
    %235 = vector.extract_strided_slice %234 {offsets = [0, 0], sizes = [4, 128], strides = [1, 1]} : vector<4x512xf32> to vector<4x128xf32>
    %236 = arith.negf %235 : vector<4x128xf32>
    %237 = math.exp %236 : vector<4x128xf32>
    %cst_80 = arith.constant 1.000000e+00 : f32
    %238 = vector.broadcast %cst_80 : f32 to vector<4x128xf32>
    %239 = arith.addf %238, %237 : vector<4x128xf32>
    %240 = arith.divf %238, %239 : vector<4x128xf32>
    %241 = vector.extract_strided_slice %234 {offsets = [0, 128], sizes = [4, 128], strides = [1, 1]} : vector<4x512xf32> to vector<4x128xf32>
    %242 = arith.negf %241 : vector<4x128xf32>
    %243 = math.exp %242 : vector<4x128xf32>
    %cst_81 = arith.constant 1.000000e+00 : f32
    %244 = vector.broadcast %cst_81 : f32 to vector<4x128xf32>
    %245 = arith.addf %244, %243 : vector<4x128xf32>
    %246 = arith.divf %244, %245 : vector<4x128xf32>
    %247 = vector.extract_strided_slice %234 {offsets = [0, 256], sizes = [4, 128], strides = [1, 1]} : vector<4x512xf32> to vector<4x128xf32>
    %248 = math.tanh %247 : vector<4x128xf32>
    %249 = vector.extract_strided_slice %234 {offsets = [0, 384], sizes = [4, 128], strides = [1, 1]} : vector<4x512xf32> to vector<4x128xf32>
    %250 = arith.negf %249 : vector<4x128xf32>
    %251 = math.exp %250 : vector<4x128xf32>
    %cst_82 = arith.constant 1.000000e+00 : f32
    %252 = vector.broadcast %cst_82 : f32 to vector<4x128xf32>
    %253 = arith.addf %252, %251 : vector<4x128xf32>
    %254 = arith.divf %252, %253 : vector<4x128xf32>
    %255 = arith.mulf %246, %188 : vector<4x128xf32>
    %256 = arith.mulf %240, %248 : vector<4x128xf32>
    %257 = arith.addf %255, %256 : vector<4x128xf32>
    %258 = math.tanh %257 : vector<4x128xf32>
    %259 = arith.mulf %254, %258 : vector<4x128xf32>
    %260 = tpu.concatenate %259, %218 in 1 : vector<4x128xf32>, vector<4x128xf32> -> vector<4x256xf32>
    %cst_83 = arith.constant dense<0.000000e+00> : vector<4x512xf32>
    %261 = tpu.matmul %260, %1, %cst_83 {dimension_numbers = #tpu.dot_dimension_numbers<[1], [0], [0], [1], [0, 0, 1, 1], [], []>} : vector<4x256xf32>, vector<256x512xf32>, vector<4x512xf32> -> vector<4x512xf32>
    %262 = arith.addf %261, %7 : vector<4x512xf32>
    %263 = vector.extract_strided_slice %262 {offsets = [0, 0], sizes = [4, 128], strides = [1, 1]} : vector<4x512xf32> to vector<4x128xf32>
    %264 = arith.negf %263 : vector<4x128xf32>
    %265 = math.exp %264 : vector<4x128xf32>
    %cst_84 = arith.constant 1.000000e+00 : f32
    %266 = vector.broadcast %cst_84 : f32 to vector<4x128xf32>
    %267 = arith.addf %266, %265 : vector<4x128xf32>
    %268 = arith.divf %266, %267 : vector<4x128xf32>
    %269 = vector.extract_strided_slice %262 {offsets = [0, 128], sizes = [4, 128], strides = [1, 1]} : vector<4x512xf32> to vector<4x128xf32>
    %270 = arith.negf %269 : vector<4x128xf32>
    %271 = math.exp %270 : vector<4x128xf32>
    %cst_85 = arith.constant 1.000000e+00 : f32
    %272 = vector.broadcast %cst_85 : f32 to vector<4x128xf32>
    %273 = arith.addf %272, %271 : vector<4x128xf32>
    %274 = arith.divf %272, %273 : vector<4x128xf32>
    %275 = vector.extract_strided_slice %262 {offsets = [0, 256], sizes = [4, 128], strides = [1, 1]} : vector<4x512xf32> to vector<4x128xf32>
    %276 = math.tanh %275 : vector<4x128xf32>
    %277 = vector.extract_strided_slice %262 {offsets = [0, 384], sizes = [4, 128], strides = [1, 1]} : vector<4x512xf32> to vector<4x128xf32>
    %278 = arith.negf %277 : vector<4x128xf32>
    %279 = math.exp %278 : vector<4x128xf32>
    %cst_86 = arith.constant 1.000000e+00 : f32
    %280 = vector.broadcast %cst_86 : f32 to vector<4x128xf32>
    %281 = arith.addf %280, %279 : vector<4x128xf32>
    %282 = arith.divf %280, %281 : vector<4x128xf32>
    %283 = arith.mulf %274, %216 : vector<4x128xf32>
    %284 = arith.mulf %268, %276 : vector<4x128xf32>
    %285 = arith.addf %283, %284 : vector<4x128xf32>
    %286 = math.tanh %285 : vector<4x128xf32>
    %287 = arith.mulf %282, %286 : vector<4x128xf32>
    %c4 = arith.constant 4 : index
    %c0_87 = arith.constant 0 : index
    %288 = memref.load %arg0[%c4, %c0_87] : memref<8x4xi32, #tpu.memory_space<smem>>
    %289 = arith.index_cast %288 : i32 to index
    %c0_88 = arith.constant 0 : index
    %290 = vector.load %arg1[%289, %c0_88] : memref<50x128xf32, #tpu.memory_space<vmem>>, vector<1x128xf32>
    %c4_89 = arith.constant 4 : index
    %c1_90 = arith.constant 1 : index
    %291 = memref.load %arg0[%c4_89, %c1_90] : memref<8x4xi32, #tpu.memory_space<smem>>
    %292 = arith.index_cast %291 : i32 to index
    %c0_91 = arith.constant 0 : index
    %293 = vector.load %arg1[%292, %c0_91] : memref<50x128xf32, #tpu.memory_space<vmem>>, vector<1x128xf32>
    %c4_92 = arith.constant 4 : index
    %c2_93 = arith.constant 2 : index
    %294 = memref.load %arg0[%c4_92, %c2_93] : memref<8x4xi32, #tpu.memory_space<smem>>
    %295 = arith.index_cast %294 : i32 to index
    %c0_94 = arith.constant 0 : index
    %296 = vector.load %arg1[%295, %c0_94] : memref<50x128xf32, #tpu.memory_space<vmem>>, vector<1x128xf32>
    %c4_95 = arith.constant 4 : index
    %c3_96 = arith.constant 3 : index
    %297 = memref.load %arg0[%c4_95, %c3_96] : memref<8x4xi32, #tpu.memory_space<smem>>
    %298 = arith.index_cast %297 : i32 to index
    %c0_97 = arith.constant 0 : index
    %299 = vector.load %arg1[%298, %c0_97] : memref<50x128xf32, #tpu.memory_space<vmem>>, vector<1x128xf32>
    %300 = tpu.concatenate %290, %293, %296, %299 in 0 : vector<1x128xf32>, vector<1x128xf32>, vector<1x128xf32>, vector<1x128xf32> -> vector<4x128xf32>
    %301 = tpu.concatenate %300, %259 in 1 : vector<4x128xf32>, vector<4x128xf32> -> vector<4x256xf32>
    %cst_98 = arith.constant dense<0.000000e+00> : vector<4x512xf32>
    %302 = tpu.matmul %301, %0, %cst_98 {dimension_numbers = #tpu.dot_dimension_numbers<[1], [0], [0], [1], [0, 0, 1, 1], [], []>} : vector<4x256xf32>, vector<256x512xf32>, vector<4x512xf32> -> vector<4x512xf32>
    %303 = arith.addf %302, %4 : vector<4x512xf32>
    %304 = vector.extract_strided_slice %303 {offsets = [0, 0], sizes = [4, 128], strides = [1, 1]} : vector<4x512xf32> to vector<4x128xf32>
    %305 = arith.negf %304 : vector<4x128xf32>
    %306 = math.exp %305 : vector<4x128xf32>
    %cst_99 = arith.constant 1.000000e+00 : f32
    %307 = vector.broadcast %cst_99 : f32 to vector<4x128xf32>
    %308 = arith.addf %307, %306 : vector<4x128xf32>
    %309 = arith.divf %307, %308 : vector<4x128xf32>
    %310 = vector.extract_strided_slice %303 {offsets = [0, 128], sizes = [4, 128], strides = [1, 1]} : vector<4x512xf32> to vector<4x128xf32>
    %311 = arith.negf %310 : vector<4x128xf32>
    %312 = math.exp %311 : vector<4x128xf32>
    %cst_100 = arith.constant 1.000000e+00 : f32
    %313 = vector.broadcast %cst_100 : f32 to vector<4x128xf32>
    %314 = arith.addf %313, %312 : vector<4x128xf32>
    %315 = arith.divf %313, %314 : vector<4x128xf32>
    %316 = vector.extract_strided_slice %303 {offsets = [0, 256], sizes = [4, 128], strides = [1, 1]} : vector<4x512xf32> to vector<4x128xf32>
    %317 = math.tanh %316 : vector<4x128xf32>
    %318 = vector.extract_strided_slice %303 {offsets = [0, 384], sizes = [4, 128], strides = [1, 1]} : vector<4x512xf32> to vector<4x128xf32>
    %319 = arith.negf %318 : vector<4x128xf32>
    %320 = math.exp %319 : vector<4x128xf32>
    %cst_101 = arith.constant 1.000000e+00 : f32
    %321 = vector.broadcast %cst_101 : f32 to vector<4x128xf32>
    %322 = arith.addf %321, %320 : vector<4x128xf32>
    %323 = arith.divf %321, %322 : vector<4x128xf32>
    %324 = arith.mulf %315, %257 : vector<4x128xf32>
    %325 = arith.mulf %309, %317 : vector<4x128xf32>
    %326 = arith.addf %324, %325 : vector<4x128xf32>
    %327 = math.tanh %326 : vector<4x128xf32>
    %328 = arith.mulf %323, %327 : vector<4x128xf32>
    %329 = tpu.concatenate %328, %287 in 1 : vector<4x128xf32>, vector<4x128xf32> -> vector<4x256xf32>
    %cst_102 = arith.constant dense<0.000000e+00> : vector<4x512xf32>
    %330 = tpu.matmul %329, %1, %cst_102 {dimension_numbers = #tpu.dot_dimension_numbers<[1], [0], [0], [1], [0, 0, 1, 1], [], []>} : vector<4x256xf32>, vector<256x512xf32>, vector<4x512xf32> -> vector<4x512xf32>
    %331 = arith.addf %330, %7 : vector<4x512xf32>
    %332 = vector.extract_strided_slice %331 {offsets = [0, 0], sizes = [4, 128], strides = [1, 1]} : vector<4x512xf32> to vector<4x128xf32>
    %333 = arith.negf %332 : vector<4x128xf32>
    %334 = math.exp %333 : vector<4x128xf32>
    %cst_103 = arith.constant 1.000000e+00 : f32
    %335 = vector.broadcast %cst_103 : f32 to vector<4x128xf32>
    %336 = arith.addf %335, %334 : vector<4x128xf32>
    %337 = arith.divf %335, %336 : vector<4x128xf32>
    %338 = vector.extract_strided_slice %331 {offsets = [0, 128], sizes = [4, 128], strides = [1, 1]} : vector<4x512xf32> to vector<4x128xf32>
    %339 = arith.negf %338 : vector<4x128xf32>
    %340 = math.exp %339 : vector<4x128xf32>
    %cst_104 = arith.constant 1.000000e+00 : f32
    %341 = vector.broadcast %cst_104 : f32 to vector<4x128xf32>
    %342 = arith.addf %341, %340 : vector<4x128xf32>
    %343 = arith.divf %341, %342 : vector<4x128xf32>
    %344 = vector.extract_strided_slice %331 {offsets = [0, 256], sizes = [4, 128], strides = [1, 1]} : vector<4x512xf32> to vector<4x128xf32>
    %345 = math.tanh %344 : vector<4x128xf32>
    %346 = vector.extract_strided_slice %331 {offsets = [0, 384], sizes = [4, 128], strides = [1, 1]} : vector<4x512xf32> to vector<4x128xf32>
    %347 = arith.negf %346 : vector<4x128xf32>
    %348 = math.exp %347 : vector<4x128xf32>
    %cst_105 = arith.constant 1.000000e+00 : f32
    %349 = vector.broadcast %cst_105 : f32 to vector<4x128xf32>
    %350 = arith.addf %349, %348 : vector<4x128xf32>
    %351 = arith.divf %349, %350 : vector<4x128xf32>
    %352 = arith.mulf %343, %285 : vector<4x128xf32>
    %353 = arith.mulf %337, %345 : vector<4x128xf32>
    %354 = arith.addf %352, %353 : vector<4x128xf32>
    %355 = math.tanh %354 : vector<4x128xf32>
    %356 = arith.mulf %351, %355 : vector<4x128xf32>
    %c5 = arith.constant 5 : index
    %c0_106 = arith.constant 0 : index
    %357 = memref.load %arg0[%c5, %c0_106] : memref<8x4xi32, #tpu.memory_space<smem>>
    %358 = arith.index_cast %357 : i32 to index
    %c0_107 = arith.constant 0 : index
    %359 = vector.load %arg1[%358, %c0_107] : memref<50x128xf32, #tpu.memory_space<vmem>>, vector<1x128xf32>
    %c5_108 = arith.constant 5 : index
    %c1_109 = arith.constant 1 : index
    %360 = memref.load %arg0[%c5_108, %c1_109] : memref<8x4xi32, #tpu.memory_space<smem>>
    %361 = arith.index_cast %360 : i32 to index
    %c0_110 = arith.constant 0 : index
    %362 = vector.load %arg1[%361, %c0_110] : memref<50x128xf32, #tpu.memory_space<vmem>>, vector<1x128xf32>
    %c5_111 = arith.constant 5 : index
    %c2_112 = arith.constant 2 : index
    %363 = memref.load %arg0[%c5_111, %c2_112] : memref<8x4xi32, #tpu.memory_space<smem>>
    %364 = arith.index_cast %363 : i32 to index
    %c0_113 = arith.constant 0 : index
    %365 = vector.load %arg1[%364, %c0_113] : memref<50x128xf32, #tpu.memory_space<vmem>>, vector<1x128xf32>
    %c5_114 = arith.constant 5 : index
    %c3_115 = arith.constant 3 : index
    %366 = memref.load %arg0[%c5_114, %c3_115] : memref<8x4xi32, #tpu.memory_space<smem>>
    %367 = arith.index_cast %366 : i32 to index
    %c0_116 = arith.constant 0 : index
    %368 = vector.load %arg1[%367, %c0_116] : memref<50x128xf32, #tpu.memory_space<vmem>>, vector<1x128xf32>
    %369 = tpu.concatenate %359, %362, %365, %368 in 0 : vector<1x128xf32>, vector<1x128xf32>, vector<1x128xf32>, vector<1x128xf32> -> vector<4x128xf32>
    %370 = tpu.concatenate %369, %328 in 1 : vector<4x128xf32>, vector<4x128xf32> -> vector<4x256xf32>
    %cst_117 = arith.constant dense<0.000000e+00> : vector<4x512xf32>
    %371 = tpu.matmul %370, %0, %cst_117 {dimension_numbers = #tpu.dot_dimension_numbers<[1], [0], [0], [1], [0, 0, 1, 1], [], []>} : vector<4x256xf32>, vector<256x512xf32>, vector<4x512xf32> -> vector<4x512xf32>
    %372 = arith.addf %371, %4 : vector<4x512xf32>
    %373 = vector.extract_strided_slice %372 {offsets = [0, 0], sizes = [4, 128], strides = [1, 1]} : vector<4x512xf32> to vector<4x128xf32>
    %374 = arith.negf %373 : vector<4x128xf32>
    %375 = math.exp %374 : vector<4x128xf32>
    %cst_118 = arith.constant 1.000000e+00 : f32
    %376 = vector.broadcast %cst_118 : f32 to vector<4x128xf32>
    %377 = arith.addf %376, %375 : vector<4x128xf32>
    %378 = arith.divf %376, %377 : vector<4x128xf32>
    %379 = vector.extract_strided_slice %372 {offsets = [0, 128], sizes = [4, 128], strides = [1, 1]} : vector<4x512xf32> to vector<4x128xf32>
    %380 = arith.negf %379 : vector<4x128xf32>
    %381 = math.exp %380 : vector<4x128xf32>
    %cst_119 = arith.constant 1.000000e+00 : f32
    %382 = vector.broadcast %cst_119 : f32 to vector<4x128xf32>
    %383 = arith.addf %382, %381 : vector<4x128xf32>
    %384 = arith.divf %382, %383 : vector<4x128xf32>
    %385 = vector.extract_strided_slice %372 {offsets = [0, 256], sizes = [4, 128], strides = [1, 1]} : vector<4x512xf32> to vector<4x128xf32>
    %386 = math.tanh %385 : vector<4x128xf32>
    %387 = vector.extract_strided_slice %372 {offsets = [0, 384], sizes = [4, 128], strides = [1, 1]} : vector<4x512xf32> to vector<4x128xf32>
    %388 = arith.negf %387 : vector<4x128xf32>
    %389 = math.exp %388 : vector<4x128xf32>
    %cst_120 = arith.constant 1.000000e+00 : f32
    %390 = vector.broadcast %cst_120 : f32 to vector<4x128xf32>
    %391 = arith.addf %390, %389 : vector<4x128xf32>
    %392 = arith.divf %390, %391 : vector<4x128xf32>
    %393 = arith.mulf %384, %326 : vector<4x128xf32>
    %394 = arith.mulf %378, %386 : vector<4x128xf32>
    %395 = arith.addf %393, %394 : vector<4x128xf32>
    %396 = math.tanh %395 : vector<4x128xf32>
    %397 = arith.mulf %392, %396 : vector<4x128xf32>
    %398 = tpu.concatenate %397, %356 in 1 : vector<4x128xf32>, vector<4x128xf32> -> vector<4x256xf32>
    %cst_121 = arith.constant dense<0.000000e+00> : vector<4x512xf32>
    %399 = tpu.matmul %398, %1, %cst_121 {dimension_numbers = #tpu.dot_dimension_numbers<[1], [0], [0], [1], [0, 0, 1, 1], [], []>} : vector<4x256xf32>, vector<256x512xf32>, vector<4x512xf32> -> vector<4x512xf32>
    %400 = arith.addf %399, %7 : vector<4x512xf32>
    %401 = vector.extract_strided_slice %400 {offsets = [0, 0], sizes = [4, 128], strides = [1, 1]} : vector<4x512xf32> to vector<4x128xf32>
    %402 = arith.negf %401 : vector<4x128xf32>
    %403 = math.exp %402 : vector<4x128xf32>
    %cst_122 = arith.constant 1.000000e+00 : f32
    %404 = vector.broadcast %cst_122 : f32 to vector<4x128xf32>
    %405 = arith.addf %404, %403 : vector<4x128xf32>
    %406 = arith.divf %404, %405 : vector<4x128xf32>
    %407 = vector.extract_strided_slice %400 {offsets = [0, 128], sizes = [4, 128], strides = [1, 1]} : vector<4x512xf32> to vector<4x128xf32>
    %408 = arith.negf %407 : vector<4x128xf32>
    %409 = math.exp %408 : vector<4x128xf32>
    %cst_123 = arith.constant 1.000000e+00 : f32
    %410 = vector.broadcast %cst_123 : f32 to vector<4x128xf32>
    %411 = arith.addf %410, %409 : vector<4x128xf32>
    %412 = arith.divf %410, %411 : vector<4x128xf32>
    %413 = vector.extract_strided_slice %400 {offsets = [0, 256], sizes = [4, 128], strides = [1, 1]} : vector<4x512xf32> to vector<4x128xf32>
    %414 = math.tanh %413 : vector<4x128xf32>
    %415 = vector.extract_strided_slice %400 {offsets = [0, 384], sizes = [4, 128], strides = [1, 1]} : vector<4x512xf32> to vector<4x128xf32>
    %416 = arith.negf %415 : vector<4x128xf32>
    %417 = math.exp %416 : vector<4x128xf32>
    %cst_124 = arith.constant 1.000000e+00 : f32
    %418 = vector.broadcast %cst_124 : f32 to vector<4x128xf32>
    %419 = arith.addf %418, %417 : vector<4x128xf32>
    %420 = arith.divf %418, %419 : vector<4x128xf32>
    %421 = arith.mulf %412, %354 : vector<4x128xf32>
    %422 = arith.mulf %406, %414 : vector<4x128xf32>
    %423 = arith.addf %421, %422 : vector<4x128xf32>
    %424 = math.tanh %423 : vector<4x128xf32>
    %425 = arith.mulf %420, %424 : vector<4x128xf32>
    %c6 = arith.constant 6 : index
    %c0_125 = arith.constant 0 : index
    %426 = memref.load %arg0[%c6, %c0_125] : memref<8x4xi32, #tpu.memory_space<smem>>
    %427 = arith.index_cast %426 : i32 to index
    %c0_126 = arith.constant 0 : index
    %428 = vector.load %arg1[%427, %c0_126] : memref<50x128xf32, #tpu.memory_space<vmem>>, vector<1x128xf32>
    %c6_127 = arith.constant 6 : index
    %c1_128 = arith.constant 1 : index
    %429 = memref.load %arg0[%c6_127, %c1_128] : memref<8x4xi32, #tpu.memory_space<smem>>
    %430 = arith.index_cast %429 : i32 to index
    %c0_129 = arith.constant 0 : index
    %431 = vector.load %arg1[%430, %c0_129] : memref<50x128xf32, #tpu.memory_space<vmem>>, vector<1x128xf32>
    %c6_130 = arith.constant 6 : index
    %c2_131 = arith.constant 2 : index
    %432 = memref.load %arg0[%c6_130, %c2_131] : memref<8x4xi32, #tpu.memory_space<smem>>
    %433 = arith.index_cast %432 : i32 to index
    %c0_132 = arith.constant 0 : index
    %434 = vector.load %arg1[%433, %c0_132] : memref<50x128xf32, #tpu.memory_space<vmem>>, vector<1x128xf32>
    %c6_133 = arith.constant 6 : index
    %c3_134 = arith.constant 3 : index
    %435 = memref.load %arg0[%c6_133, %c3_134] : memref<8x4xi32, #tpu.memory_space<smem>>
    %436 = arith.index_cast %435 : i32 to index
    %c0_135 = arith.constant 0 : index
    %437 = vector.load %arg1[%436, %c0_135] : memref<50x128xf32, #tpu.memory_space<vmem>>, vector<1x128xf32>
    %438 = tpu.concatenate %428, %431, %434, %437 in 0 : vector<1x128xf32>, vector<1x128xf32>, vector<1x128xf32>, vector<1x128xf32> -> vector<4x128xf32>
    %439 = tpu.concatenate %438, %397 in 1 : vector<4x128xf32>, vector<4x128xf32> -> vector<4x256xf32>
    %cst_136 = arith.constant dense<0.000000e+00> : vector<4x512xf32>
    %440 = tpu.matmul %439, %0, %cst_136 {dimension_numbers = #tpu.dot_dimension_numbers<[1], [0], [0], [1], [0, 0, 1, 1], [], []>} : vector<4x256xf32>, vector<256x512xf32>, vector<4x512xf32> -> vector<4x512xf32>
    %441 = arith.addf %440, %4 : vector<4x512xf32>
    %442 = vector.extract_strided_slice %441 {offsets = [0, 0], sizes = [4, 128], strides = [1, 1]} : vector<4x512xf32> to vector<4x128xf32>
    %443 = arith.negf %442 : vector<4x128xf32>
    %444 = math.exp %443 : vector<4x128xf32>
    %cst_137 = arith.constant 1.000000e+00 : f32
    %445 = vector.broadcast %cst_137 : f32 to vector<4x128xf32>
    %446 = arith.addf %445, %444 : vector<4x128xf32>
    %447 = arith.divf %445, %446 : vector<4x128xf32>
    %448 = vector.extract_strided_slice %441 {offsets = [0, 128], sizes = [4, 128], strides = [1, 1]} : vector<4x512xf32> to vector<4x128xf32>
    %449 = arith.negf %448 : vector<4x128xf32>
    %450 = math.exp %449 : vector<4x128xf32>
    %cst_138 = arith.constant 1.000000e+00 : f32
    %451 = vector.broadcast %cst_138 : f32 to vector<4x128xf32>
    %452 = arith.addf %451, %450 : vector<4x128xf32>
    %453 = arith.divf %451, %452 : vector<4x128xf32>
    %454 = vector.extract_strided_slice %441 {offsets = [0, 256], sizes = [4, 128], strides = [1, 1]} : vector<4x512xf32> to vector<4x128xf32>
    %455 = math.tanh %454 : vector<4x128xf32>
    %456 = vector.extract_strided_slice %441 {offsets = [0, 384], sizes = [4, 128], strides = [1, 1]} : vector<4x512xf32> to vector<4x128xf32>
    %457 = arith.negf %456 : vector<4x128xf32>
    %458 = math.exp %457 : vector<4x128xf32>
    %cst_139 = arith.constant 1.000000e+00 : f32
    %459 = vector.broadcast %cst_139 : f32 to vector<4x128xf32>
    %460 = arith.addf %459, %458 : vector<4x128xf32>
    %461 = arith.divf %459, %460 : vector<4x128xf32>
    %462 = arith.mulf %453, %395 : vector<4x128xf32>
    %463 = arith.mulf %447, %455 : vector<4x128xf32>
    %464 = arith.addf %462, %463 : vector<4x128xf32>
    %465 = math.tanh %464 : vector<4x128xf32>
    %466 = arith.mulf %461, %465 : vector<4x128xf32>
    %467 = tpu.concatenate %466, %425 in 1 : vector<4x128xf32>, vector<4x128xf32> -> vector<4x256xf32>
    %cst_140 = arith.constant dense<0.000000e+00> : vector<4x512xf32>
    %468 = tpu.matmul %467, %1, %cst_140 {dimension_numbers = #tpu.dot_dimension_numbers<[1], [0], [0], [1], [0, 0, 1, 1], [], []>} : vector<4x256xf32>, vector<256x512xf32>, vector<4x512xf32> -> vector<4x512xf32>
    %469 = arith.addf %468, %7 : vector<4x512xf32>
    %470 = vector.extract_strided_slice %469 {offsets = [0, 0], sizes = [4, 128], strides = [1, 1]} : vector<4x512xf32> to vector<4x128xf32>
    %471 = arith.negf %470 : vector<4x128xf32>
    %472 = math.exp %471 : vector<4x128xf32>
    %cst_141 = arith.constant 1.000000e+00 : f32
    %473 = vector.broadcast %cst_141 : f32 to vector<4x128xf32>
    %474 = arith.addf %473, %472 : vector<4x128xf32>
    %475 = arith.divf %473, %474 : vector<4x128xf32>
    %476 = vector.extract_strided_slice %469 {offsets = [0, 128], sizes = [4, 128], strides = [1, 1]} : vector<4x512xf32> to vector<4x128xf32>
    %477 = arith.negf %476 : vector<4x128xf32>
    %478 = math.exp %477 : vector<4x128xf32>
    %cst_142 = arith.constant 1.000000e+00 : f32
    %479 = vector.broadcast %cst_142 : f32 to vector<4x128xf32>
    %480 = arith.addf %479, %478 : vector<4x128xf32>
    %481 = arith.divf %479, %480 : vector<4x128xf32>
    %482 = vector.extract_strided_slice %469 {offsets = [0, 256], sizes = [4, 128], strides = [1, 1]} : vector<4x512xf32> to vector<4x128xf32>
    %483 = math.tanh %482 : vector<4x128xf32>
    %484 = vector.extract_strided_slice %469 {offsets = [0, 384], sizes = [4, 128], strides = [1, 1]} : vector<4x512xf32> to vector<4x128xf32>
    %485 = arith.negf %484 : vector<4x128xf32>
    %486 = math.exp %485 : vector<4x128xf32>
    %cst_143 = arith.constant 1.000000e+00 : f32
    %487 = vector.broadcast %cst_143 : f32 to vector<4x128xf32>
    %488 = arith.addf %487, %486 : vector<4x128xf32>
    %489 = arith.divf %487, %488 : vector<4x128xf32>
    %490 = arith.mulf %481, %423 : vector<4x128xf32>
    %491 = arith.mulf %475, %483 : vector<4x128xf32>
    %492 = arith.addf %490, %491 : vector<4x128xf32>
    %493 = math.tanh %492 : vector<4x128xf32>
    %494 = arith.mulf %489, %493 : vector<4x128xf32>
    %c7 = arith.constant 7 : index
    %c0_144 = arith.constant 0 : index
    %495 = memref.load %arg0[%c7, %c0_144] : memref<8x4xi32, #tpu.memory_space<smem>>
    %496 = arith.index_cast %495 : i32 to index
    %c0_145 = arith.constant 0 : index
    %497 = vector.load %arg1[%496, %c0_145] : memref<50x128xf32, #tpu.memory_space<vmem>>, vector<1x128xf32>
    %c7_146 = arith.constant 7 : index
    %c1_147 = arith.constant 1 : index
    %498 = memref.load %arg0[%c7_146, %c1_147] : memref<8x4xi32, #tpu.memory_space<smem>>
    %499 = arith.index_cast %498 : i32 to index
    %c0_148 = arith.constant 0 : index
    %500 = vector.load %arg1[%499, %c0_148] : memref<50x128xf32, #tpu.memory_space<vmem>>, vector<1x128xf32>
    %c7_149 = arith.constant 7 : index
    %c2_150 = arith.constant 2 : index
    %501 = memref.load %arg0[%c7_149, %c2_150] : memref<8x4xi32, #tpu.memory_space<smem>>
    %502 = arith.index_cast %501 : i32 to index
    %c0_151 = arith.constant 0 : index
    %503 = vector.load %arg1[%502, %c0_151] : memref<50x128xf32, #tpu.memory_space<vmem>>, vector<1x128xf32>
    %c7_152 = arith.constant 7 : index
    %c3_153 = arith.constant 3 : index
    %504 = memref.load %arg0[%c7_152, %c3_153] : memref<8x4xi32, #tpu.memory_space<smem>>
    %505 = arith.index_cast %504 : i32 to index
    %c0_154 = arith.constant 0 : index
    %506 = vector.load %arg1[%505, %c0_154] : memref<50x128xf32, #tpu.memory_space<vmem>>, vector<1x128xf32>
    %507 = tpu.concatenate %497, %500, %503, %506 in 0 : vector<1x128xf32>, vector<1x128xf32>, vector<1x128xf32>, vector<1x128xf32> -> vector<4x128xf32>
    %508 = tpu.concatenate %507, %466 in 1 : vector<4x128xf32>, vector<4x128xf32> -> vector<4x256xf32>
    %cst_155 = arith.constant dense<0.000000e+00> : vector<4x512xf32>
    %509 = tpu.matmul %508, %0, %cst_155 {dimension_numbers = #tpu.dot_dimension_numbers<[1], [0], [0], [1], [0, 0, 1, 1], [], []>} : vector<4x256xf32>, vector<256x512xf32>, vector<4x512xf32> -> vector<4x512xf32>
    %510 = arith.addf %509, %4 : vector<4x512xf32>
    %511 = vector.extract_strided_slice %510 {offsets = [0, 0], sizes = [4, 128], strides = [1, 1]} : vector<4x512xf32> to vector<4x128xf32>
    %512 = arith.negf %511 : vector<4x128xf32>
    %513 = math.exp %512 : vector<4x128xf32>
    %cst_156 = arith.constant 1.000000e+00 : f32
    %514 = vector.broadcast %cst_156 : f32 to vector<4x128xf32>
    %515 = arith.addf %514, %513 : vector<4x128xf32>
    %516 = arith.divf %514, %515 : vector<4x128xf32>
    %517 = vector.extract_strided_slice %510 {offsets = [0, 128], sizes = [4, 128], strides = [1, 1]} : vector<4x512xf32> to vector<4x128xf32>
    %518 = arith.negf %517 : vector<4x128xf32>
    %519 = math.exp %518 : vector<4x128xf32>
    %cst_157 = arith.constant 1.000000e+00 : f32
    %520 = vector.broadcast %cst_157 : f32 to vector<4x128xf32>
    %521 = arith.addf %520, %519 : vector<4x128xf32>
    %522 = arith.divf %520, %521 : vector<4x128xf32>
    %523 = vector.extract_strided_slice %510 {offsets = [0, 256], sizes = [4, 128], strides = [1, 1]} : vector<4x512xf32> to vector<4x128xf32>
    %524 = math.tanh %523 : vector<4x128xf32>
    %525 = vector.extract_strided_slice %510 {offsets = [0, 384], sizes = [4, 128], strides = [1, 1]} : vector<4x512xf32> to vector<4x128xf32>
    %526 = arith.negf %525 : vector<4x128xf32>
    %527 = math.exp %526 : vector<4x128xf32>
    %cst_158 = arith.constant 1.000000e+00 : f32
    %528 = vector.broadcast %cst_158 : f32 to vector<4x128xf32>
    %529 = arith.addf %528, %527 : vector<4x128xf32>
    %530 = arith.divf %528, %529 : vector<4x128xf32>
    %531 = arith.mulf %522, %464 : vector<4x128xf32>
    %532 = arith.mulf %516, %524 : vector<4x128xf32>
    %533 = arith.addf %531, %532 : vector<4x128xf32>
    %534 = math.tanh %533 : vector<4x128xf32>
    %535 = arith.mulf %530, %534 : vector<4x128xf32>
    %536 = tpu.concatenate %535, %494 in 1 : vector<4x128xf32>, vector<4x128xf32> -> vector<4x256xf32>
    %cst_159 = arith.constant dense<0.000000e+00> : vector<4x512xf32>
    %537 = tpu.matmul %536, %1, %cst_159 {dimension_numbers = #tpu.dot_dimension_numbers<[1], [0], [0], [1], [0, 0, 1, 1], [], []>} : vector<4x256xf32>, vector<256x512xf32>, vector<4x512xf32> -> vector<4x512xf32>
    %538 = arith.addf %537, %7 : vector<4x512xf32>
    %539 = vector.extract_strided_slice %538 {offsets = [0, 0], sizes = [4, 128], strides = [1, 1]} : vector<4x512xf32> to vector<4x128xf32>
    %540 = arith.negf %539 : vector<4x128xf32>
    %541 = math.exp %540 : vector<4x128xf32>
    %cst_160 = arith.constant 1.000000e+00 : f32
    %542 = vector.broadcast %cst_160 : f32 to vector<4x128xf32>
    %543 = arith.addf %542, %541 : vector<4x128xf32>
    %544 = arith.divf %542, %543 : vector<4x128xf32>
    %545 = vector.extract_strided_slice %538 {offsets = [0, 128], sizes = [4, 128], strides = [1, 1]} : vector<4x512xf32> to vector<4x128xf32>
    %546 = arith.negf %545 : vector<4x128xf32>
    %547 = math.exp %546 : vector<4x128xf32>
    %cst_161 = arith.constant 1.000000e+00 : f32
    %548 = vector.broadcast %cst_161 : f32 to vector<4x128xf32>
    %549 = arith.addf %548, %547 : vector<4x128xf32>
    %550 = arith.divf %548, %549 : vector<4x128xf32>
    %551 = vector.extract_strided_slice %538 {offsets = [0, 256], sizes = [4, 128], strides = [1, 1]} : vector<4x512xf32> to vector<4x128xf32>
    %552 = math.tanh %551 : vector<4x128xf32>
    %553 = vector.extract_strided_slice %538 {offsets = [0, 384], sizes = [4, 128], strides = [1, 1]} : vector<4x512xf32> to vector<4x128xf32>
    %554 = arith.negf %553 : vector<4x128xf32>
    %555 = math.exp %554 : vector<4x128xf32>
    %cst_162 = arith.constant 1.000000e+00 : f32
    %556 = vector.broadcast %cst_162 : f32 to vector<4x128xf32>
    %557 = arith.addf %556, %555 : vector<4x128xf32>
    %558 = arith.divf %556, %557 : vector<4x128xf32>
    %559 = arith.mulf %550, %492 : vector<4x128xf32>
    %560 = arith.mulf %544, %552 : vector<4x128xf32>
    %561 = arith.addf %559, %560 : vector<4x128xf32>
    %562 = math.tanh %561 : vector<4x128xf32>
    %563 = arith.mulf %558, %562 : vector<4x128xf32>
    %c0_163 = arith.constant 0 : index
    %c0_164 = arith.constant 0 : index
    %564 = vector.load %arg6[%c0_163, %c0_164] : memref<128x128xf32, #tpu.memory_space<vmem>>, vector<128x128xf32>
    %cst_165 = arith.constant dense<0.000000e+00> : vector<4x128xf32>
    %565 = tpu.matmul %563, %564, %cst_165 {dimension_numbers = #tpu.dot_dimension_numbers<[1], [0], [0], [1], [0, 0, 1, 1], [], []>} : vector<4x128xf32>, vector<128x128xf32>, vector<4x128xf32> -> vector<4x128xf32>
    %c0_166 = arith.constant 0 : index
    %c0_167 = arith.constant 0 : index
    %566 = vector.load %arg7[%c0_166, %c0_167] : memref<1x128xf32, #tpu.memory_space<vmem>>, vector<1x128xf32>
    %567 = vector.broadcast %566 : vector<1x128xf32> to vector<4x128xf32>
    %568 = arith.addf %565, %567 : vector<4x128xf32>
    %cst_168 = arith.constant 0.000000e+00 : f32
    %569 = vector.broadcast %cst_168 : f32 to vector<4x128xf32>
    %570 = arith.maximumf %568, %569 : vector<4x128xf32>
    %c0_169 = arith.constant 0 : index
    %c0_170 = arith.constant 0 : index
    %571 = vector.load %arg8[%c0_169, %c0_170] : memref<128x1xf32, #tpu.memory_space<vmem>>, vector<128x1xf32>
    %cst_171 = arith.constant dense<0.000000e+00> : vector<4x1xf32>
    %572 = tpu.matmul %570, %571, %cst_171 {dimension_numbers = #tpu.dot_dimension_numbers<[1], [0], [0], [1], [0, 0, 1, 1], [], []>} : vector<4x128xf32>, vector<128x1xf32>, vector<4x1xf32> -> vector<4x1xf32>
    %c0_172 = arith.constant 0 : index
    %c0_173 = arith.constant 0 : index
    %573 = vector.load %arg9[%c0_172, %c0_173] : memref<1x1xf32, #tpu.memory_space<vmem>>, vector<1x1xf32>
    %574 = vector.broadcast %573 : vector<1x1xf32> to vector<4x1xf32>
    %575 = arith.addf %572, %574 : vector<4x1xf32>
    %576 = arith.negf %575 : vector<4x1xf32>
    %577 = math.exp %576 : vector<4x1xf32>
    %cst_174 = arith.constant 1.000000e+00 : f32
    %578 = vector.broadcast %cst_174 : f32 to vector<4x1xf32>
    %579 = arith.addf %578, %577 : vector<4x1xf32>
    %580 = arith.divf %578, %579 : vector<4x1xf32>
    %c0_175 = arith.constant 0 : index
    %c0_176 = arith.constant 0 : index
    %581 = vector.load %arg10[%c0_175, %c0_176] : memref<4x1xf32, #tpu.memory_space<vmem>>, vector<4x1xf32>
    tpu.vector_store %arg10[%c0_175, %c0_176], %580 {strides = array<i32>} : memref<4x1xf32, #tpu.memory_space<vmem>>, vector<4x1xf32>,
    return
  }
}

</mosaic_0001>

<llo_original>
// kernel: net_forward.1
$region0: #{net_forward.1}
  #allocation0 [shape = 'u32[]', space=smem, size = 0x4, offset = 0x4, fixed_abs, tag = 'smem constant byte address 0x4 - core index']
  #allocation1 [shape = 'u32[144,128]{1,0:T(1,128)}', space=vmem, size = 0x12000, scoped, tag = 'internal scratch']
  #allocation2 [shape = 'f32[1,1]{1,0:T(1,128)S(1)}', space=vmem, size = 0x200, scoped, tag = 'scoped memory for net_forward.1']
  %s0 = inlined_call_operand.vmem [shape: s32[8,4], index: 0, kind: input, shape index: {}]
  %s1 = inlined_call_operand.hbm [shape: f32[50,128], index: 1, kind: input, shape index: {}]
  %s2 = inlined_call_operand.hbm [shape: f32[256,512], index: 2, kind: input, shape index: {}]
  %s3 = inlined_call_operand.vmem [shape: f32[1,512], index: 3, kind: input, shape index: {}]
  %s4 = inlined_call_operand.hbm [shape: f32[256,512], index: 4, kind: input, shape index: {}]
  %s5 = inlined_call_operand.vmem [shape: f32[1,512], index: 5, kind: input, shape index: {}]
  %s6 = inlined_call_operand.vmem [shape: f32[128,128], index: 6, kind: input, shape index: {}]
  %s7 = inlined_call_operand.vmem [shape: f32[1,128], index: 7, kind: input, shape index: {}]
  %s8 = inlined_call_operand.vmem [shape: f32[128,1], index: 8, kind: input, shape index: {}]
  %s9 = inlined_call_operand.<no memory space> [shape: f32[1,1], index: 9, kind: input, shape index: {}]
  %s10 = inlined_call_operand.vmem [shape: f32[4,1], index: 10, kind: output, shape index: {}]
  %s11 = sld [smem:[#allocation0]]
  $region66: #{net_forward.1} parent=0
    _
  %s13 = ssub.s32 1, %s11
  %s14 = scalar_select 0, %s13, %s11
  %v15 = vstv %s9
  %16 = vst [vmem:[#allocation2] sm:$0x1] %v15
  $region1: #{net_forward.1} parent=0
    #allocation3 [shape = 'u8[4096]{0}', space=smem, size = 0x1000, scoped, tag = 'input window, operand 0, single buffered']
    #allocation4 [shape = 's32[1]{0}', space=sflag, size = 0x4, scoped, tag = 'scoped memory for net_forward.1']
    #allocation5 [shape = 's32[1]{0}', space=sflag, size = 0x4, scoped, tag = 'scoped memory for net_forward.1']
    #allocation6 [shape = 'u8[28672]{0}', space=vmem, size = 0x7000, scoped, tag = 'input window, operand 1, single buffered']
    #allocation7 [shape = 'u8[524288]{0}', space=vmem, size = 0x80000, scoped, tag = 'input window, operand 2, single buffered']
    #allocation8 [shape = 's32[1]{0}', space=sflag, size = 0x4, scoped, tag = 'scoped memory for net_forward.1']
    #allocation9 [shape = 'u8[524288]{0}', space=vmem, size = 0x80000, scoped, tag = 'input window, operand 4, single buffered']
    %17 = vsyncpa [#allocation5], 0
    %18 = vsyncpa [#allocation4], 0
    %19 = vsyncpa [#allocation8], 0
    // Predicated region
    $region2: #{net_forward.1} parent=1 // pred_check
      _
    $region3: #{net_forward.1} parent=1 // pred_check_branch
      %21 = sbr.rel (0) target = $region5
    $region4: #{net_forward.1} parent=1 // pred_region
      %s23 = ssub.s32 128, 128
      %24 = vsyncadd [#allocation5], %s23
      %s26 = sshll.u32 %s0, 4
      %s27 = int_to_ptr.vmem [resolvable:$true] %s26
      %29 = dma.vmem_to_smem %s27, 128, [#allocation3], [#allocation5]
    $region5: #{net_forward.1} parent=1 // pred_fallthru
      _
    // Predicated region
    $region6: #{net_forward.1} parent=1 // pred_check
      _
    $region7: #{net_forward.1} parent=1 // pred_check_branch
      %31 = sbr.rel (0) target = $region9
    $region8: #{net_forward.1} parent=1 // pred_region
      %s33 = ssub.s32 896, 896
      %34 = vsyncadd [#allocation4], %s33
      %s35 = sshll.u32 [#allocation6], 4
      %s36 = int_to_ptr.vmem [resolvable:$true] %s35
      %41 = dma.hbm_to_vmem [thread:$0]  %s1, 896, %s36, [#allocation4], 128, 128, 8
    $region9: #{net_forward.1} parent=1 // pred_fallthru
      _
    // Predicated region
    $region10: #{net_forward.1} parent=1 // pred_check
      _
    $region11: #{net_forward.1} parent=1 // pred_check_branch
      %43 = sbr.rel (0) target = $region13
    $region12: #{net_forward.1} parent=1 // pred_region
      %s45 = ssub.s32 16384, 16384
      %46 = vsyncadd [#allocation8], %s45
      %s47 = sshll.u32 [#allocation7], 4
      %s48 = int_to_ptr.vmem [resolvable:$true] %s47
      %53 = dma.hbm_to_vmem [thread:$0]  %s2, 16384, %s48, [#allocation8], 512, 512, 32
    $region13: #{net_forward.1} parent=1 // pred_fallthru
      _
    // Predicated region
    $region14: #{net_forward.1} parent=1 // pred_check
      _
    $region15: #{net_forward.1} parent=1 // pred_check_branch
      %55 = sbr.rel (0) target = $region17
    $region16: #{net_forward.1} parent=1 // pred_region
      _
    $region17: #{net_forward.1} parent=1 // pred_fallthru
      _
    // Predicated region
    $region18: #{net_forward.1} parent=1 // pred_check
      _
    $region19: #{net_forward.1} parent=1 // pred_check_branch
      %57 = sbr.rel (0) target = $region21
    $region20: #{net_forward.1} parent=1 // pred_region
      %s59 = ssub.s32 16384, 16384
      %60 = vsyncadd [#allocation8], %s59
      %s61 = sshll.u32 [#allocation9], 4
      %s62 = int_to_ptr.vmem [resolvable:$true] %s61
      %67 = dma.hbm_to_vmem [thread:$0]  %s4, 16384, %s62, [#allocation8], 512, 512, 32
    $region21: #{net_forward.1} parent=1 // pred_fallthru
      _
    // Predicated region
    $region22: #{net_forward.1} parent=1 // pred_check
      _
    $region23: #{net_forward.1} parent=1 // pred_check_branch
      %69 = sbr.rel (0) target = $region25
    $region24: #{net_forward.1} parent=1 // pred_region
      _
    $region25: #{net_forward.1} parent=1 // pred_fallthru
      _
    // Predicated region
    $region26: #{net_forward.1} parent=1 // pred_check
      _
    $region27: #{net_forward.1} parent=1 // pred_check_branch
      %71 = sbr.rel (0) target = $region29
    $region28: #{net_forward.1} parent=1 // pred_region
      _
    $region29: #{net_forward.1} parent=1 // pred_fallthru
      _
    // Predicated region
    $region30: #{net_forward.1} parent=1 // pred_check
      _
    $region31: #{net_forward.1} parent=1 // pred_check_branch
      %73 = sbr.rel (0) target = $region33
    $region32: #{net_forward.1} parent=1 // pred_region
      _
    $region33: #{net_forward.1} parent=1 // pred_fallthru
      _
    // Predicated region
    $region34: #{net_forward.1} parent=1 // pred_check
      _
    $region35: #{net_forward.1} parent=1 // pred_check_branch
      %75 = sbr.rel (0) target = $region37
    $region36: #{net_forward.1} parent=1 // pred_region
      _
    $region37: #{net_forward.1} parent=1 // pred_fallthru
      _
    // Predicated region
    $region38: #{net_forward.1} parent=1 // pred_check
      _
    $region39: #{net_forward.1} parent=1 // pred_check_branch
      %77 = sbr.rel (0) target = $region41
    $region40: #{net_forward.1} parent=1 // pred_region
      _
    $region41: #{net_forward.1} parent=1 // pred_fallthru
      _
    // Predicated region
    $region42: #{net_forward.1} parent=1 // pred_check
      _
    $region43: #{net_forward.1} parent=1 // pred_check_branch
      %79 = sbr.rel (0) target = $region45
    $region44: #{net_forward.1} parent=1 // pred_region
      %80 = dma.done [#allocation5], 128
    $region45: #{net_forward.1} parent=1 // pred_fallthru
      _
    // Predicated region
    $region46: #{net_forward.1} parent=1 // pred_check
      _
    $region47: #{net_forward.1} parent=1 // pred_check_branch
      %82 = sbr.rel (0) target = $region49
    $region48: #{net_forward.1} parent=1 // pred_region
      %83 = dma.done [#allocation4], 896
    $region49: #{net_forward.1} parent=1 // pred_fallthru
      _
    // Predicated region
    $region50: #{net_forward.1} parent=1 // pred_check
      _
    $region51: #{net_forward.1} parent=1 // pred_check_branch
      %85 = sbr.rel (0) target = $region53
    $region52: #{net_forward.1} parent=1 // pred_region
      %86 = dma.done [#allocation8], 16384
    $region53: #{net_forward.1} parent=1 // pred_fallthru
      _
    // Predicated region
    $region54: #{net_forward.1} parent=1 // pred_check
      _
    $region55: #{net_forward.1} parent=1 // pred_check_branch
      %88 = sbr.rel (0) target = $region57
    $region56: #{net_forward.1} parent=1 // pred_region
      %89 = dma.done [#allocation8], 16384
    $region57: #{net_forward.1} parent=1 // pred_fallthru
      _
    %90 = sfence
    %v91 = vld [vmem:[#allocation7] sm:$0xff]
    %v92 = vld [vmem:[#allocation7 + $0x8] sm:$0xff]
    %v93 = vld [vmem:[#allocation7 + $0x10] sm:$0xff]
    %v94 = vld [vmem:[#allocation7 + $0x18] sm:$0xff]
    %v95 = vld [vmem:[#allocation7 + $0x20] sm:$0xff]
    %v96 = vld [vmem:[#allocation7 + $0x28] sm:$0xff]
    %v97 = vld [vmem:[#allocation7 + $0x30] sm:$0xff]
    %v98 = vld [vmem:[#allocation7 + $0x38] sm:$0xff]
    %v99 = vld [vmem:[#allocation7 + $0x40] sm:$0xff]
    %v100 = vld [vmem:[#allocation7 + $0x48] sm:$0xff]
    %v101 = vld [vmem:[#allocation7 + $0x50] sm:$0xff]
    %v102 = vld [vmem:[#allocation7 + $0x58] sm:$0xff]
    %v103 = vld [vmem:[#allocation7 + $0x60] sm:$0xff]
    %v104 = vld [vmem:[#allocation7 + $0x68] sm:$0xff]
    %v105 = vld [vmem:[#allocation7 + $0x70] sm:$0xff]
    %v106 = vld [vmem:[#allocation7 + $0x78] sm:$0xff]
    %v107 = vld [vmem:[#allocation7 + $0x80] sm:$0xff]
    %v108 = vld [vmem:[#allocation7 + $0x88] sm:$0xff]
    %v109 = vld [vmem:[#allocation7 + $0x90] sm:$0xff]
    %v110 = vld [vmem:[#allocation7 + $0x98] sm:$0xff]
    %v111 = vld [vmem:[#allocation7 + $0xa0] sm:$0xff]
    %v112 = vld [vmem:[#allocation7 + $0xa8] sm:$0xff]
    %v113 = vld [vmem:[#allocation7 + $0xb0] sm:$0xff]
    %v114 = vld [vmem:[#allocation7 + $0xb8] sm:$0xff]
    %v115 = vld [vmem:[#allocation7 + $0xc0] sm:$0xff]
    %v116 = vld [vmem:[#allocation7 + $0xc8] sm:$0xff]
    %v117 = vld [vmem:[#allocation7 + $0xd0] sm:$0xff]
    %v118 = vld [vmem:[#allocation7 + $0xd8] sm:$0xff]
    %v119 = vld [vmem:[#allocation7 + $0xe0] sm:$0xff]
    %v120 = vld [vmem:[#allocation7 + $0xe8] sm:$0xff]
    %v121 = vld [vmem:[#allocation7 + $0xf0] sm:$0xff]
    %v122 = vld [vmem:[#allocation7 + $0xf8] sm:$0xff]
    %v123 = vld [vmem:[#allocation7 + $0x100] sm:$0xff]
    %v124 = vld [vmem:[#allocation7 + $0x108] sm:$0xff]
    %v125 = vld [vmem:[#allocation7 + $0x110] sm:$0xff]
    %v126 = vld [vmem:[#allocation7 + $0x118] sm:$0xff]
    %v127 = vld [vmem:[#allocation7 + $0x120] sm:$0xff]
    %v128 = vld [vmem:[#allocation7 + $0x128] sm:$0xff]
    %v129 = vld [vmem:[#allocation7 + $0x130] sm:$0xff]
    %v130 = vld [vmem:[#allocation7 + $0x138] sm:$0xff]
    %v131 = vld [vmem:[#allocation7 + $0x140] sm:$0xff]
    %v132 = vld [vmem:[#allocation7 + $0x148] sm:$0xff]
    %v133 = vld [vmem:[#allocation7 + $0x150] sm:$0xff]
    %v134 = vld [vmem:[#allocation7 + $0x158] sm:$0xff]
    %v135 = vld [vmem:[#allocation7 + $0x160] sm:$0xff]
    %v136 = vld [vmem:[#allocation7 + $0x168] sm:$0xff]
    %v137 = vld [vmem:[#allocation7 + $0x170] sm:$0xff]
    %v138 = vld [vmem:[#allocation7 + $0x178] sm:$0xff]
    %v139 = vld [vmem:[#allocation7 + $0x180] sm:$0xff]
    %v140 = vld [vmem:[#allocation7 + $0x188] sm:$0xff]
    %v141 = vld [vmem:[#allocation7 + $0x190] sm:$0xff]
    %v142 = vld [vmem:[#allocation7 + $0x198] sm:$0xff]
    %v143 = vld [vmem:[#allocation7 + $0x1a0] sm:$0xff]
    %v144 = vld [vmem:[#allocation7 + $0x1a8] sm:$0xff]
    %v145 = vld [vmem:[#allocation7 + $0x1b0] sm:$0xff]
    %v146 = vld [vmem:[#allocation7 + $0x1b8] sm:$0xff]
    %v147 = vld [vmem:[#allocation7 + $0x1c0] sm:$0xff]
    %v148 = vld [vmem:[#allocation7 + $0x1c8] sm:$0xff]
    %v149 = vld [vmem:[#allocation7 + $0x1d0] sm:$0xff]
    %v150 = vld [vmem:[#allocation7 + $0x1d8] sm:$0xff]
    %v151 = vld [vmem:[#allocation7 + $0x1e0] sm:$0xff]
    %v152 = vld [vmem:[#allocation7 + $0x1e8] sm:$0xff]
    %v153 = vld [vmem:[#allocation7 + $0x1f0] sm:$0xff]
    %v154 = vld [vmem:[#allocation7 + $0x1f8] sm:$0xff]
    %v155 = vld [vmem:[#allocation7 + $0x200] sm:$0xff]
    %v156 = vld [vmem:[#allocation7 + $0x208] sm:$0xff]
    %v157 = vld [vmem:[#allocation7 + $0x210] sm:$0xff]
    %v158 = vld [vmem:[#allocation7 + $0x218] sm:$0xff]
    %v159 = vld [vmem:[#allocation7 + $0x220] sm:$0xff]
    %v160 = vld [vmem:[#allocation7 + $0x228] sm:$0xff]
    %v161 = vld [vmem:[#allocation7 + $0x230] sm:$0xff]
    %v162 = vld [vmem:[#allocation7 + $0x238] sm:$0xff]
    %v163 = vld [vmem:[#allocation7 + $0x240] sm:$0xff]
    %v164 = vld [vmem:[#allocation7 + $0x248] sm:$0xff]
    %v165 = vld [vmem:[#allocation7 + $0x250] sm:$0xff]
    %v166 = vld [vmem:[#allocation7 + $0x258] sm:$0xff]
    %v167 = vld [vmem:[#allocation7 + $0x260] sm:$0xff]
    %v168 = vld [vmem:[#allocation7 + $0x268] sm:$0xff]
    %v169 = vld [vmem:[#allocation7 + $0x270] sm:$0xff]
    %v170 = vld [vmem:[#allocation7 + $0x278] sm:$0xff]
    %v171 = vld [vmem:[#allocation7 + $0x280] sm:$0xff]
    %v172 = vld [vmem:[#allocation7 + $0x288] sm:$0xff]
    %v173 = vld [vmem:[#allocation7 + $0x290] sm:$0xff]
    %v174 = vld [vmem:[#allocation7 + $0x298] sm:$0xff]
    %v175 = vld [vmem:[#allocation7 + $0x2a0] sm:$0xff]
    %v176 = vld [vmem:[#allocation7 + $0x2a8] sm:$0xff]
    %v177 = vld [vmem:[#allocation7 + $0x2b0] sm:$0xff]
    %v178 = vld [vmem:[#allocation7 + $0x2b8] sm:$0xff]
    %v179 = vld [vmem:[#allocation7 + $0x2c0] sm:$0xff]
    %v180 = vld [vmem:[#allocation7 + $0x2c8] sm:$0xff]
    %v181 = vld [vmem:[#allocation7 + $0x2d0] sm:$0xff]
    %v182 = vld [vmem:[#allocation7 + $0x2d8] sm:$0xff]
    %v183 = vld [vmem:[#allocation7 + $0x2e0] sm:$0xff]
    %v184 = vld [vmem:[#allocation7 + $0x2e8] sm:$0xff]
    %v185 = vld [vmem:[#allocation7 + $0x2f0] sm:$0xff]
    %v186 = vld [vmem:[#allocation7 + $0x2f8] sm:$0xff]
    %v187 = vld [vmem:[#allocation7 + $0x300] sm:$0xff]
    %v188 = vld [vmem:[#allocation7 + $0x308] sm:$0xff]
    %v189 = vld [vmem:[#allocation7 + $0x310] sm:$0xff]
    %v190 = vld [vmem:[#allocation7 + $0x318] sm:$0xff]
    %v191 = vld [vmem:[#allocation7 + $0x320] sm:$0xff]
    %v192 = vld [vmem:[#allocation7 + $0x328] sm:$0xff]
    %v193 = vld [vmem:[#allocation7 + $0x330] sm:$0xff]
    %v194 = vld [vmem:[#allocation7 + $0x338] sm:$0xff]
    %v195 = vld [vmem:[#allocation7 + $0x340] sm:$0xff]
    %v196 = vld [vmem:[#allocation7 + $0x348] sm:$0xff]
    %v197 = vld [vmem:[#allocation7 + $0x350] sm:$0xff]
    %v198 = vld [vmem:[#allocation7 + $0x358] sm:$0xff]
    %v199 = vld [vmem:[#allocation7 + $0x360] sm:$0xff]
    %v200 = vld [vmem:[#allocation7 + $0x368] sm:$0xff]
    %v201 = vld [vmem:[#allocation7 + $0x370] sm:$0xff]
    %v202 = vld [vmem:[#allocation7 + $0x378] sm:$0xff]
    %v203 = vld [vmem:[#allocation7 + $0x380] sm:$0xff]
    %v204 = vld [vmem:[#allocation7 + $0x388] sm:$0xff]
    %v205 = vld [vmem:[#allocation7 + $0x390] sm:$0xff]
    %v206 = vld [vmem:[#allocation7 + $0x398] sm:$0xff]
    %v207 = vld [vmem:[#allocation7 + $0x3a0] sm:$0xff]
    %v208 = vld [vmem:[#allocation7 + $0x3a8] sm:$0xff]
    %v209 = vld [vmem:[#allocation7 + $0x3b0] sm:$0xff]
    %v210 = vld [vmem:[#allocation7 + $0x3b8] sm:$0xff]
    %v211 = vld [vmem:[#allocation7 + $0x3c0] sm:$0xff]
    %v212 = vld [vmem:[#allocation7 + $0x3c8] sm:$0xff]
    %v213 = vld [vmem:[#allocation7 + $0x3d0] sm:$0xff]
    %v214 = vld [vmem:[#allocation7 + $0x3d8] sm:$0xff]
    %v215 = vld [vmem:[#allocation7 + $0x3e0] sm:$0xff]
    %v216 = vld [vmem:[#allocation7 + $0x3e8] sm:$0xff]
    %v217 = vld [vmem:[#allocation7 + $0x3f0] sm:$0xff]
    %v218 = vld [vmem:[#allocation7 + $0x3f8] sm:$0xff]
    %v219 = vld [vmem:[#allocation9] sm:$0xff]
    %v220 = vld [vmem:[#allocation9 + $0x8] sm:$0xff]
    %v221 = vld [vmem:[#allocation9 + $0x10] sm:$0xff]
    %v222 = vld [vmem:[#allocation9 + $0x18] sm:$0xff]
    %v223 = vld [vmem:[#allocation9 + $0x20] sm:$0xff]
    %v224 = vld [vmem:[#allocation9 + $0x28] sm:$0xff]
    %v225 = vld [vmem:[#allocation9 + $0x30] sm:$0xff]
    %v226 = vld [vmem:[#allocation9 + $0x38] sm:$0xff]
    %v227 = vld [vmem:[#allocation9 + $0x40] sm:$0xff]
    %v228 = vld [vmem:[#allocation9 + $0x48] sm:$0xff]
    %v229 = vld [vmem:[#allocation9 + $0x50] sm:$0xff]
    %v230 = vld [vmem:[#allocation9 + $0x58] sm:$0xff]
    %v231 = vld [vmem:[#allocation9 + $0x60] sm:$0xff]
    %v232 = vld [vmem:[#allocation9 + $0x68] sm:$0xff]
    %v233 = vld [vmem:[#allocation9 + $0x70] sm:$0xff]
    %v234 = vld [vmem:[#allocation9 + $0x78] sm:$0xff]
    %v235 = vld [vmem:[#allocation9 + $0x80] sm:$0xff]
    %v236 = vld [vmem:[#allocation9 + $0x88] sm:$0xff]
    %v237 = vld [vmem:[#allocation9 + $0x90] sm:$0xff]
    %v238 = vld [vmem:[#allocation9 + $0x98] sm:$0xff]
    %v239 = vld [vmem:[#allocation9 + $0xa0] sm:$0xff]
    %v240 = vld [vmem:[#allocation9 + $0xa8] sm:$0xff]
    %v241 = vld [vmem:[#allocation9 + $0xb0] sm:$0xff]
    %v242 = vld [vmem:[#allocation9 + $0xb8] sm:$0xff]
    %v243 = vld [vmem:[#allocation9 + $0xc0] sm:$0xff]
    %v244 = vld [vmem:[#allocation9 + $0xc8] sm:$0xff]
    %v245 = vld [vmem:[#allocation9 + $0xd0] sm:$0xff]
    %v246 = vld [vmem:[#allocation9 + $0xd8] sm:$0xff]
    %v247 = vld [vmem:[#allocation9 + $0xe0] sm:$0xff]
    %v248 = vld [vmem:[#allocation9 + $0xe8] sm:$0xff]
    %v249 = vld [vmem:[#allocation9 + $0xf0] sm:$0xff]
    %v250 = vld [vmem:[#allocation9 + $0xf8] sm:$0xff]
    %v251 = vld [vmem:[#allocation9 + $0x100] sm:$0xff]
    %v252 = vld [vmem:[#allocation9 + $0x108] sm:$0xff]
    %v253 = vld [vmem:[#allocation9 + $0x110] sm:$0xff]
    %v254 = vld [vmem:[#allocation9 + $0x118] sm:$0xff]
    %v255 = vld [vmem:[#allocation9 + $0x120] sm:$0xff]
    %v256 = vld [vmem:[#allocation9 + $0x128] sm:$0xff]
    %v257 = vld [vmem:[#allocation9 + $0x130] sm:$0xff]
    %v258 = vld [vmem:[#allocation9 + $0x138] sm:$0xff]
    %v259 = vld [vmem:[#allocation9 + $0x140] sm:$0xff]
    %v260 = vld [vmem:[#allocation9 + $0x148] sm:$0xff]
    %v261 = vld [vmem:[#allocation9 + $0x150] sm:$0xff]
    %v262 = vld [vmem:[#allocation9 + $0x158] sm:$0xff]
    %v263 = vld [vmem:[#allocation9 + $0x160] sm:$0xff]
    %v264 = vld [vmem:[#allocation9 + $0x168] sm:$0xff]
    %v265 = vld [vmem:[#allocation9 + $0x170] sm:$0xff]
    %v266 = vld [vmem:[#allocation9 + $0x178] sm:$0xff]
    %v267 = vld [vmem:[#allocation9 + $0x180] sm:$0xff]
    %v268 = vld [vmem:[#allocation9 + $0x188] sm:$0xff]
    %v269 = vld [vmem:[#allocation9 + $0x190] sm:$0xff]
    %v270 = vld [vmem:[#allocation9 + $0x198] sm:$0xff]
    %v271 = vld [vmem:[#allocation9 + $0x1a0] sm:$0xff]
    %v272 = vld [vmem:[#allocation9 + $0x1a8] sm:$0xff]
    %v273 = vld [vmem:[#allocation9 + $0x1b0] sm:$0xff]
    %v274 = vld [vmem:[#allocation9 + $0x1b8] sm:$0xff]
    %v275 = vld [vmem:[#allocation9 + $0x1c0] sm:$0xff]
    %v276 = vld [vmem:[#allocation9 + $0x1c8] sm:$0xff]
    %v277 = vld [vmem:[#allocation9 + $0x1d0] sm:$0xff]
    %v278 = vld [vmem:[#allocation9 + $0x1d8] sm:$0xff]
    %v279 = vld [vmem:[#allocation9 + $0x1e0] sm:$0xff]
    %v280 = vld [vmem:[#allocation9 + $0x1e8] sm:$0xff]
    %v281 = vld [vmem:[#allocation9 + $0x1f0] sm:$0xff]
    %v282 = vld [vmem:[#allocation9 + $0x1f8] sm:$0xff]
    %v283 = vld [vmem:[#allocation9 + $0x200] sm:$0xff]
    %v284 = vld [vmem:[#allocation9 + $0x208] sm:$0xff]
    %v285 = vld [vmem:[#allocation9 + $0x210] sm:$0xff]
    %v286 = vld [vmem:[#allocation9 + $0x218] sm:$0xff]
    %v287 = vld [vmem:[#allocation9 + $0x220] sm:$0xff]
    %v288 = vld [vmem:[#allocation9 + $0x228] sm:$0xff]
    %v289 = vld [vmem:[#allocation9 + $0x230] sm:$0xff]
    %v290 = vld [vmem:[#allocation9 + $0x238] sm:$0xff]
    %v291 = vld [vmem:[#allocation9 + $0x240] sm:$0xff]
    %v292 = vld [vmem:[#allocation9 + $0x248] sm:$0xff]
    %v293 = vld [vmem:[#allocation9 + $0x250] sm:$0xff]
    %v294 = vld [vmem:[#allocation9 + $0x258] sm:$0xff]
    %v295 = vld [vmem:[#allocation9 + $0x260] sm:$0xff]
    %v296 = vld [vmem:[#allocation9 + $0x268] sm:$0xff]
    %v297 = vld [vmem:[#allocation9 + $0x270] sm:$0xff]
    %v298 = vld [vmem:[#allocation9 + $0x278] sm:$0xff]
    %v299 = vld [vmem:[#allocation9 + $0x280] sm:$0xff]
    %v300 = vld [vmem:[#allocation9 + $0x288] sm:$0xff]
    %v301 = vld [vmem:[#allocation9 + $0x290] sm:$0xff]
    %v302 = vld [vmem:[#allocation9 + $0x298] sm:$0xff]
    %v303 = vld [vmem:[#allocation9 + $0x2a0] sm:$0xff]
    %v304 = vld [vmem:[#allocation9 + $0x2a8] sm:$0xff]
    %v305 = vld [vmem:[#allocation9 + $0x2b0] sm:$0xff]
    %v306 = vld [vmem:[#allocation9 + $0x2b8] sm:$0xff]
    %v307 = vld [vmem:[#allocation9 + $0x2c0] sm:$0xff]
    %v308 = vld [vmem:[#allocation9 + $0x2c8] sm:$0xff]
    %v309 = vld [vmem:[#allocation9 + $0x2d0] sm:$0xff]
    %v310 = vld [vmem:[#allocation9 + $0x2d8] sm:$0xff]
    %v311 = vld [vmem:[#allocation9 + $0x2e0] sm:$0xff]
    %v312 = vld [vmem:[#allocation9 + $0x2e8] sm:$0xff]
    %v313 = vld [vmem:[#allocation9 + $0x2f0] sm:$0xff]
    %v314 = vld [vmem:[#allocation9 + $0x2f8] sm:$0xff]
    %v315 = vld [vmem:[#allocation9 + $0x300] sm:$0xff]
    %v316 = vld [vmem:[#allocation9 + $0x308] sm:$0xff]
    %v317 = vld [vmem:[#allocation9 + $0x310] sm:$0xff]
    %v318 = vld [vmem:[#allocation9 + $0x318] sm:$0xff]
    %v319 = vld [vmem:[#allocation9 + $0x320] sm:$0xff]
    %v320 = vld [vmem:[#allocation9 + $0x328] sm:$0xff]
    %v321 = vld [vmem:[#allocation9 + $0x330] sm:$0xff]
    %v322 = vld [vmem:[#allocation9 + $0x338] sm:$0xff]
    %v323 = vld [vmem:[#allocation9 + $0x340] sm:$0xff]
    %v324 = vld [vmem:[#allocation9 + $0x348] sm:$0xff]
    %v325 = vld [vmem:[#allocation9 + $0x350] sm:$0xff]
    %v326 = vld [vmem:[#allocation9 + $0x358] sm:$0xff]
    %v327 = vld [vmem:[#allocation9 + $0x360] sm:$0xff]
    %v328 = vld [vmem:[#allocation9 + $0x368] sm:$0xff]
    %v329 = vld [vmem:[#allocation9 + $0x370] sm:$0xff]
    %v330 = vld [vmem:[#allocation9 + $0x378] sm:$0xff]
    %v331 = vld [vmem:[#allocation9 + $0x380] sm:$0xff]
    %v332 = vld [vmem:[#allocation9 + $0x388] sm:$0xff]
    %v333 = vld [vmem:[#allocation9 + $0x390] sm:$0xff]
    %v334 = vld [vmem:[#allocation9 + $0x398] sm:$0xff]
    %v335 = vld [vmem:[#allocation9 + $0x3a0] sm:$0xff]
    %v336 = vld [vmem:[#allocation9 + $0x3a8] sm:$0xff]
    %v337 = vld [vmem:[#allocation9 + $0x3b0] sm:$0xff]
    %v338 = vld [vmem:[#allocation9 + $0x3b8] sm:$0xff]
    %v339 = vld [vmem:[#allocation9 + $0x3c0] sm:$0xff]
    %v340 = vld [vmem:[#allocation9 + $0x3c8] sm:$0xff]
    %v341 = vld [vmem:[#allocation9 + $0x3d0] sm:$0xff]
    %v342 = vld [vmem:[#allocation9 + $0x3d8] sm:$0xff]
    %v343 = vld [vmem:[#allocation9 + $0x3e0] sm:$0xff]
    %v344 = vld [vmem:[#allocation9 + $0x3e8] sm:$0xff]
    %v345 = vld [vmem:[#allocation9 + $0x3f0] sm:$0xff]
    %v346 = vld [vmem:[#allocation9 + $0x3f8] sm:$0xff]
    %v347 = vld [vmem:[%s3] sm:$0xf]
    %v349 = vlaneseq
    %v350 = vshrl.u32 %v349, 7
    %v351 = vsub.s32 0, %v350
    %v352 = vrot.slane %v347, %v351
    %v353 = vlaneseq
    %v354 = vshrl.u32 %v353, 7
    %v355 = vsub.s32 1, %v354
    %v356 = vrot.slane %v347, %v355
    %v357 = vlaneseq
    %v358 = vshrl.u32 %v357, 7
    %v359 = vsub.s32 2, %v358
    %v360 = vrot.slane %v347, %v359
    %v361 = vlaneseq
    %v362 = vshrl.u32 %v361, 7
    %v363 = vsub.s32 3, %v362
    %v364 = vrot.slane %v347, %v363
    %v369 = vld [vmem:[%s5] sm:$0xf]
    %v371 = vlaneseq
    %v372 = vshrl.u32 %v371, 7
    %v373 = vsub.s32 0, %v372
    %v374 = vrot.slane %v369, %v373
    %v375 = vlaneseq
    %v376 = vshrl.u32 %v375, 7
    %v377 = vsub.s32 1, %v376
    %v378 = vrot.slane %v369, %v377
    %v379 = vlaneseq
    %v380 = vshrl.u32 %v379, 7
    %v381 = vsub.s32 2, %v380
    %v382 = vrot.slane %v369, %v381
    %v383 = vlaneseq
    %v384 = vshrl.u32 %v383, 7
    %v385 = vsub.s32 3, %v384
    %v386 = vrot.slane %v369, %v385
    %s391 = sld [smem:[#allocation3]]
    %s392 = scalar_lea.vmem [#allocation6], %s391
    %v393 = vld [vmem:[%s392] sm:$0x1]
    %s394 = sld [smem:[#allocation3 + $0x1]]
    %s395 = scalar_lea.vmem [#allocation6], %s394
    %v396 = vld [vmem:[%s395] sm:$0x1]
    %s397 = sld [smem:[#allocation3 + $0x2]]
    %s398 = scalar_lea.vmem [#allocation6], %s397
    %v399 = vld [vmem:[%s398] sm:$0x1]
    %s400 = sld [smem:[#allocation3 + $0x3]]
    %s401 = scalar_lea.vmem [#allocation6], %s400
    %v402 = vld [vmem:[%s401] sm:$0x1]
    %v404 = vrot.slane %v396, 7
    %v407 = vrot.slane %v399, 6
    %v410 = vrot.slane %v402, 5
    %vm412 = vcmask 1040384
    %v413 = vsel %vm412, %v393, %v404
    %vm414 = vcmask 1041408
    %v415 = vsel %vm414, %v413, %v407
    %vm416 = vcmask 1042432
    %v417 = vsel %vm416, %v415, %v410
    %418 = vmatprep.subr.mxu0 %v92
    %419 = vmatpush1.msra.mxu0 %v91
    %420 = vmatprep.subr.mxu0 %v96
    %421 = vmatpush1.msra.mxu0 %v95
    %422 = vmatprep.subr.mxu0 %v100
    %423 = vmatpush1.msra.mxu0 %v99
    %424 = vmatprep.subr.mxu0 %v104
    %425 = vmatpush1.msra.mxu0 %v103
    %426 = vmatprep.subr.mxu0 %v108
    %427 = vmatpush1.msra.mxu0 %v107
    %428 = vmatprep.subr.mxu0 %v112
    %429 = vmatpush1.msra.mxu0 %v111
    %430 = vmatprep.subr.mxu0 %v116
    %431 = vmatpush1.msra.mxu0 %v115
    %432 = vmatprep.subr.mxu0 %v120
    %433 = vmatpush1.msra.mxu0 %v119
    %434 = vmatprep.subr.mxu0 %v124
    %435 = vmatpush1.msra.mxu0 %v123
    %436 = vmatprep.subr.mxu0 %v128
    %437 = vmatpush1.msra.mxu0 %v127
    %438 = vmatprep.subr.mxu0 %v132
    %439 = vmatpush1.msra.mxu0 %v131
    %440 = vmatprep.subr.mxu0 %v136
    %441 = vmatpush1.msra.mxu0 %v135
    %442 = vmatprep.subr.mxu0 %v140
    %443 = vmatpush1.msra.mxu0 %v139
    %444 = vmatprep.subr.mxu0 %v144
    %445 = vmatpush1.msra.mxu0 %v143
    %446 = vmatprep.subr.mxu0 %v148
    %447 = vmatpush1.msra.mxu0 %v147
    %448 = vmatprep.subr.mxu0 %v152
    %449 = vmatpush1.msra.mxu0 %v151
    %450 = vmatprep.subr.mxu0 %v156
    %451 = vmatpush1.msra.mxu0 %v155
    %452 = vmatprep.subr.mxu0 %v160
    %453 = vmatpush1.msra.mxu0 %v159
    %454 = vmatprep.subr.mxu0 %v164
    %455 = vmatpush1.msra.mxu0 %v163
    %456 = vmatprep.subr.mxu0 %v168
    %457 = vmatpush1.msra.mxu0 %v167
    %458 = vmatprep.subr.mxu0 %v172
    %459 = vmatpush1.msra.mxu0 %v171
    %460 = vmatprep.subr.mxu0 %v176
    %461 = vmatpush1.msra.mxu0 %v175
    %462 = vmatprep.subr.mxu0 %v180
    %463 = vmatpush1.msra.mxu0 %v179
    %464 = vmatprep.subr.mxu0 %v184
    %465 = vmatpush1.msra.mxu0 %v183
    %466 = vmatprep.subr.mxu0 %v188
    %467 = vmatpush1.msra.mxu0 %v187
    %468 = vmatprep.subr.mxu0 %v192
    %469 = vmatpush1.msra.mxu0 %v191
    %470 = vmatprep.subr.mxu0 %v196
    %471 = vmatpush1.msra.mxu0 %v195
    %472 = vmatprep.subr.mxu0 %v200
    %473 = vmatpush1.msra.mxu0 %v199
    %474 = vmatprep.subr.mxu0 %v204
    %475 = vmatpush1.msra.mxu0 %v203
    %476 = vmatprep.subr.mxu0 %v208
    %477 = vmatpush1.msra.mxu0 %v207
    %478 = vmatprep.subr.mxu0 %v212
    %479 = vmatpush1.msra.mxu0 %v211
    %480 = vmatprep.subr.mxu0 %v216
    %481 = vmatpush1.msra.mxu0 %v215
    %482 = vmatprep.mubr.f32.mxu0 0.0
    %483 = vmatmul.mubr.f32.gmra.mrb[0].mxu0 %v417
    %v484 = vpop.f32.mrb[0].mxu0
    %v485 = vadd.f32 %v352, %v484
    %v486 = vpop.f32.mrb[0].mxu0
    %v487 = vadd.f32 %v356, %v486
    %488 = vdwg.mxu0
    %489 = vmatprep.subr.mxu0 %v94
    %490 = vmatpush1.msra.mxu0 %v93
    %491 = vmatprep.subr.mxu0 %v98
    %492 = vmatpush1.msra.mxu0 %v97
    %493 = vmatprep.subr.mxu0 %v102
    %494 = vmatpush1.msra.mxu0 %v101
    %495 = vmatprep.subr.mxu0 %v106
    %496 = vmatpush1.msra.mxu0 %v105
    %497 = vmatprep.subr.mxu0 %v110
    %498 = vmatpush1.msra.mxu0 %v109
    %499 = vmatprep.subr.mxu0 %v114
    %500 = vmatpush1.msra.mxu0 %v113
    %501 = vmatprep.subr.mxu0 %v118
    %502 = vmatpush1.msra.mxu0 %v117
    %503 = vmatprep.subr.mxu0 %v122
    %504 = vmatpush1.msra.mxu0 %v121
    %505 = vmatprep.subr.mxu0 %v126
    %506 = vmatpush1.msra.mxu0 %v125
    %507 = vmatprep.subr.mxu0 %v130
    %508 = vmatpush1.msra.mxu0 %v129
    %509 = vmatprep.subr.mxu0 %v134
    %510 = vmatpush1.msra.mxu0 %v133
    %511 = vmatprep.subr.mxu0 %v138
    %512 = vmatpush1.msra.mxu0 %v137
    %513 = vmatprep.subr.mxu0 %v142
    %514 = vmatpush1.msra.mxu0 %v141
    %515 = vmatprep.subr.mxu0 %v146
    %516 = vmatpush1.msra.mxu0 %v145
    %517 = vmatprep.subr.mxu0 %v150
    %518 = vmatpush1.msra.mxu0 %v149
    %519 = vmatprep.subr.mxu0 %v154
    %520 = vmatpush1.msra.mxu0 %v153
    %521 = vmatprep.subr.mxu0 %v158
    %522 = vmatpush1.msra.mxu0 %v157
    %523 = vmatprep.subr.mxu0 %v162
    %524 = vmatpush1.msra.mxu0 %v161
    %525 = vmatprep.subr.mxu0 %v166
    %526 = vmatpush1.msra.mxu0 %v165
    %527 = vmatprep.subr.mxu0 %v170
    %528 = vmatpush1.msra.mxu0 %v169
    %529 = vmatprep.subr.mxu0 %v174
    %530 = vmatpush1.msra.mxu0 %v173
    %531 = vmatprep.subr.mxu0 %v178
    %532 = vmatpush1.msra.mxu0 %v177
    %533 = vmatprep.subr.mxu0 %v182
    %534 = vmatpush1.msra.mxu0 %v181
    %535 = vmatprep.subr.mxu0 %v186
    %536 = vmatpush1.msra.mxu0 %v185
    %537 = vmatprep.subr.mxu0 %v190
    %538 = vmatpush1.msra.mxu0 %v189
    %539 = vmatprep.subr.mxu0 %v194
    %540 = vmatpush1.msra.mxu0 %v193
    %541 = vmatprep.subr.mxu0 %v198
    %542 = vmatpush1.msra.mxu0 %v197
    %543 = vmatprep.subr.mxu0 %v202
    %544 = vmatpush1.msra.mxu0 %v201
    %545 = vmatprep.subr.mxu0 %v206
    %546 = vmatpush1.msra.mxu0 %v205
    %547 = vmatprep.subr.mxu0 %v210
    %548 = vmatpush1.msra.mxu0 %v209
    %549 = vmatprep.subr.mxu0 %v214
    %550 = vmatpush1.msra.mxu0 %v213
    %551 = vmatprep.subr.mxu0 %v218
    %552 = vmatpush1.msra.mxu0 %v217
    %553 = vmatprep.mubr.f32.mxu0 0.0
    %554 = vmatmul.mubr.f32.gmra.mrb[0].mxu0 %v417
    %v555 = vpop.f32.mrb[0].mxu0
    %v556 = vadd.f32 %v360, %v555
    %v557 = vpop.f32.mrb[0].mxu0
    %v558 = vadd.f32 %v364, %v557
    %559 = vdwg.mxu0
    %v560 = vxor.u32 %v485, 2147483648
    %v561 = vmul.f32 %v560, 1.442695
    %v562 = vpow.pop %v561
    %v563 = vadd.f32 %v562, 1.0
    %v564 = vrcp.pop %v563
    %v565 = vmul.f32 1.0, %v564
    %v566 = vxor.u32 %v487, 2147483648
    %v567 = vmul.f32 %v566, 1.442695
    %v568 = vpow.pop %v567
    %v569 = vadd.f32 %v568, 1.0
    %v570 = vrcp.pop %v569
    %v571 = vmul.f32 1.0, %v570
    %v572 = vtanh.pop %v556
    %v573 = vxor.u32 %v558, 2147483648
    %v574 = vmul.f32 %v573, 1.442695
    %v575 = vpow.pop %v574
    %v576 = vadd.f32 %v575, 1.0
    %v577 = vrcp.pop %v576
    %v578 = vmul.f32 1.0, %v577
    %v579 = vmul.f32 %v571, 0.0
    %v580 = vmul.f32 %v565, %v572
    %v581 = vadd.f32 %v579, %v580
    %v582 = vtanh.pop %v581
    %v583 = vmul.f32 %v578, %v582
    %584 = vmatprep.subr.mxu0 %v220
    %585 = vmatpush1.msra.mxu0 %v219
    %586 = vmatprep.subr.mxu0 %v224
    %587 = vmatpush1.msra.mxu0 %v223
    %588 = vmatprep.subr.mxu0 %v228
    %589 = vmatpush1.msra.mxu0 %v227
    %590 = vmatprep.subr.mxu0 %v232
    %591 = vmatpush1.msra.mxu0 %v231
    %592 = vmatprep.subr.mxu0 %v236
    %593 = vmatpush1.msra.mxu0 %v235
    %594 = vmatprep.subr.mxu0 %v240
    %595 = vmatpush1.msra.mxu0 %v239
    %596 = vmatprep.subr.mxu0 %v244
    %597 = vmatpush1.msra.mxu0 %v243
    %598 = vmatprep.subr.mxu0 %v248
    %599 = vmatpush1.msra.mxu0 %v247
    %600 = vmatprep.subr.mxu0 %v252
    %601 = vmatpush1.msra.mxu0 %v251
    %602 = vmatprep.subr.mxu0 %v256
    %603 = vmatpush1.msra.mxu0 %v255
    %604 = vmatprep.subr.mxu0 %v260
    %605 = vmatpush1.msra.mxu0 %v259
    %606 = vmatprep.subr.mxu0 %v264
    %607 = vmatpush1.msra.mxu0 %v263
    %608 = vmatprep.subr.mxu0 %v268
    %609 = vmatpush1.msra.mxu0 %v267
    %610 = vmatprep.subr.mxu0 %v272
    %611 = vmatpush1.msra.mxu0 %v271
    %612 = vmatprep.subr.mxu0 %v276
    %613 = vmatpush1.msra.mxu0 %v275
    %614 = vmatprep.subr.mxu0 %v280
    %615 = vmatpush1.msra.mxu0 %v279
    %616 = vmatprep.subr.mxu0 %v284
    %617 = vmatpush1.msra.mxu0 %v283
    %618 = vmatprep.subr.mxu0 %v288
    %619 = vmatpush1.msra.mxu0 %v287
    %620 = vmatprep.subr.mxu0 %v292
    %621 = vmatpush1.msra.mxu0 %v291
    %622 = vmatprep.subr.mxu0 %v296
    %623 = vmatpush1.msra.mxu0 %v295
    %624 = vmatprep.subr.mxu0 %v300
    %625 = vmatpush1.msra.mxu0 %v299
    %626 = vmatprep.subr.mxu0 %v304
    %627 = vmatpush1.msra.mxu0 %v303
    %628 = vmatprep.subr.mxu0 %v308
    %629 = vmatpush1.msra.mxu0 %v307
    %630 = vmatprep.subr.mxu0 %v312
    %631 = vmatpush1.msra.mxu0 %v311
    %632 = vmatprep.subr.mxu0 %v316
    %633 = vmatpush1.msra.mxu0 %v315
    %634 = vmatprep.subr.mxu0 %v320
    %635 = vmatpush1.msra.mxu0 %v319
    %636 = vmatprep.subr.mxu0 %v324
    %637 = vmatpush1.msra.mxu0 %v323
    %638 = vmatprep.subr.mxu0 %v328
    %639 = vmatpush1.msra.mxu0 %v327
    %640 = vmatprep.subr.mxu0 %v332
    %641 = vmatpush1.msra.mxu0 %v331
    %642 = vmatprep.subr.mxu0 %v336
    %643 = vmatpush1.msra.mxu0 %v335
    %644 = vmatprep.subr.mxu0 %v340
    %645 = vmatpush1.msra.mxu0 %v339
    %646 = vmatprep.subr.mxu0 %v344
    %647 = vmatpush1.msra.mxu0 %v343
    %648 = vmatprep.mubr.f32.mxu0 0.0
    %649 = vmatmul.mubr.f32.gmra.mrb[0].mxu0 %v583
    %v650 = vpop.f32.mrb[0].mxu0
    %v651 = vadd.f32 %v374, %v650
    %v652 = vpop.f32.mrb[0].mxu0
    %v653 = vadd.f32 %v378, %v652
    %654 = vdwg.mxu0
    %655 = vmatprep.subr.mxu0 %v222
    %656 = vmatpush1.msra.mxu0 %v221
    %657 = vmatprep.subr.mxu0 %v226
    %658 = vmatpush1.msra.mxu0 %v225
    %659 = vmatprep.subr.mxu0 %v230
    %660 = vmatpush1.msra.mxu0 %v229
    %661 = vmatprep.subr.mxu0 %v234
    %662 = vmatpush1.msra.mxu0 %v233
    %663 = vmatprep.subr.mxu0 %v238
    %664 = vmatpush1.msra.mxu0 %v237
    %665 = vmatprep.subr.mxu0 %v242
    %666 = vmatpush1.msra.mxu0 %v241
    %667 = vmatprep.subr.mxu0 %v246
    %668 = vmatpush1.msra.mxu0 %v245
    %669 = vmatprep.subr.mxu0 %v250
    %670 = vmatpush1.msra.mxu0 %v249
    %671 = vmatprep.subr.mxu0 %v254
    %672 = vmatpush1.msra.mxu0 %v253
    %673 = vmatprep.subr.mxu0 %v258
    %674 = vmatpush1.msra.mxu0 %v257
    %675 = vmatprep.subr.mxu0 %v262
    %676 = vmatpush1.msra.mxu0 %v261
    %677 = vmatprep.subr.mxu0 %v266
    %678 = vmatpush1.msra.mxu0 %v265
    %679 = vmatprep.subr.mxu0 %v270
    %680 = vmatpush1.msra.mxu0 %v269
    %681 = vmatprep.subr.mxu0 %v274
    %682 = vmatpush1.msra.mxu0 %v273
    %683 = vmatprep.subr.mxu0 %v278
    %684 = vmatpush1.msra.mxu0 %v277
    %685 = vmatprep.subr.mxu0 %v282
    %686 = vmatpush1.msra.mxu0 %v281
    %687 = vmatprep.subr.mxu0 %v286
    %688 = vmatpush1.msra.mxu0 %v285
    %689 = vmatprep.subr.mxu0 %v290
    %690 = vmatpush1.msra.mxu0 %v289
    %691 = vmatprep.subr.mxu0 %v294
    %692 = vmatpush1.msra.mxu0 %v293
    %693 = vmatprep.subr.mxu0 %v298
    %694 = vmatpush1.msra.mxu0 %v297
    %695 = vmatprep.subr.mxu0 %v302
    %696 = vmatpush1.msra.mxu0 %v301
    %697 = vmatprep.subr.mxu0 %v306
    %698 = vmatpush1.msra.mxu0 %v305
    %699 = vmatprep.subr.mxu0 %v310
    %700 = vmatpush1.msra.mxu0 %v309
    %701 = vmatprep.subr.mxu0 %v314
    %702 = vmatpush1.msra.mxu0 %v313
    %703 = vmatprep.subr.mxu0 %v318
    %704 = vmatpush1.msra.mxu0 %v317
    %705 = vmatprep.subr.mxu0 %v322
    %706 = vmatpush1.msra.mxu0 %v321
    %707 = vmatprep.subr.mxu0 %v326
    %708 = vmatpush1.msra.mxu0 %v325
    %709 = vmatprep.subr.mxu0 %v330
    %710 = vmatpush1.msra.mxu0 %v329
    %711 = vmatprep.subr.mxu0 %v334
    %712 = vmatpush1.msra.mxu0 %v333
    %713 = vmatprep.subr.mxu0 %v338
    %714 = vmatpush1.msra.mxu0 %v337
    %715 = vmatprep.subr.mxu0 %v342
    %716 = vmatpush1.msra.mxu0 %v341
    %717 = vmatprep.subr.mxu0 %v346
    %718 = vmatpush1.msra.mxu0 %v345
    %719 = vmatprep.mubr.f32.mxu0 0.0
    %720 = vmatmul.mubr.f32.gmra.mrb[0].mxu0 %v583
    %v721 = vpop.f32.mrb[0].mxu0
    %v722 = vadd.f32 %v382, %v721
    %v723 = vpop.f32.mrb[0].mxu0
    %v724 = vadd.f32 %v386, %v723
    %725 = vdwg.mxu0
    %v726 = vxor.u32 %v651, 2147483648
    %v727 = vmul.f32 %v726, 1.442695
    %v728 = vpow.pop %v727
    %v729 = vadd.f32 %v728, 1.0
    %v730 = vrcp.pop %v729
    %v731 = vmul.f32 1.0, %v730
    %v732 = vxor.u32 %v653, 2147483648
    %v733 = vmul.f32 %v732, 1.442695
    %v734 = vpow.pop %v733
    %v735 = vadd.f32 %v734, 1.0
    %v736 = vrcp.pop %v735
    %v737 = vmul.f32 1.0, %v736
    %v738 = vtanh.pop %v722
    %v739 = vxor.u32 %v724, 2147483648
    %v740 = vmul.f32 %v739, 1.442695
    %v741 = vpow.pop %v740
    %v742 = vadd.f32 %v741, 1.0
    %v743 = vrcp.pop %v742
    %v744 = vmul.f32 1.0, %v743
    %v745 = vmul.f32 %v737, 0.0
    %v746 = vmul.f32 %v731, %v738
    %v747 = vadd.f32 %v745, %v746
    %v748 = vtanh.pop %v747
    %v749 = vmul.f32 %v744, %v748
    %s750 = sld [smem:[#allocation3 + $0x80]]
    %s751 = scalar_lea.vmem [#allocation6], %s750
    %v752 = vld [vmem:[%s751] sm:$0x1]
    %s753 = sld [smem:[#allocation3 + $0x81]]
    %s754 = scalar_lea.vmem [#allocation6], %s753
    %v755 = vld [vmem:[%s754] sm:$0x1]
    %s756 = sld [smem:[#allocation3 + $0x82]]
    %s757 = scalar_lea.vmem [#allocation6], %s756
    %v758 = vld [vmem:[%s757] sm:$0x1]
    %s759 = sld [smem:[#allocation3 + $0x83]]
    %s760 = scalar_lea.vmem [#allocation6], %s759
    %v761 = vld [vmem:[%s760] sm:$0x1]
    %v763 = vrot.slane %v755, 7
    %v766 = vrot.slane %v758, 6
    %v769 = vrot.slane %v761, 5
    %v771 = vsel %vm412, %v752, %v763
    %v772 = vsel %vm414, %v771, %v766
    %v773 = vsel %vm416, %v772, %v769
    %774 = vmatprep.subr.mxu0 %v92
    %775 = vmatpush1.msra.mxu0 %v91
    %776 = vmatprep.subr.mxu0 %v96
    %777 = vmatpush1.msra.mxu0 %v95
    %778 = vmatprep.subr.mxu0 %v100
    %779 = vmatpush1.msra.mxu0 %v99
    %780 = vmatprep.subr.mxu0 %v104
    %781 = vmatpush1.msra.mxu0 %v103
    %782 = vmatprep.subr.mxu0 %v108
    %783 = vmatpush1.msra.mxu0 %v107
    %784 = vmatprep.subr.mxu0 %v112
    %785 = vmatpush1.msra.mxu0 %v111
    %786 = vmatprep.subr.mxu0 %v116
    %787 = vmatpush1.msra.mxu0 %v115
    %788 = vmatprep.subr.mxu0 %v120
    %789 = vmatpush1.msra.mxu0 %v119
    %790 = vmatprep.subr.mxu0 %v124
    %791 = vmatpush1.msra.mxu0 %v123
    %792 = vmatprep.subr.mxu0 %v128
    %793 = vmatpush1.msra.mxu0 %v127
    %794 = vmatprep.subr.mxu0 %v132
    %795 = vmatpush1.msra.mxu0 %v131
    %796 = vmatprep.subr.mxu0 %v136
    %797 = vmatpush1.msra.mxu0 %v135
    %798 = vmatprep.subr.mxu0 %v140
    %799 = vmatpush1.msra.mxu0 %v139
    %800 = vmatprep.subr.mxu0 %v144
    %801 = vmatpush1.msra.mxu0 %v143
    %802 = vmatprep.subr.mxu0 %v148
    %803 = vmatpush1.msra.mxu0 %v147
    %804 = vmatprep.subr.mxu0 %v152
    %805 = vmatpush1.msra.mxu0 %v151
    %806 = vmatprep.subr.mxu0 %v156
    %807 = vmatpush1.msra.mxu0 %v155
    %808 = vmatprep.subr.mxu0 %v160
    %809 = vmatpush1.msra.mxu0 %v159
    %810 = vmatprep.subr.mxu0 %v164
    %811 = vmatpush1.msra.mxu0 %v163
    %812 = vmatprep.subr.mxu0 %v168
    %813 = vmatpush1.msra.mxu0 %v167
    %814 = vmatprep.subr.mxu0 %v172
    %815 = vmatpush1.msra.mxu0 %v171
    %816 = vmatprep.subr.mxu0 %v176
    %817 = vmatpush1.msra.mxu0 %v175
    %818 = vmatprep.subr.mxu0 %v180
    %819 = vmatpush1.msra.mxu0 %v179
    %820 = vmatprep.subr.mxu0 %v184
    %821 = vmatpush1.msra.mxu0 %v183
    %822 = vmatprep.subr.mxu0 %v188
    %823 = vmatpush1.msra.mxu0 %v187
    %824 = vmatprep.subr.mxu0 %v192
    %825 = vmatpush1.msra.mxu0 %v191
    %826 = vmatprep.subr.mxu0 %v196
    %827 = vmatpush1.msra.mxu0 %v195
    %828 = vmatprep.subr.mxu0 %v200
    %829 = vmatpush1.msra.mxu0 %v199
    %830 = vmatprep.subr.mxu0 %v204
    %831 = vmatpush1.msra.mxu0 %v203
    %832 = vmatprep.subr.mxu0 %v208
    %833 = vmatpush1.msra.mxu0 %v207
    %834 = vmatprep.subr.mxu0 %v212
    %835 = vmatpush1.msra.mxu0 %v211
    %836 = vmatprep.subr.mxu0 %v216
    %837 = vmatpush1.msra.mxu0 %v215
    %838 = vmatprep.mubr.f32.mxu0 %v583
    %839 = vmatmul.mubr.f32.gmra.mrb[0].mxu0 %v773
    %v840 = vpop.f32.mrb[0].mxu0
    %v841 = vadd.f32 %v352, %v840
    %v842 = vpop.f32.mrb[0].mxu0
    %v843 = vadd.f32 %v356, %v842
    %844 = vdwg.mxu0
    %845 = vmatprep.subr.mxu0 %v94
    %846 = vmatpush1.msra.mxu0 %v93
    %847 = vmatprep.subr.mxu0 %v98
    %848 = vmatpush1.msra.mxu0 %v97
    %849 = vmatprep.subr.mxu0 %v102
    %850 = vmatpush1.msra.mxu0 %v101
    %851 = vmatprep.subr.mxu0 %v106
    %852 = vmatpush1.msra.mxu0 %v105
    %853 = vmatprep.subr.mxu0 %v110
    %854 = vmatpush1.msra.mxu0 %v109
    %855 = vmatprep.subr.mxu0 %v114
    %856 = vmatpush1.msra.mxu0 %v113
    %857 = vmatprep.subr.mxu0 %v118
    %858 = vmatpush1.msra.mxu0 %v117
    %859 = vmatprep.subr.mxu0 %v122
    %860 = vmatpush1.msra.mxu0 %v121
    %861 = vmatprep.subr.mxu0 %v126
    %862 = vmatpush1.msra.mxu0 %v125
    %863 = vmatprep.subr.mxu0 %v130
    %864 = vmatpush1.msra.mxu0 %v129
    %865 = vmatprep.subr.mxu0 %v134
    %866 = vmatpush1.msra.mxu0 %v133
    %867 = vmatprep.subr.mxu0 %v138
    %868 = vmatpush1.msra.mxu0 %v137
    %869 = vmatprep.subr.mxu0 %v142
    %870 = vmatpush1.msra.mxu0 %v141
    %871 = vmatprep.subr.mxu0 %v146
    %872 = vmatpush1.msra.mxu0 %v145
    %873 = vmatprep.subr.mxu0 %v150
    %874 = vmatpush1.msra.mxu0 %v149
    %875 = vmatprep.subr.mxu0 %v154
    %876 = vmatpush1.msra.mxu0 %v153
    %877 = vmatprep.subr.mxu0 %v158
    %878 = vmatpush1.msra.mxu0 %v157
    %879 = vmatprep.subr.mxu0 %v162
    %880 = vmatpush1.msra.mxu0 %v161
    %881 = vmatprep.subr.mxu0 %v166
    %882 = vmatpush1.msra.mxu0 %v165
    %883 = vmatprep.subr.mxu0 %v170
    %884 = vmatpush1.msra.mxu0 %v169
    %885 = vmatprep.subr.mxu0 %v174
    %886 = vmatpush1.msra.mxu0 %v173
    %887 = vmatprep.subr.mxu0 %v178
    %888 = vmatpush1.msra.mxu0 %v177
    %889 = vmatprep.subr.mxu0 %v182
    %890 = vmatpush1.msra.mxu0 %v181
    %891 = vmatprep.subr.mxu0 %v186
    %892 = vmatpush1.msra.mxu0 %v185
    %893 = vmatprep.subr.mxu0 %v190
    %894 = vmatpush1.msra.mxu0 %v189
    %895 = vmatprep.subr.mxu0 %v194
    %896 = vmatpush1.msra.mxu0 %v193
    %897 = vmatprep.subr.mxu0 %v198
    %898 = vmatpush1.msra.mxu0 %v197
    %899 = vmatprep.subr.mxu0 %v202
    %900 = vmatpush1.msra.mxu0 %v201
    %901 = vmatprep.subr.mxu0 %v206
    %902 = vmatpush1.msra.mxu0 %v205
    %903 = vmatprep.subr.mxu0 %v210
    %904 = vmatpush1.msra.mxu0 %v209
    %905 = vmatprep.subr.mxu0 %v214
    %906 = vmatpush1.msra.mxu0 %v213
    %907 = vmatprep.subr.mxu0 %v218
    %908 = vmatpush1.msra.mxu0 %v217
    %909 = vmatprep.mubr.f32.mxu0 %v583
    %910 = vmatmul.mubr.f32.gmra.mrb[0].mxu0 %v773
    %v911 = vpop.f32.mrb[0].mxu0
    %v912 = vadd.f32 %v360, %v911
    %v913 = vpop.f32.mrb[0].mxu0
    %v914 = vadd.f32 %v364, %v913
    %915 = vdwg.mxu0
    %v916 = vxor.u32 %v841, 2147483648
    %v917 = vmul.f32 %v916, 1.442695
    %v918 = vpow.pop %v917
    %v919 = vadd.f32 %v918, 1.0
    %v920 = vrcp.pop %v919
    %v921 = vmul.f32 1.0, %v920
    %v922 = vxor.u32 %v843, 2147483648
    %v923 = vmul.f32 %v922, 1.442695
    %v924 = vpow.pop %v923
    %v925 = vadd.f32 %v924, 1.0
    %v926 = vrcp.pop %v925
    %v927 = vmul.f32 1.0, %v926
    %v928 = vtanh.pop %v912
    %v929 = vxor.u32 %v914, 2147483648
    %v930 = vmul.f32 %v929, 1.442695
    %v931 = vpow.pop %v930
    %v932 = vadd.f32 %v931, 1.0
    %v933 = vrcp.pop %v932
    %v934 = vmul.f32 1.0, %v933
    %v935 = vmul.f32 %v927, %v581
    %v936 = vmul.f32 %v921, %v928
    %v937 = vadd.f32 %v935, %v936
    %v938 = vtanh.pop %v937
    %v939 = vmul.f32 %v934, %v938
    %940 = vmatprep.subr.mxu0 %v220
    %941 = vmatpush1.msra.mxu0 %v219
    %942 = vmatprep.subr.mxu0 %v224
    %943 = vmatpush1.msra.mxu0 %v223
    %944 = vmatprep.subr.mxu0 %v228
    %945 = vmatpush1.msra.mxu0 %v227
    %946 = vmatprep.subr.mxu0 %v232
    %947 = vmatpush1.msra.mxu0 %v231
    %948 = vmatprep.subr.mxu0 %v236
    %949 = vmatpush1.msra.mxu0 %v235
    %950 = vmatprep.subr.mxu0 %v240
    %951 = vmatpush1.msra.mxu0 %v239
    %952 = vmatprep.subr.mxu0 %v244
    %953 = vmatpush1.msra.mxu0 %v243
    %954 = vmatprep.subr.mxu0 %v248
    %955 = vmatpush1.msra.mxu0 %v247
    %956 = vmatprep.subr.mxu0 %v252
    %957 = vmatpush1.msra.mxu0 %v251
    %958 = vmatprep.subr.mxu0 %v256
    %959 = vmatpush1.msra.mxu0 %v255
    %960 = vmatprep.subr.mxu0 %v260
    %961 = vmatpush1.msra.mxu0 %v259
    %962 = vmatprep.subr.mxu0 %v264
    %963 = vmatpush1.msra.mxu0 %v263
    %964 = vmatprep.subr.mxu0 %v268
    %965 = vmatpush1.msra.mxu0 %v267
    %966 = vmatprep.subr.mxu0 %v272
    %967 = vmatpush1.msra.mxu0 %v271
    %968 = vmatprep.subr.mxu0 %v276
    %969 = vmatpush1.msra.mxu0 %v275
    %970 = vmatprep.subr.mxu0 %v280
    %971 = vmatpush1.msra.mxu0 %v279
    %972 = vmatprep.subr.mxu0 %v284
    %973 = vmatpush1.msra.mxu0 %v283
    %974 = vmatprep.subr.mxu0 %v288
    %975 = vmatpush1.msra.mxu0 %v287
    %976 = vmatprep.subr.mxu0 %v292
    %977 = vmatpush1.msra.mxu0 %v291
    %978 = vmatprep.subr.mxu0 %v296
    %979 = vmatpush1.msra.mxu0 %v295
    %980 = vmatprep.subr.mxu0 %v300
    %981 = vmatpush1.msra.mxu0 %v299
    %982 = vmatprep.subr.mxu0 %v304
    %983 = vmatpush1.msra.mxu0 %v303
    %984 = vmatprep.subr.mxu0 %v308
    %985 = vmatpush1.msra.mxu0 %v307
    %986 = vmatprep.subr.mxu0 %v312
    %987 = vmatpush1.msra.mxu0 %v311
    %988 = vmatprep.subr.mxu0 %v316
    %989 = vmatpush1.msra.mxu0 %v315
    %990 = vmatprep.subr.mxu0 %v320
    %991 = vmatpush1.msra.mxu0 %v319
    %992 = vmatprep.subr.mxu0 %v324
    %993 = vmatpush1.msra.mxu0 %v323
    %994 = vmatprep.subr.mxu0 %v328
    %995 = vmatpush1.msra.mxu0 %v327
    %996 = vmatprep.subr.mxu0 %v332
    %997 = vmatpush1.msra.mxu0 %v331
    %998 = vmatprep.subr.mxu0 %v336
    %999 = vmatpush1.msra.mxu0 %v335
    %1000 = vmatprep.subr.mxu0 %v340
    %1001 = vmatpush1.msra.mxu0 %v339
    %1002 = vmatprep.subr.mxu0 %v344
    %1003 = vmatpush1.msra.mxu0 %v343
    %1004 = vmatprep.mubr.f32.mxu0 %v749
    %1005 = vmatmul.mubr.f32.gmra.mrb[0].mxu0 %v939
    %v1006 = vpop.f32.mrb[0].mxu0
    %v1007 = vadd.f32 %v374, %v1006
    %v1008 = vpop.f32.mrb[0].mxu0
    %v1009 = vadd.f32 %v378, %v1008
    %1010 = vdwg.mxu0
    %1011 = vmatprep.subr.mxu0 %v222
    %1012 = vmatpush1.msra.mxu0 %v221
    %1013 = vmatprep.subr.mxu0 %v226
    %1014 = vmatpush1.msra.mxu0 %v225
    %1015 = vmatprep.subr.mxu0 %v230
    %1016 = vmatpush1.msra.mxu0 %v229
    %1017 = vmatprep.subr.mxu0 %v234
    %1018 = vmatpush1.msra.mxu0 %v233
    %1019 = vmatprep.subr.mxu0 %v238
    %1020 = vmatpush1.msra.mxu0 %v237
    %1021 = vmatprep.subr.mxu0 %v242
    %1022 = vmatpush1.msra.mxu0 %v241
    %1023 = vmatprep.subr.mxu0 %v246
    %1024 = vmatpush1.msra.mxu0 %v245
    %1025 = vmatprep.subr.mxu0 %v250
    %1026 = vmatpush1.msra.mxu0 %v249
    %1027 = vmatprep.subr.mxu0 %v254
    %1028 = vmatpush1.msra.mxu0 %v253
    %1029 = vmatprep.subr.mxu0 %v258
    %1030 = vmatpush1.msra.mxu0 %v257
    %1031 = vmatprep.subr.mxu0 %v262
    %1032 = vmatpush1.msra.mxu0 %v261
    %1033 = vmatprep.subr.mxu0 %v266
    %1034 = vmatpush1.msra.mxu0 %v265
    %1035 = vmatprep.subr.mxu0 %v270
    %1036 = vmatpush1.msra.mxu0 %v269
    %1037 = vmatprep.subr.mxu0 %v274
    %1038 = vmatpush1.msra.mxu0 %v273
    %1039 = vmatprep.subr.mxu0 %v278
    %1040 = vmatpush1.msra.mxu0 %v277
    %1041 = vmatprep.subr.mxu0 %v282
    %1042 = vmatpush1.msra.mxu0 %v281
    %1043 = vmatprep.subr.mxu0 %v286
    %1044 = vmatpush1.msra.mxu0 %v285
    %1045 = vmatprep.subr.mxu0 %v290
    %1046 = vmatpush1.msra.mxu0 %v289
    %1047 = vmatprep.subr.mxu0 %v294
    %1048 = vmatpush1.msra.mxu0 %v293
    %1049 = vmatprep.subr.mxu0 %v298
    %1050 = vmatpush1.msra.mxu0 %v297
    %1051 = vmatprep.subr.mxu0 %v302
    %1052 = vmatpush1.msra.mxu0 %v301
    %1053 = vmatprep.subr.mxu0 %v306
    %1054 = vmatpush1.msra.mxu0 %v305
    %1055 = vmatprep.subr.mxu0 %v310
    %1056 = vmatpush1.msra.mxu0 %v309
    %1057 = vmatprep.subr.mxu0 %v314
    %1058 = vmatpush1.msra.mxu0 %v313
    %1059 = vmatprep.subr.mxu0 %v318
    %1060 = vmatpush1.msra.mxu0 %v317
    %1061 = vmatprep.subr.mxu0 %v322
    %1062 = vmatpush1.msra.mxu0 %v321
    %1063 = vmatprep.subr.mxu0 %v326
    %1064 = vmatpush1.msra.mxu0 %v325
    %1065 = vmatprep.subr.mxu0 %v330
    %1066 = vmatpush1.msra.mxu0 %v329
    %1067 = vmatprep.subr.mxu0 %v334
    %1068 = vmatpush1.msra.mxu0 %v333
    %1069 = vmatprep.subr.mxu0 %v338
    %1070 = vmatpush1.msra.mxu0 %v337
    %1071 = vmatprep.subr.mxu0 %v342
    %1072 = vmatpush1.msra.mxu0 %v341
    %1073 = vmatprep.subr.mxu0 %v346
    %1074 = vmatpush1.msra.mxu0 %v345
    %1075 = vmatprep.mubr.f32.mxu0 %v749
    %1076 = vmatmul.mubr.f32.gmra.mrb[0].mxu0 %v939
    %v1077 = vpop.f32.mrb[0].mxu0
    %v1078 = vadd.f32 %v382, %v1077
    %v1079 = vpop.f32.mrb[0].mxu0
    %v1080 = vadd.f32 %v386, %v1079
    %1081 = vdwg.mxu0
    %v1082 = vxor.u32 %v1007, 2147483648
    %v1083 = vmul.f32 %v1082, 1.442695
    %v1084 = vpow.pop %v1083
    %v1085 = vadd.f32 %v1084, 1.0
    %v1086 = vrcp.pop %v1085
    %v1087 = vmul.f32 1.0, %v1086
    %v1088 = vxor.u32 %v1009, 2147483648
    %v1089 = vmul.f32 %v1088, 1.442695
    %v1090 = vpow.pop %v1089
    %v1091 = vadd.f32 %v1090, 1.0
    %v1092 = vrcp.pop %v1091
    %v1093 = vmul.f32 1.0, %v1092
    %v1094 = vtanh.pop %v1078
    %v1095 = vxor.u32 %v1080, 2147483648
    %v1096 = vmul.f32 %v1095, 1.442695
    %v1097 = vpow.pop %v1096
    %v1098 = vadd.f32 %v1097, 1.0
    %v1099 = vrcp.pop %v1098
    %v1100 = vmul.f32 1.0, %v1099
    %v1101 = vmul.f32 %v1093, %v747
    %v1102 = vmul.f32 %v1087, %v1094
    %v1103 = vadd.f32 %v1101, %v1102
    %v1104 = vtanh.pop %v1103
    %v1105 = vmul.f32 %v1100, %v1104
    %s1106 = sld [smem:[#allocation3 + $0x100]]
    %s1107 = scalar_lea.vmem [#allocation6], %s1106
    %v1108 = vld [vmem:[%s1107] sm:$0x1]
    %s1109 = sld [smem:[#allocation3 + $0x101]]
    %s1110 = scalar_lea.vmem [#allocation6], %s1109
    %v1111 = vld [vmem:[%s1110] sm:$0x1]
    %s1112 = sld [smem:[#allocation3 + $0x102]]
    %s1113 = scalar_lea.vmem [#allocation6], %s1112
    %v1114 = vld [vmem:[%s1113] sm:$0x1]
    %s1115 = sld [smem:[#allocation3 + $0x103]]
    %s1116 = scalar_lea.vmem [#allocation6], %s1115
    %v1117 = vld [vmem:[%s1116] sm:$0x1]
    %v1119 = vrot.slane %v1111, 7
    %v1122 = vrot.slane %v1114, 6
    %v1125 = vrot.slane %v1117, 5
    %v1127 = vsel %vm412, %v1108, %v1119
    %v1128 = vsel %vm414, %v1127, %v1122
    %v1129 = vsel %vm416, %v1128, %v1125
    %1130 = vmatprep.subr.mxu0 %v92
    %1131 = vmatpush1.msra.mxu0 %v91
    %1132 = vmatprep.subr.mxu0 %v96
    %1133 = vmatpush1.msra.mxu0 %v95
    %1134 = vmatprep.subr.mxu0 %v100
    %1135 = vmatpush1.msra.mxu0 %v99
    %1136 = vmatprep.subr.mxu0 %v104
    %1137 = vmatpush1.msra.mxu0 %v103
    %1138 = vmatprep.subr.mxu0 %v108
    %1139 = vmatpush1.msra.mxu0 %v107
    %1140 = vmatprep.subr.mxu0 %v112
    %1141 = vmatpush1.msra.mxu0 %v111
    %1142 = vmatprep.subr.mxu0 %v116
    %1143 = vmatpush1.msra.mxu0 %v115
    %1144 = vmatprep.subr.mxu0 %v120
    %1145 = vmatpush1.msra.mxu0 %v119
    %1146 = vmatprep.subr.mxu0 %v124
    %1147 = vmatpush1.msra.mxu0 %v123
    %1148 = vmatprep.subr.mxu0 %v128
    %1149 = vmatpush1.msra.mxu0 %v127
    %1150 = vmatprep.subr.mxu0 %v132
    %1151 = vmatpush1.msra.mxu0 %v131
    %1152 = vmatprep.subr.mxu0 %v136
    %1153 = vmatpush1.msra.mxu0 %v135
    %1154 = vmatprep.subr.mxu0 %v140
    %1155 = vmatpush1.msra.mxu0 %v139
    %1156 = vmatprep.subr.mxu0 %v144
    %1157 = vmatpush1.msra.mxu0 %v143
    %1158 = vmatprep.subr.mxu0 %v148
    %1159 = vmatpush1.msra.mxu0 %v147
    %1160 = vmatprep.subr.mxu0 %v152
    %1161 = vmatpush1.msra.mxu0 %v151
    %1162 = vmatprep.subr.mxu0 %v156
    %1163 = vmatpush1.msra.mxu0 %v155
    %1164 = vmatprep.subr.mxu0 %v160
    %1165 = vmatpush1.msra.mxu0 %v159
    %1166 = vmatprep.subr.mxu0 %v164
    %1167 = vmatpush1.msra.mxu0 %v163
    %1168 = vmatprep.subr.mxu0 %v168
    %1169 = vmatpush1.msra.mxu0 %v167
    %1170 = vmatprep.subr.mxu0 %v172
    %1171 = vmatpush1.msra.mxu0 %v171
    %1172 = vmatprep.subr.mxu0 %v176
    %1173 = vmatpush1.msra.mxu0 %v175
    %1174 = vmatprep.subr.mxu0 %v180
    %1175 = vmatpush1.msra.mxu0 %v179
    %1176 = vmatprep.subr.mxu0 %v184
    %1177 = vmatpush1.msra.mxu0 %v183
    %1178 = vmatprep.subr.mxu0 %v188
    %1179 = vmatpush1.msra.mxu0 %v187
    %1180 = vmatprep.subr.mxu0 %v192
    %1181 = vmatpush1.msra.mxu0 %v191
    %1182 = vmatprep.subr.mxu0 %v196
    %1183 = vmatpush1.msra.mxu0 %v195
    %1184 = vmatprep.subr.mxu0 %v200
    %1185 = vmatpush1.msra.mxu0 %v199
    %1186 = vmatprep.subr.mxu0 %v204
    %1187 = vmatpush1.msra.mxu0 %v203
    %1188 = vmatprep.subr.mxu0 %v208
    %1189 = vmatpush1.msra.mxu0 %v207
    %1190 = vmatprep.subr.mxu0 %v212
    %1191 = vmatpush1.msra.mxu0 %v211
    %1192 = vmatprep.subr.mxu0 %v216
    %1193 = vmatpush1.msra.mxu0 %v215
    %1194 = vmatprep.mubr.f32.mxu0 %v939
    %1195 = vmatmul.mubr.f32.gmra.mrb[0].mxu0 %v1129
    %v1196 = vpop.f32.mrb[0].mxu0
    %v1197 = vadd.f32 %v352, %v1196
    %v1198 = vpop.f32.mrb[0].mxu0
    %v1199 = vadd.f32 %v356, %v1198
    %1200 = vdwg.mxu0
    %1201 = vmatprep.subr.mxu0 %v94
    %1202 = vmatpush1.msra.mxu0 %v93
    %1203 = vmatprep.subr.mxu0 %v98
    %1204 = vmatpush1.msra.mxu0 %v97
    %1205 = vmatprep.subr.mxu0 %v102
    %1206 = vmatpush1.msra.mxu0 %v101
    %1207 = vmatprep.subr.mxu0 %v106
    %1208 = vmatpush1.msra.mxu0 %v105
    %1209 = vmatprep.subr.mxu0 %v110
    %1210 = vmatpush1.msra.mxu0 %v109
    %1211 = vmatprep.subr.mxu0 %v114
    %1212 = vmatpush1.msra.mxu0 %v113
    %1213 = vmatprep.subr.mxu0 %v118
    %1214 = vmatpush1.msra.mxu0 %v117
    %1215 = vmatprep.subr.mxu0 %v122
    %1216 = vmatpush1.msra.mxu0 %v121
    %1217 = vmatprep.subr.mxu0 %v126
    %1218 = vmatpush1.msra.mxu0 %v125
    %1219 = vmatprep.subr.mxu0 %v130
    %1220 = vmatpush1.msra.mxu0 %v129
    %1221 = vmatprep.subr.mxu0 %v134
    %1222 = vmatpush1.msra.mxu0 %v133
    %1223 = vmatprep.subr.mxu0 %v138
    %1224 = vmatpush1.msra.mxu0 %v137
    %1225 = vmatprep.subr.mxu0 %v142
    %1226 = vmatpush1.msra.mxu0 %v141
    %1227 = vmatprep.subr.mxu0 %v146
    %1228 = vmatpush1.msra.mxu0 %v145
    %1229 = vmatprep.subr.mxu0 %v150
    %1230 = vmatpush1.msra.mxu0 %v149
    %1231 = vmatprep.subr.mxu0 %v154
    %1232 = vmatpush1.msra.mxu0 %v153
    %1233 = vmatprep.subr.mxu0 %v158
    %1234 = vmatpush1.msra.mxu0 %v157
    %1235 = vmatprep.subr.mxu0 %v162
    %1236 = vmatpush1.msra.mxu0 %v161
    %1237 = vmatprep.subr.mxu0 %v166
    %1238 = vmatpush1.msra.mxu0 %v165
    %1239 = vmatprep.subr.mxu0 %v170
    %1240 = vmatpush1.msra.mxu0 %v169
    %1241 = vmatprep.subr.mxu0 %v174
    %1242 = vmatpush1.msra.mxu0 %v173
    %1243 = vmatprep.subr.mxu0 %v178
    %1244 = vmatpush1.msra.mxu0 %v177
    %1245 = vmatprep.subr.mxu0 %v182
    %1246 = vmatpush1.msra.mxu0 %v181
    %1247 = vmatprep.subr.mxu0 %v186
    %1248 = vmatpush1.msra.mxu0 %v185
    %1249 = vmatprep.subr.mxu0 %v190
    %1250 = vmatpush1.msra.mxu0 %v189
    %1251 = vmatprep.subr.mxu0 %v194
    %1252 = vmatpush1.msra.mxu0 %v193
    %1253 = vmatprep.subr.mxu0 %v198
    %1254 = vmatpush1.msra.mxu0 %v197
    %1255 = vmatprep.subr.mxu0 %v202
    %1256 = vmatpush1.msra.mxu0 %v201
    %1257 = vmatprep.subr.mxu0 %v206
    %1258 = vmatpush1.msra.mxu0 %v205
    %1259 = vmatprep.subr.mxu0 %v210
    %1260 = vmatpush1.msra.mxu0 %v209
    %1261 = vmatprep.subr.mxu0 %v214
    %1262 = vmatpush1.msra.mxu0 %v213
    %1263 = vmatprep.subr.mxu0 %v218
    %1264 = vmatpush1.msra.mxu0 %v217
    %1265 = vmatprep.mubr.f32.mxu0 %v939
    %1266 = vmatmul.mubr.f32.gmra.mrb[0].mxu0 %v1129
    %v1267 = vpop.f32.mrb[0].mxu0
    %v1268 = vadd.f32 %v360, %v1267
    %v1269 = vpop.f32.mrb[0].mxu0
    %v1270 = vadd.f32 %v364, %v1269
    %1271 = vdwg.mxu0
    %v1272 = vxor.u32 %v1197, 2147483648
    %v1273 = vmul.f32 %v1272, 1.442695
    %v1274 = vpow.pop %v1273
    %v1275 = vadd.f32 %v1274, 1.0
    %v1276 = vrcp.pop %v1275
    %v1277 = vmul.f32 1.0, %v1276
    %v1278 = vxor.u32 %v1199, 2147483648
    %v1279 = vmul.f32 %v1278, 1.442695
    %v1280 = vpow.pop %v1279
    %v1281 = vadd.f32 %v1280, 1.0
    %v1282 = vrcp.pop %v1281
    %v1283 = vmul.f32 1.0, %v1282
    %v1284 = vtanh.pop %v1268
    %v1285 = vxor.u32 %v1270, 2147483648
    %v1286 = vmul.f32 %v1285, 1.442695
    %v1287 = vpow.pop %v1286
    %v1288 = vadd.f32 %v1287, 1.0
    %v1289 = vrcp.pop %v1288
    %v1290 = vmul.f32 1.0, %v1289
    %v1291 = vmul.f32 %v1283, %v937
    %v1292 = vmul.f32 %v1277, %v1284
    %v1293 = vadd.f32 %v1291, %v1292
    %v1294 = vtanh.pop %v1293
    %v1295 = vmul.f32 %v1290, %v1294
    %1296 = vmatprep.subr.mxu0 %v220
    %1297 = vmatpush1.msra.mxu0 %v219
    %1298 = vmatprep.subr.mxu0 %v224
    %1299 = vmatpush1.msra.mxu0 %v223
    %1300 = vmatprep.subr.mxu0 %v228
    %1301 = vmatpush1.msra.mxu0 %v227
    %1302 = vmatprep.subr.mxu0 %v232
    %1303 = vmatpush1.msra.mxu0 %v231
    %1304 = vmatprep.subr.mxu0 %v236
    %1305 = vmatpush1.msra.mxu0 %v235
    %1306 = vmatprep.subr.mxu0 %v240
    %1307 = vmatpush1.msra.mxu0 %v239
    %1308 = vmatprep.subr.mxu0 %v244
    %1309 = vmatpush1.msra.mxu0 %v243
    %1310 = vmatprep.subr.mxu0 %v248
    %1311 = vmatpush1.msra.mxu0 %v247
    %1312 = vmatprep.subr.mxu0 %v252
    %1313 = vmatpush1.msra.mxu0 %v251
    %1314 = vmatprep.subr.mxu0 %v256
    %1315 = vmatpush1.msra.mxu0 %v255
    %1316 = vmatprep.subr.mxu0 %v260
    %1317 = vmatpush1.msra.mxu0 %v259
    %1318 = vmatprep.subr.mxu0 %v264
    %1319 = vmatpush1.msra.mxu0 %v263
    %1320 = vmatprep.subr.mxu0 %v268
    %1321 = vmatpush1.msra.mxu0 %v267
    %1322 = vmatprep.subr.mxu0 %v272
    %1323 = vmatpush1.msra.mxu0 %v271
    %1324 = vmatprep.subr.mxu0 %v276
    %1325 = vmatpush1.msra.mxu0 %v275
    %1326 = vmatprep.subr.mxu0 %v280
    %1327 = vmatpush1.msra.mxu0 %v279
    %1328 = vmatprep.subr.mxu0 %v284
    %1329 = vmatpush1.msra.mxu0 %v283
    %1330 = vmatprep.subr.mxu0 %v288
    %1331 = vmatpush1.msra.mxu0 %v287
    %1332 = vmatprep.subr.mxu0 %v292
    %1333 = vmatpush1.msra.mxu0 %v291
    %1334 = vmatprep.subr.mxu0 %v296
    %1335 = vmatpush1.msra.mxu0 %v295
    %1336 = vmatprep.subr.mxu0 %v300
    %1337 = vmatpush1.msra.mxu0 %v299
    %1338 = vmatprep.subr.mxu0 %v304
    %1339 = vmatpush1.msra.mxu0 %v303
    %1340 = vmatprep.subr.mxu0 %v308
    %1341 = vmatpush1.msra.mxu0 %v307
    %1342 = vmatprep.subr.mxu0 %v312
    %1343 = vmatpush1.msra.mxu0 %v311
    %1344 = vmatprep.subr.mxu0 %v316
    %1345 = vmatpush1.msra.mxu0 %v315
    %1346 = vmatprep.subr.mxu0 %v320
    %1347 = vmatpush1.msra.mxu0 %v319
    %1348 = vmatprep.subr.mxu0 %v324
    %1349 = vmatpush1.msra.mxu0 %v323
    %1350 = vmatprep.subr.mxu0 %v328
    %1351 = vmatpush1.msra.mxu0 %v327
    %1352 = vmatprep.subr.mxu0 %v332
    %1353 = vmatpush1.msra.mxu0 %v331
    %1354 = vmatprep.subr.mxu0 %v336
    %1355 = vmatpush1.msra.mxu0 %v335
    %1356 = vmatprep.subr.mxu0 %v340
    %1357 = vmatpush1.msra.mxu0 %v339
    %1358 = vmatprep.subr.mxu0 %v344
    %1359 = vmatpush1.msra.mxu0 %v343
    %1360 = vmatprep.mubr.f32.mxu0 %v1105
    %1361 = vmatmul.mubr.f32.gmra.mrb[0].mxu0 %v1295
    %v1362 = vpop.f32.mrb[0].mxu0
    %v1363 = vadd.f32 %v374, %v1362
    %v1364 = vpop.f32.mrb[0].mxu0
    %v1365 = vadd.f32 %v378, %v1364
    %1366 = vdwg.mxu0
    %1367 = vmatprep.subr.mxu0 %v222
    %1368 = vmatpush1.msra.mxu0 %v221
    %1369 = vmatprep.subr.mxu0 %v226
    %1370 = vmatpush1.msra.mxu0 %v225
    %1371 = vmatprep.subr.mxu0 %v230
    %1372 = vmatpush1.msra.mxu0 %v229
    %1373 = vmatprep.subr.mxu0 %v234
    %1374 = vmatpush1.msra.mxu0 %v233
    %1375 = vmatprep.subr.mxu0 %v238
    %1376 = vmatpush1.msra.mxu0 %v237
    %1377 = vmatprep.subr.mxu0 %v242
    %1378 = vmatpush1.msra.mxu0 %v241
    %1379 = vmatprep.subr.mxu0 %v246
    %1380 = vmatpush1.msra.mxu0 %v245
    %1381 = vmatprep.subr.mxu0 %v250
    %1382 = vmatpush1.msra.mxu0 %v249
    %1383 = vmatprep.subr.mxu0 %v254
    %1384 = vmatpush1.msra.mxu0 %v253
    %1385 = vmatprep.subr.mxu0 %v258
    %1386 = vmatpush1.msra.mxu0 %v257
    %1387 = vmatprep.subr.mxu0 %v262
    %1388 = vmatpush1.msra.mxu0 %v261
    %1389 = vmatprep.subr.mxu0 %v266
    %1390 = vmatpush1.msra.mxu0 %v265
    %1391 = vmatprep.subr.mxu0 %v270
    %1392 = vmatpush1.msra.mxu0 %v269
    %1393 = vmatprep.subr.mxu0 %v274
    %1394 = vmatpush1.msra.mxu0 %v273
    %1395 = vmatprep.subr.mxu0 %v278
    %1396 = vmatpush1.msra.mxu0 %v277
    %1397 = vmatprep.subr.mxu0 %v282
    %1398 = vmatpush1.msra.mxu0 %v281
    %1399 = vmatprep.subr.mxu0 %v286
    %1400 = vmatpush1.msra.mxu0 %v285
    %1401 = vmatprep.subr.mxu0 %v290
    %1402 = vmatpush1.msra.mxu0 %v289
    %1403 = vmatprep.subr.mxu0 %v294
    %1404 = vmatpush1.msra.mxu0 %v293
    %1405 = vmatprep.subr.mxu0 %v298
    %1406 = vmatpush1.msra.mxu0 %v297
    %1407 = vmatprep.subr.mxu0 %v302
    %1408 = vmatpush1.msra.mxu0 %v301
    %1409 = vmatprep.subr.mxu0 %v306
    %1410 = vmatpush1.msra.mxu0 %v305
    %1411 = vmatprep.subr.mxu0 %v310
    %1412 = vmatpush1.msra.mxu0 %v309
    %1413 = vmatprep.subr.mxu0 %v314
    %1414 = vmatpush1.msra.mxu0 %v313
    %1415 = vmatprep.subr.mxu0 %v318
    %1416 = vmatpush1.msra.mxu0 %v317
    %1417 = vmatprep.subr.mxu0 %v322
    %1418 = vmatpush1.msra.mxu0 %v321
    %1419 = vmatprep.subr.mxu0 %v326
    %1420 = vmatpush1.msra.mxu0 %v325
    %1421 = vmatprep.subr.mxu0 %v330
    %1422 = vmatpush1.msra.mxu0 %v329
    %1423 = vmatprep.subr.mxu0 %v334
    %1424 = vmatpush1.msra.mxu0 %v333
    %1425 = vmatprep.subr.mxu0 %v338
    %1426 = vmatpush1.msra.mxu0 %v337
    %1427 = vmatprep.subr.mxu0 %v342
    %1428 = vmatpush1.msra.mxu0 %v341
    %1429 = vmatprep.subr.mxu0 %v346
    %1430 = vmatpush1.msra.mxu0 %v345
    %1431 = vmatprep.mubr.f32.mxu0 %v1105
    %1432 = vmatmul.mubr.f32.gmra.mrb[0].mxu0 %v1295
    %v1433 = vpop.f32.mrb[0].mxu0
    %v1434 = vadd.f32 %v382, %v1433
    %v1435 = vpop.f32.mrb[0].mxu0
    %v1436 = vadd.f32 %v386, %v1435
    %1437 = vdwg.mxu0
    %v1438 = vxor.u32 %v1363, 2147483648
    %v1439 = vmul.f32 %v1438, 1.442695
    %v1440 = vpow.pop %v1439
    %v1441 = vadd.f32 %v1440, 1.0
    %v1442 = vrcp.pop %v1441
    %v1443 = vmul.f32 1.0, %v1442
    %v1444 = vxor.u32 %v1365, 2147483648
    %v1445 = vmul.f32 %v1444, 1.442695
    %v1446 = vpow.pop %v1445
    %v1447 = vadd.f32 %v1446, 1.0
    %v1448 = vrcp.pop %v1447
    %v1449 = vmul.f32 1.0, %v1448
    %v1450 = vtanh.pop %v1434
    %v1451 = vxor.u32 %v1436, 2147483648
    %v1452 = vmul.f32 %v1451, 1.442695
    %v1453 = vpow.pop %v1452
    %v1454 = vadd.f32 %v1453, 1.0
    %v1455 = vrcp.pop %v1454
    %v1456 = vmul.f32 1.0, %v1455
    %v1457 = vmul.f32 %v1449, %v1103
    %v1458 = vmul.f32 %v1443, %v1450
    %v1459 = vadd.f32 %v1457, %v1458
    %v1460 = vtanh.pop %v1459
    %v1461 = vmul.f32 %v1456, %v1460
    %s1462 = sld [smem:[#allocation3 + $0x180]]
    %s1463 = scalar_lea.vmem [#allocation6], %s1462
    %v1464 = vld [vmem:[%s1463] sm:$0x1]
    %s1465 = sld [smem:[#allocation3 + $0x181]]
    %s1466 = scalar_lea.vmem [#allocation6], %s1465
    %v1467 = vld [vmem:[%s1466] sm:$0x1]
    %s1468 = sld [smem:[#allocation3 + $0x182]]
    %s1469 = scalar_lea.vmem [#allocation6], %s1468
    %v1470 = vld [vmem:[%s1469] sm:$0x1]
    %s1471 = sld [smem:[#allocation3 + $0x183]]
    %s1472 = scalar_lea.vmem [#allocation6], %s1471
    %v1473 = vld [vmem:[%s1472] sm:$0x1]
    %v1475 = vrot.slane %v1467, 7
    %v1478 = vrot.slane %v1470, 6
    %v1481 = vrot.slane %v1473, 5
    %v1483 = vsel %vm412, %v1464, %v1475
    %v1484 = vsel %vm414, %v1483, %v1478
    %v1485 = vsel %vm416, %v1484, %v1481
    %1486 = vmatprep.subr.mxu0 %v92
    %1487 = vmatpush1.msra.mxu0 %v91
    %1488 = vmatprep.subr.mxu0 %v96
    %1489 = vmatpush1.msra.mxu0 %v95
    %1490 = vmatprep.subr.mxu0 %v100
    %1491 = vmatpush1.msra.mxu0 %v99
    %1492 = vmatprep.subr.mxu0 %v104
    %1493 = vmatpush1.msra.mxu0 %v103
    %1494 = vmatprep.subr.mxu0 %v108
    %1495 = vmatpush1.msra.mxu0 %v107
    %1496 = vmatprep.subr.mxu0 %v112
    %1497 = vmatpush1.msra.mxu0 %v111
    %1498 = vmatprep.subr.mxu0 %v116
    %1499 = vmatpush1.msra.mxu0 %v115
    %1500 = vmatprep.subr.mxu0 %v120
    %1501 = vmatpush1.msra.mxu0 %v119
    %1502 = vmatprep.subr.mxu0 %v124
    %1503 = vmatpush1.msra.mxu0 %v123
    %1504 = vmatprep.subr.mxu0 %v128
    %1505 = vmatpush1.msra.mxu0 %v127
    %1506 = vmatprep.subr.mxu0 %v132
    %1507 = vmatpush1.msra.mxu0 %v131
    %1508 = vmatprep.subr.mxu0 %v136
    %1509 = vmatpush1.msra.mxu0 %v135
    %1510 = vmatprep.subr.mxu0 %v140
    %1511 = vmatpush1.msra.mxu0 %v139
    %1512 = vmatprep.subr.mxu0 %v144
    %1513 = vmatpush1.msra.mxu0 %v143
    %1514 = vmatprep.subr.mxu0 %v148
    %1515 = vmatpush1.msra.mxu0 %v147
    %1516 = vmatprep.subr.mxu0 %v152
    %1517 = vmatpush1.msra.mxu0 %v151
    %1518 = vmatprep.subr.mxu0 %v156
    %1519 = vmatpush1.msra.mxu0 %v155
    %1520 = vmatprep.subr.mxu0 %v160
    %1521 = vmatpush1.msra.mxu0 %v159
    %1522 = vmatprep.subr.mxu0 %v164
    %1523 = vmatpush1.msra.mxu0 %v163
    %1524 = vmatprep.subr.mxu0 %v168
    %1525 = vmatpush1.msra.mxu0 %v167
    %1526 = vmatprep.subr.mxu0 %v172
    %1527 = vmatpush1.msra.mxu0 %v171
    %1528 = vmatprep.subr.mxu0 %v176
    %1529 = vmatpush1.msra.mxu0 %v175
    %1530 = vmatprep.subr.mxu0 %v180
    %1531 = vmatpush1.msra.mxu0 %v179
    %1532 = vmatprep.subr.mxu0 %v184
    %1533 = vmatpush1.msra.mxu0 %v183
    %1534 = vmatprep.subr.mxu0 %v188
    %1535 = vmatpush1.msra.mxu0 %v187
    %1536 = vmatprep.subr.mxu0 %v192
    %1537 = vmatpush1.msra.mxu0 %v191
    %1538 = vmatprep.subr.mxu0 %v196
    %1539 = vmatpush1.msra.mxu0 %v195
    %1540 = vmatprep.subr.mxu0 %v200
    %1541 = vmatpush1.msra.mxu0 %v199
    %1542 = vmatprep.subr.mxu0 %v204
    %1543 = vmatpush1.msra.mxu0 %v203
    %1544 = vmatprep.subr.mxu0 %v208
    %1545 = vmatpush1.msra.mxu0 %v207
    %1546 = vmatprep.subr.mxu0 %v212
    %1547 = vmatpush1.msra.mxu0 %v211
    %1548 = vmatprep.subr.mxu0 %v216
    %1549 = vmatpush1.msra.mxu0 %v215
    %1550 = vmatprep.mubr.f32.mxu0 %v1295
    %1551 = vmatmul.mubr.f32.gmra.mrb[0].mxu0 %v1485
    %v1552 = vpop.f32.mrb[0].mxu0
    %v1553 = vadd.f32 %v352, %v1552
    %v1554 = vpop.f32.mrb[0].mxu0
    %v1555 = vadd.f32 %v356, %v1554
    %1556 = vdwg.mxu0
    %1557 = vmatprep.subr.mxu0 %v94
    %1558 = vmatpush1.msra.mxu0 %v93
    %1559 = vmatprep.subr.mxu0 %v98
    %1560 = vmatpush1.msra.mxu0 %v97
    %1561 = vmatprep.subr.mxu0 %v102
    %1562 = vmatpush1.msra.mxu0 %v101
    %1563 = vmatprep.subr.mxu0 %v106
    %1564 = vmatpush1.msra.mxu0 %v105
    %1565 = vmatprep.subr.mxu0 %v110
    %1566 = vmatpush1.msra.mxu0 %v109
    %1567 = vmatprep.subr.mxu0 %v114
    %1568 = vmatpush1.msra.mxu0 %v113
    %1569 = vmatprep.subr.mxu0 %v118
    %1570 = vmatpush1.msra.mxu0 %v117
    %1571 = vmatprep.subr.mxu0 %v122
    %1572 = vmatpush1.msra.mxu0 %v121
    %1573 = vmatprep.subr.mxu0 %v126
    %1574 = vmatpush1.msra.mxu0 %v125
    %1575 = vmatprep.subr.mxu0 %v130
    %1576 = vmatpush1.msra.mxu0 %v129
    %1577 = vmatprep.subr.mxu0 %v134
    %1578 = vmatpush1.msra.mxu0 %v133
    %1579 = vmatprep.subr.mxu0 %v138
    %1580 = vmatpush1.msra.mxu0 %v137
    %1581 = vmatprep.subr.mxu0 %v142
    %1582 = vmatpush1.msra.mxu0 %v141
    %1583 = vmatprep.subr.mxu0 %v146
    %1584 = vmatpush1.msra.mxu0 %v145
    %1585 = vmatprep.subr.mxu0 %v150
    %1586 = vmatpush1.msra.mxu0 %v149
    %1587 = vmatprep.subr.mxu0 %v154
    %1588 = vmatpush1.msra.mxu0 %v153
    %1589 = vmatprep.subr.mxu0 %v158
    %1590 = vmatpush1.msra.mxu0 %v157
    %1591 = vmatprep.subr.mxu0 %v162
    %1592 = vmatpush1.msra.mxu0 %v161
    %1593 = vmatprep.subr.mxu0 %v166
    %1594 = vmatpush1.msra.mxu0 %v165
    %1595 = vmatprep.subr.mxu0 %v170
    %1596 = vmatpush1.msra.mxu0 %v169
    %1597 = vmatprep.subr.mxu0 %v174
    %1598 = vmatpush1.msra.mxu0 %v173
    %1599 = vmatprep.subr.mxu0 %v178
    %1600 = vmatpush1.msra.mxu0 %v177
    %1601 = vmatprep.subr.mxu0 %v182
    %1602 = vmatpush1.msra.mxu0 %v181
    %1603 = vmatprep.subr.mxu0 %v186
    %1604 = vmatpush1.msra.mxu0 %v185
    %1605 = vmatprep.subr.mxu0 %v190
    %1606 = vmatpush1.msra.mxu0 %v189
    %1607 = vmatprep.subr.mxu0 %v194
    %1608 = vmatpush1.msra.mxu0 %v193
    %1609 = vmatprep.subr.mxu0 %v198
    %1610 = vmatpush1.msra.mxu0 %v197
    %1611 = vmatprep.subr.mxu0 %v202
    %1612 = vmatpush1.msra.mxu0 %v201
    %1613 = vmatprep.subr.mxu0 %v206
    %1614 = vmatpush1.msra.mxu0 %v205
    %1615 = vmatprep.subr.mxu0 %v210
    %1616 = vmatpush1.msra.mxu0 %v209
    %1617 = vmatprep.subr.mxu0 %v214
    %1618 = vmatpush1.msra.mxu0 %v213
    %1619 = vmatprep.subr.mxu0 %v218
    %1620 = vmatpush1.msra.mxu0 %v217
    %1621 = vmatprep.mubr.f32.mxu0 %v1295
    %1622 = vmatmul.mubr.f32.gmra.mrb[0].mxu0 %v1485
    %v1623 = vpop.f32.mrb[0].mxu0
    %v1624 = vadd.f32 %v360, %v1623
    %v1625 = vpop.f32.mrb[0].mxu0
    %v1626 = vadd.f32 %v364, %v1625
    %1627 = vdwg.mxu0
    %v1628 = vxor.u32 %v1553, 2147483648
    %v1629 = vmul.f32 %v1628, 1.442695
    %v1630 = vpow.pop %v1629
    %v1631 = vadd.f32 %v1630, 1.0
    %v1632 = vrcp.pop %v1631
    %v1633 = vmul.f32 1.0, %v1632
    %v1634 = vxor.u32 %v1555, 2147483648
    %v1635 = vmul.f32 %v1634, 1.442695
    %v1636 = vpow.pop %v1635
    %v1637 = vadd.f32 %v1636, 1.0
    %v1638 = vrcp.pop %v1637
    %v1639 = vmul.f32 1.0, %v1638
    %v1640 = vtanh.pop %v1624
    %v1641 = vxor.u32 %v1626, 2147483648
    %v1642 = vmul.f32 %v1641, 1.442695
    %v1643 = vpow.pop %v1642
    %v1644 = vadd.f32 %v1643, 1.0
    %v1645 = vrcp.pop %v1644
    %v1646 = vmul.f32 1.0, %v1645
    %v1647 = vmul.f32 %v1639, %v1293
    %v1648 = vmul.f32 %v1633, %v1640
    %v1649 = vadd.f32 %v1647, %v1648
    %v1650 = vtanh.pop %v1649
    %v1651 = vmul.f32 %v1646, %v1650
    %1652 = vmatprep.subr.mxu0 %v220
    %1653 = vmatpush1.msra.mxu0 %v219
    %1654 = vmatprep.subr.mxu0 %v224
    %1655 = vmatpush1.msra.mxu0 %v223
    %1656 = vmatprep.subr.mxu0 %v228
    %1657 = vmatpush1.msra.mxu0 %v227
    %1658 = vmatprep.subr.mxu0 %v232
    %1659 = vmatpush1.msra.mxu0 %v231
    %1660 = vmatprep.subr.mxu0 %v236
    %1661 = vmatpush1.msra.mxu0 %v235
    %1662 = vmatprep.subr.mxu0 %v240
    %1663 = vmatpush1.msra.mxu0 %v239
    %1664 = vmatprep.subr.mxu0 %v244
    %1665 = vmatpush1.msra.mxu0 %v243
    %1666 = vmatprep.subr.mxu0 %v248
    %1667 = vmatpush1.msra.mxu0 %v247
    %1668 = vmatprep.subr.mxu0 %v252
    %1669 = vmatpush1.msra.mxu0 %v251
    %1670 = vmatprep.subr.mxu0 %v256
    %1671 = vmatpush1.msra.mxu0 %v255
    %1672 = vmatprep.subr.mxu0 %v260
    %1673 = vmatpush1.msra.mxu0 %v259
    %1674 = vmatprep.subr.mxu0 %v264
    %1675 = vmatpush1.msra.mxu0 %v263
    %1676 = vmatprep.subr.mxu0 %v268
    %1677 = vmatpush1.msra.mxu0 %v267
    %1678 = vmatprep.subr.mxu0 %v272
    %1679 = vmatpush1.msra.mxu0 %v271
    %1680 = vmatprep.subr.mxu0 %v276
    %1681 = vmatpush1.msra.mxu0 %v275
    %1682 = vmatprep.subr.mxu0 %v280
    %1683 = vmatpush1.msra.mxu0 %v279
    %1684 = vmatprep.subr.mxu0 %v284
    %1685 = vmatpush1.msra.mxu0 %v283
    %1686 = vmatprep.subr.mxu0 %v288
    %1687 = vmatpush1.msra.mxu0 %v287
    %1688 = vmatprep.subr.mxu0 %v292
    %1689 = vmatpush1.msra.mxu0 %v291
    %1690 = vmatprep.subr.mxu0 %v296
    %1691 = vmatpush1.msra.mxu0 %v295
    %1692 = vmatprep.subr.mxu0 %v300
    %1693 = vmatpush1.msra.mxu0 %v299
    %1694 = vmatprep.subr.mxu0 %v304
    %1695 = vmatpush1.msra.mxu0 %v303
    %1696 = vmatprep.subr.mxu0 %v308
    %1697 = vmatpush1.msra.mxu0 %v307
    %1698 = vmatprep.subr.mxu0 %v312
    %1699 = vmatpush1.msra.mxu0 %v311
    %1700 = vmatprep.subr.mxu0 %v316
    %1701 = vmatpush1.msra.mxu0 %v315
    %1702 = vmatprep.subr.mxu0 %v320
    %1703 = vmatpush1.msra.mxu0 %v319
    %1704 = vmatprep.subr.mxu0 %v324
    %1705 = vmatpush1.msra.mxu0 %v323
    %1706 = vmatprep.subr.mxu0 %v328
    %1707 = vmatpush1.msra.mxu0 %v327
    %1708 = vmatprep.subr.mxu0 %v332
    %1709 = vmatpush1.msra.mxu0 %v331
    %1710 = vmatprep.subr.mxu0 %v336
    %1711 = vmatpush1.msra.mxu0 %v335
    %1712 = vmatprep.subr.mxu0 %v340
    %1713 = vmatpush1.msra.mxu0 %v339
    %1714 = vmatprep.subr.mxu0 %v344
    %1715 = vmatpush1.msra.mxu0 %v343
    %1716 = vmatprep.mubr.f32.mxu0 %v1461
    %1717 = vmatmul.mubr.f32.gmra.mrb[0].mxu0 %v1651
    %v1718 = vpop.f32.mrb[0].mxu0
    %v1719 = vadd.f32 %v374, %v1718
    %v1720 = vpop.f32.mrb[0].mxu0
    %v1721 = vadd.f32 %v378, %v1720
    %1722 = vdwg.mxu0
    %1723 = vmatprep.subr.mxu0 %v222
    %1724 = vmatpush1.msra.mxu0 %v221
    %1725 = vmatprep.subr.mxu0 %v226
    %1726 = vmatpush1.msra.mxu0 %v225
    %1727 = vmatprep.subr.mxu0 %v230
    %1728 = vmatpush1.msra.mxu0 %v229
    %1729 = vmatprep.subr.mxu0 %v234
    %1730 = vmatpush1.msra.mxu0 %v233
    %1731 = vmatprep.subr.mxu0 %v238
    %1732 = vmatpush1.msra.mxu0 %v237
    %1733 = vmatprep.subr.mxu0 %v242
    %1734 = vmatpush1.msra.mxu0 %v241
    %1735 = vmatprep.subr.mxu0 %v246
    %1736 = vmatpush1.msra.mxu0 %v245
    %1737 = vmatprep.subr.mxu0 %v250
    %1738 = vmatpush1.msra.mxu0 %v249
    %1739 = vmatprep.subr.mxu0 %v254
    %1740 = vmatpush1.msra.mxu0 %v253
    %1741 = vmatprep.subr.mxu0 %v258
    %1742 = vmatpush1.msra.mxu0 %v257
    %1743 = vmatprep.subr.mxu0 %v262
    %1744 = vmatpush1.msra.mxu0 %v261
    %1745 = vmatprep.subr.mxu0 %v266
    %1746 = vmatpush1.msra.mxu0 %v265
    %1747 = vmatprep.subr.mxu0 %v270
    %1748 = vmatpush1.msra.mxu0 %v269
    %1749 = vmatprep.subr.mxu0 %v274
    %1750 = vmatpush1.msra.mxu0 %v273
    %1751 = vmatprep.subr.mxu0 %v278
    %1752 = vmatpush1.msra.mxu0 %v277
    %1753 = vmatprep.subr.mxu0 %v282
    %1754 = vmatpush1.msra.mxu0 %v281
    %1755 = vmatprep.subr.mxu0 %v286
    %1756 = vmatpush1.msra.mxu0 %v285
    %1757 = vmatprep.subr.mxu0 %v290
    %1758 = vmatpush1.msra.mxu0 %v289
    %1759 = vmatprep.subr.mxu0 %v294
    %1760 = vmatpush1.msra.mxu0 %v293
    %1761 = vmatprep.subr.mxu0 %v298
    %1762 = vmatpush1.msra.mxu0 %v297
    %1763 = vmatprep.subr.mxu0 %v302
    %1764 = vmatpush1.msra.mxu0 %v301
    %1765 = vmatprep.subr.mxu0 %v306
    %1766 = vmatpush1.msra.mxu0 %v305
    %1767 = vmatprep.subr.mxu0 %v310
    %1768 = vmatpush1.msra.mxu0 %v309
    %1769 = vmatprep.subr.mxu0 %v314
    %1770 = vmatpush1.msra.mxu0 %v313
    %1771 = vmatprep.subr.mxu0 %v318
    %1772 = vmatpush1.msra.mxu0 %v317
    %1773 = vmatprep.subr.mxu0 %v322
    %1774 = vmatpush1.msra.mxu0 %v321
    %1775 = vmatprep.subr.mxu0 %v326
    %1776 = vmatpush1.msra.mxu0 %v325
    %1777 = vmatprep.subr.mxu0 %v330
    %1778 = vmatpush1.msra.mxu0 %v329
    %1779 = vmatprep.subr.mxu0 %v334
    %1780 = vmatpush1.msra.mxu0 %v333
    %1781 = vmatprep.subr.mxu0 %v338
    %1782 = vmatpush1.msra.mxu0 %v337
    %1783 = vmatprep.subr.mxu0 %v342
    %1784 = vmatpush1.msra.mxu0 %v341
    %1785 = vmatprep.subr.mxu0 %v346
    %1786 = vmatpush1.msra.mxu0 %v345
    %1787 = vmatprep.mubr.f32.mxu0 %v1461
    %1788 = vmatmul.mubr.f32.gmra.mrb[0].mxu0 %v1651
    %v1789 = vpop.f32.mrb[0].mxu0
    %v1790 = vadd.f32 %v382, %v1789
    %v1791 = vpop.f32.mrb[0].mxu0
    %v1792 = vadd.f32 %v386, %v1791
    %1793 = vdwg.mxu0
    %v1794 = vxor.u32 %v1719, 2147483648
    %v1795 = vmul.f32 %v1794, 1.442695
    %v1796 = vpow.pop %v1795
    %v1797 = vadd.f32 %v1796, 1.0
    %v1798 = vrcp.pop %v1797
    %v1799 = vmul.f32 1.0, %v1798
    %v1800 = vxor.u32 %v1721, 2147483648
    %v1801 = vmul.f32 %v1800, 1.442695
    %v1802 = vpow.pop %v1801
    %v1803 = vadd.f32 %v1802, 1.0
    %v1804 = vrcp.pop %v1803
    %v1805 = vmul.f32 1.0, %v1804
    %v1806 = vtanh.pop %v1790
    %v1807 = vxor.u32 %v1792, 2147483648
    %v1808 = vmul.f32 %v1807, 1.442695
    %v1809 = vpow.pop %v1808
    %v1810 = vadd.f32 %v1809, 1.0
    %v1811 = vrcp.pop %v1810
    %v1812 = vmul.f32 1.0, %v1811
    %v1813 = vmul.f32 %v1805, %v1459
    %v1814 = vmul.f32 %v1799, %v1806
    %v1815 = vadd.f32 %v1813, %v1814
    %v1816 = vtanh.pop %v1815
    %v1817 = vmul.f32 %v1812, %v1816
    %s1818 = sld [smem:[#allocation3 + $0x200]]
    %s1819 = scalar_lea.vmem [#allocation6], %s1818
    %v1820 = vld [vmem:[%s1819] sm:$0x1]
    %s1821 = sld [smem:[#allocation3 + $0x201]]
    %s1822 = scalar_lea.vmem [#allocation6], %s1821
    %v1823 = vld [vmem:[%s1822] sm:$0x1]
    %s1824 = sld [smem:[#allocation3 + $0x202]]
    %s1825 = scalar_lea.vmem [#allocation6], %s1824
    %v1826 = vld [vmem:[%s1825] sm:$0x1]
    %s1827 = sld [smem:[#allocation3 + $0x203]]
    %s1828 = scalar_lea.vmem [#allocation6], %s1827
    %v1829 = vld [vmem:[%s1828] sm:$0x1]
    %v1831 = vrot.slane %v1823, 7
    %v1834 = vrot.slane %v1826, 6
    %v1837 = vrot.slane %v1829, 5
    %v1839 = vsel %vm412, %v1820, %v1831
    %v1840 = vsel %vm414, %v1839, %v1834
    %v1841 = vsel %vm416, %v1840, %v1837
    %1842 = vmatprep.subr.mxu0 %v92
    %1843 = vmatpush1.msra.mxu0 %v91
    %1844 = vmatprep.subr.mxu0 %v96
    %1845 = vmatpush1.msra.mxu0 %v95
    %1846 = vmatprep.subr.mxu0 %v100
    %1847 = vmatpush1.msra.mxu0 %v99
    %1848 = vmatprep.subr.mxu0 %v104
    %1849 = vmatpush1.msra.mxu0 %v103
    %1850 = vmatprep.subr.mxu0 %v108
    %1851 = vmatpush1.msra.mxu0 %v107
    %1852 = vmatprep.subr.mxu0 %v112
    %1853 = vmatpush1.msra.mxu0 %v111
    %1854 = vmatprep.subr.mxu0 %v116
    %1855 = vmatpush1.msra.mxu0 %v115
    %1856 = vmatprep.subr.mxu0 %v120
    %1857 = vmatpush1.msra.mxu0 %v119
    %1858 = vmatprep.subr.mxu0 %v124
    %1859 = vmatpush1.msra.mxu0 %v123
    %1860 = vmatprep.subr.mxu0 %v128
    %1861 = vmatpush1.msra.mxu0 %v127
    %1862 = vmatprep.subr.mxu0 %v132
    %1863 = vmatpush1.msra.mxu0 %v131
    %1864 = vmatprep.subr.mxu0 %v136
    %1865 = vmatpush1.msra.mxu0 %v135
    %1866 = vmatprep.subr.mxu0 %v140
    %1867 = vmatpush1.msra.mxu0 %v139
    %1868 = vmatprep.subr.mxu0 %v144
    %1869 = vmatpush1.msra.mxu0 %v143
    %1870 = vmatprep.subr.mxu0 %v148
    %1871 = vmatpush1.msra.mxu0 %v147
    %1872 = vmatprep.subr.mxu0 %v152
    %1873 = vmatpush1.msra.mxu0 %v151
    %1874 = vmatprep.subr.mxu0 %v156
    %1875 = vmatpush1.msra.mxu0 %v155
    %1876 = vmatprep.subr.mxu0 %v160
    %1877 = vmatpush1.msra.mxu0 %v159
    %1878 = vmatprep.subr.mxu0 %v164
    %1879 = vmatpush1.msra.mxu0 %v163
    %1880 = vmatprep.subr.mxu0 %v168
    %1881 = vmatpush1.msra.mxu0 %v167
    %1882 = vmatprep.subr.mxu0 %v172
    %1883 = vmatpush1.msra.mxu0 %v171
    %1884 = vmatprep.subr.mxu0 %v176
    %1885 = vmatpush1.msra.mxu0 %v175
    %1886 = vmatprep.subr.mxu0 %v180
    %1887 = vmatpush1.msra.mxu0 %v179
    %1888 = vmatprep.subr.mxu0 %v184
    %1889 = vmatpush1.msra.mxu0 %v183
    %1890 = vmatprep.subr.mxu0 %v188
    %1891 = vmatpush1.msra.mxu0 %v187
    %1892 = vmatprep.subr.mxu0 %v192
    %1893 = vmatpush1.msra.mxu0 %v191
    %1894 = vmatprep.subr.mxu0 %v196
    %1895 = vmatpush1.msra.mxu0 %v195
    %1896 = vmatprep.subr.mxu0 %v200
    %1897 = vmatpush1.msra.mxu0 %v199
    %1898 = vmatprep.subr.mxu0 %v204
    %1899 = vmatpush1.msra.mxu0 %v203
    %1900 = vmatprep.subr.mxu0 %v208
    %1901 = vmatpush1.msra.mxu0 %v207
    %1902 = vmatprep.subr.mxu0 %v212
    %1903 = vmatpush1.msra.mxu0 %v211
    %1904 = vmatprep.subr.mxu0 %v216
    %1905 = vmatpush1.msra.mxu0 %v215
    %1906 = vmatprep.mubr.f32.mxu0 %v1651
    %1907 = vmatmul.mubr.f32.gmra.mrb[0].mxu0 %v1841
    %v1908 = vpop.f32.mrb[0].mxu0
    %v1909 = vadd.f32 %v352, %v1908
    %v1910 = vpop.f32.mrb[0].mxu0
    %v1911 = vadd.f32 %v356, %v1910
    %1912 = vdwg.mxu0
    %1913 = vmatprep.subr.mxu0 %v94
    %1914 = vmatpush1.msra.mxu0 %v93
    %1915 = vmatprep.subr.mxu0 %v98
    %1916 = vmatpush1.msra.mxu0 %v97
    %1917 = vmatprep.subr.mxu0 %v102
    %1918 = vmatpush1.msra.mxu0 %v101
    %1919 = vmatprep.subr.mxu0 %v106
    %1920 = vmatpush1.msra.mxu0 %v105
    %1921 = vmatprep.subr.mxu0 %v110
    %1922 = vmatpush1.msra.mxu0 %v109
    %1923 = vmatprep.subr.mxu0 %v114
    %1924 = vmatpush1.msra.mxu0 %v113
    %1925 = vmatprep.subr.mxu0 %v118
    %1926 = vmatpush1.msra.mxu0 %v117
    %1927 = vmatprep.subr.mxu0 %v122
    %1928 = vmatpush1.msra.mxu0 %v121
    %1929 = vmatprep.subr.mxu0 %v126
    %1930 = vmatpush1.msra.mxu0 %v125
    %1931 = vmatprep.subr.mxu0 %v130
    %1932 = vmatpush1.msra.mxu0 %v129
    %1933 = vmatprep.subr.mxu0 %v134
    %1934 = vmatpush1.msra.mxu0 %v133
    %1935 = vmatprep.subr.mxu0 %v138
    %1936 = vmatpush1.msra.mxu0 %v137
    %1937 = vmatprep.subr.mxu0 %v142
    %1938 = vmatpush1.msra.mxu0 %v141
    %1939 = vmatprep.subr.mxu0 %v146
    %1940 = vmatpush1.msra.mxu0 %v145
    %1941 = vmatprep.subr.mxu0 %v150
    %1942 = vmatpush1.msra.mxu0 %v149
    %1943 = vmatprep.subr.mxu0 %v154
    %1944 = vmatpush1.msra.mxu0 %v153
    %1945 = vmatprep.subr.mxu0 %v158
    %1946 = vmatpush1.msra.mxu0 %v157
    %1947 = vmatprep.subr.mxu0 %v162
    %1948 = vmatpush1.msra.mxu0 %v161
    %1949 = vmatprep.subr.mxu0 %v166
    %1950 = vmatpush1.msra.mxu0 %v165
    %1951 = vmatprep.subr.mxu0 %v170
    %1952 = vmatpush1.msra.mxu0 %v169
    %1953 = vmatprep.subr.mxu0 %v174
    %1954 = vmatpush1.msra.mxu0 %v173
    %1955 = vmatprep.subr.mxu0 %v178
    %1956 = vmatpush1.msra.mxu0 %v177
    %1957 = vmatprep.subr.mxu0 %v182
    %1958 = vmatpush1.msra.mxu0 %v181
    %1959 = vmatprep.subr.mxu0 %v186
    %1960 = vmatpush1.msra.mxu0 %v185
    %1961 = vmatprep.subr.mxu0 %v190
    %1962 = vmatpush1.msra.mxu0 %v189
    %1963 = vmatprep.subr.mxu0 %v194
    %1964 = vmatpush1.msra.mxu0 %v193
    %1965 = vmatprep.subr.mxu0 %v198
    %1966 = vmatpush1.msra.mxu0 %v197
    %1967 = vmatprep.subr.mxu0 %v202
    %1968 = vmatpush1.msra.mxu0 %v201
    %1969 = vmatprep.subr.mxu0 %v206
    %1970 = vmatpush1.msra.mxu0 %v205
    %1971 = vmatprep.subr.mxu0 %v210
    %1972 = vmatpush1.msra.mxu0 %v209
    %1973 = vmatprep.subr.mxu0 %v214
    %1974 = vmatpush1.msra.mxu0 %v213
    %1975 = vmatprep.subr.mxu0 %v218
    %1976 = vmatpush1.msra.mxu0 %v217
    %1977 = vmatprep.mubr.f32.mxu0 %v1651
    %1978 = vmatmul.mubr.f32.gmra.mrb[0].mxu0 %v1841
    %v1979 = vpop.f32.mrb[0].mxu0
    %v1980 = vadd.f32 %v360, %v1979
    %v1981 = vpop.f32.mrb[0].mxu0
    %v1982 = vadd.f32 %v364, %v1981
    %1983 = vdwg.mxu0
    %v1984 = vxor.u32 %v1909, 2147483648
    %v1985 = vmul.f32 %v1984, 1.442695
    %v1986 = vpow.pop %v1985
    %v1987 = vadd.f32 %v1986, 1.0
    %v1988 = vrcp.pop %v1987
    %v1989 = vmul.f32 1.0, %v1988
    %v1990 = vxor.u32 %v1911, 2147483648
    %v1991 = vmul.f32 %v1990, 1.442695
    %v1992 = vpow.pop %v1991
    %v1993 = vadd.f32 %v1992, 1.0
    %v1994 = vrcp.pop %v1993
    %v1995 = vmul.f32 1.0, %v1994
    %v1996 = vtanh.pop %v1980
    %v1997 = vxor.u32 %v1982, 2147483648
    %v1998 = vmul.f32 %v1997, 1.442695
    %v1999 = vpow.pop %v1998
    %v2000 = vadd.f32 %v1999, 1.0
    %v2001 = vrcp.pop %v2000
    %v2002 = vmul.f32 1.0, %v2001
    %v2003 = vmul.f32 %v1995, %v1649
    %v2004 = vmul.f32 %v1989, %v1996
    %v2005 = vadd.f32 %v2003, %v2004
    %v2006 = vtanh.pop %v2005
    %v2007 = vmul.f32 %v2002, %v2006
    %2008 = vmatprep.subr.mxu0 %v220
    %2009 = vmatpush1.msra.mxu0 %v219
    %2010 = vmatprep.subr.mxu0 %v224
    %2011 = vmatpush1.msra.mxu0 %v223
    %2012 = vmatprep.subr.mxu0 %v228
    %2013 = vmatpush1.msra.mxu0 %v227
    %2014 = vmatprep.subr.mxu0 %v232
    %2015 = vmatpush1.msra.mxu0 %v231
    %2016 = vmatprep.subr.mxu0 %v236
    %2017 = vmatpush1.msra.mxu0 %v235
    %2018 = vmatprep.subr.mxu0 %v240
    %2019 = vmatpush1.msra.mxu0 %v239
    %2020 = vmatprep.subr.mxu0 %v244
    %2021 = vmatpush1.msra.mxu0 %v243
    %2022 = vmatprep.subr.mxu0 %v248
    %2023 = vmatpush1.msra.mxu0 %v247
    %2024 = vmatprep.subr.mxu0 %v252
    %2025 = vmatpush1.msra.mxu0 %v251
    %2026 = vmatprep.subr.mxu0 %v256
    %2027 = vmatpush1.msra.mxu0 %v255
    %2028 = vmatprep.subr.mxu0 %v260
    %2029 = vmatpush1.msra.mxu0 %v259
    %2030 = vmatprep.subr.mxu0 %v264
    %2031 = vmatpush1.msra.mxu0 %v263
    %2032 = vmatprep.subr.mxu0 %v268
    %2033 = vmatpush1.msra.mxu0 %v267
    %2034 = vmatprep.subr.mxu0 %v272
    %2035 = vmatpush1.msra.mxu0 %v271
    %2036 = vmatprep.subr.mxu0 %v276
    %2037 = vmatpush1.msra.mxu0 %v275
    %2038 = vmatprep.subr.mxu0 %v280
    %2039 = vmatpush1.msra.mxu0 %v279
    %2040 = vmatprep.subr.mxu0 %v284
    %2041 = vmatpush1.msra.mxu0 %v283
    %2042 = vmatprep.subr.mxu0 %v288
    %2043 = vmatpush1.msra.mxu0 %v287
    %2044 = vmatprep.subr.mxu0 %v292
    %2045 = vmatpush1.msra.mxu0 %v291
    %2046 = vmatprep.subr.mxu0 %v296
    %2047 = vmatpush1.msra.mxu0 %v295
    %2048 = vmatprep.subr.mxu0 %v300
    %2049 = vmatpush1.msra.mxu0 %v299
    %2050 = vmatprep.subr.mxu0 %v304
    %2051 = vmatpush1.msra.mxu0 %v303
    %2052 = vmatprep.subr.mxu0 %v308
    %2053 = vmatpush1.msra.mxu0 %v307
    %2054 = vmatprep.subr.mxu0 %v312
    %2055 = vmatpush1.msra.mxu0 %v311
    %2056 = vmatprep.subr.mxu0 %v316
    %2057 = vmatpush1.msra.mxu0 %v315
    %2058 = vmatprep.subr.mxu0 %v320
    %2059 = vmatpush1.msra.mxu0 %v319
    %2060 = vmatprep.subr.mxu0 %v324
    %2061 = vmatpush1.msra.mxu0 %v323
    %2062 = vmatprep.subr.mxu0 %v328
    %2063 = vmatpush1.msra.mxu0 %v327
    %2064 = vmatprep.subr.mxu0 %v332
    %2065 = vmatpush1.msra.mxu0 %v331
    %2066 = vmatprep.subr.mxu0 %v336
    %2067 = vmatpush1.msra.mxu0 %v335
    %2068 = vmatprep.subr.mxu0 %v340
    %2069 = vmatpush1.msra.mxu0 %v339
    %2070 = vmatprep.subr.mxu0 %v344
    %2071 = vmatpush1.msra.mxu0 %v343
    %2072 = vmatprep.mubr.f32.mxu0 %v1817
    %2073 = vmatmul.mubr.f32.gmra.mrb[0].mxu0 %v2007
    %v2074 = vpop.f32.mrb[0].mxu0
    %v2075 = vadd.f32 %v374, %v2074
    %v2076 = vpop.f32.mrb[0].mxu0
    %v2077 = vadd.f32 %v378, %v2076
    %2078 = vdwg.mxu0
    %2079 = vmatprep.subr.mxu0 %v222
    %2080 = vmatpush1.msra.mxu0 %v221
    %2081 = vmatprep.subr.mxu0 %v226
    %2082 = vmatpush1.msra.mxu0 %v225
    %2083 = vmatprep.subr.mxu0 %v230
    %2084 = vmatpush1.msra.mxu0 %v229
    %2085 = vmatprep.subr.mxu0 %v234
    %2086 = vmatpush1.msra.mxu0 %v233
    %2087 = vmatprep.subr.mxu0 %v238
    %2088 = vmatpush1.msra.mxu0 %v237
    %2089 = vmatprep.subr.mxu0 %v242
    %2090 = vmatpush1.msra.mxu0 %v241
    %2091 = vmatprep.subr.mxu0 %v246
    %2092 = vmatpush1.msra.mxu0 %v245
    %2093 = vmatprep.subr.mxu0 %v250
    %2094 = vmatpush1.msra.mxu0 %v249
    %2095 = vmatprep.subr.mxu0 %v254
    %2096 = vmatpush1.msra.mxu0 %v253
    %2097 = vmatprep.subr.mxu0 %v258
    %2098 = vmatpush1.msra.mxu0 %v257
    %2099 = vmatprep.subr.mxu0 %v262
    %2100 = vmatpush1.msra.mxu0 %v261
    %2101 = vmatprep.subr.mxu0 %v266
    %2102 = vmatpush1.msra.mxu0 %v265
    %2103 = vmatprep.subr.mxu0 %v270
    %2104 = vmatpush1.msra.mxu0 %v269
    %2105 = vmatprep.subr.mxu0 %v274
    %2106 = vmatpush1.msra.mxu0 %v273
    %2107 = vmatprep.subr.mxu0 %v278
    %2108 = vmatpush1.msra.mxu0 %v277
    %2109 = vmatprep.subr.mxu0 %v282
    %2110 = vmatpush1.msra.mxu0 %v281
    %2111 = vmatprep.subr.mxu0 %v286
    %2112 = vmatpush1.msra.mxu0 %v285
    %2113 = vmatprep.subr.mxu0 %v290
    %2114 = vmatpush1.msra.mxu0 %v289
    %2115 = vmatprep.subr.mxu0 %v294
    %2116 = vmatpush1.msra.mxu0 %v293
    %2117 = vmatprep.subr.mxu0 %v298
    %2118 = vmatpush1.msra.mxu0 %v297
    %2119 = vmatprep.subr.mxu0 %v302
    %2120 = vmatpush1.msra.mxu0 %v301
    %2121 = vmatprep.subr.mxu0 %v306
    %2122 = vmatpush1.msra.mxu0 %v305
    %2123 = vmatprep.subr.mxu0 %v310
    %2124 = vmatpush1.msra.mxu0 %v309
    %2125 = vmatprep.subr.mxu0 %v314
    %2126 = vmatpush1.msra.mxu0 %v313
    %2127 = vmatprep.subr.mxu0 %v318
    %2128 = vmatpush1.msra.mxu0 %v317
    %2129 = vmatprep.subr.mxu0 %v322
    %2130 = vmatpush1.msra.mxu0 %v321
    %2131 = vmatprep.subr.mxu0 %v326
    %2132 = vmatpush1.msra.mxu0 %v325
    %2133 = vmatprep.subr.mxu0 %v330
    %2134 = vmatpush1.msra.mxu0 %v329
    %2135 = vmatprep.subr.mxu0 %v334
    %2136 = vmatpush1.msra.mxu0 %v333
    %2137 = vmatprep.subr.mxu0 %v338
    %2138 = vmatpush1.msra.mxu0 %v337
    %2139 = vmatprep.subr.mxu0 %v342
    %2140 = vmatpush1.msra.mxu0 %v341
    %2141 = vmatprep.subr.mxu0 %v346
    %2142 = vmatpush1.msra.mxu0 %v345
    %2143 = vmatprep.mubr.f32.mxu0 %v1817
    %2144 = vmatmul.mubr.f32.gmra.mrb[0].mxu0 %v2007
    %v2145 = vpop.f32.mrb[0].mxu0
    %v2146 = vadd.f32 %v382, %v2145
    %v2147 = vpop.f32.mrb[0].mxu0
    %v2148 = vadd.f32 %v386, %v2147
    %2149 = vdwg.mxu0
    %v2150 = vxor.u32 %v2075, 2147483648
    %v2151 = vmul.f32 %v2150, 1.442695
    %v2152 = vpow.pop %v2151
    %v2153 = vadd.f32 %v2152, 1.0
    %v2154 = vrcp.pop %v2153
    %v2155 = vmul.f32 1.0, %v2154
    %v2156 = vxor.u32 %v2077, 2147483648
    %v2157 = vmul.f32 %v2156, 1.442695
    %v2158 = vpow.pop %v2157
    %v2159 = vadd.f32 %v2158, 1.0
    %v2160 = vrcp.pop %v2159
    %v2161 = vmul.f32 1.0, %v2160
    %v2162 = vtanh.pop %v2146
    %v2163 = vxor.u32 %v2148, 2147483648
    %v2164 = vmul.f32 %v2163, 1.442695
    %v2165 = vpow.pop %v2164
    %v2166 = vadd.f32 %v2165, 1.0
    %v2167 = vrcp.pop %v2166
    %v2168 = vmul.f32 1.0, %v2167
    %v2169 = vmul.f32 %v2161, %v1815
    %v2170 = vmul.f32 %v2155, %v2162
    %v2171 = vadd.f32 %v2169, %v2170
    %v2172 = vtanh.pop %v2171
    %v2173 = vmul.f32 %v2168, %v2172
    %s2174 = sld [smem:[#allocation3 + $0x280]]
    %s2175 = scalar_lea.vmem [#allocation6], %s2174
    %v2176 = vld [vmem:[%s2175] sm:$0x1]
    %s2177 = sld [smem:[#allocation3 + $0x281]]
    %s2178 = scalar_lea.vmem [#allocation6], %s2177
    %v2179 = vld [vmem:[%s2178] sm:$0x1]
    %s2180 = sld [smem:[#allocation3 + $0x282]]
    %s2181 = scalar_lea.vmem [#allocation6], %s2180
    %v2182 = vld [vmem:[%s2181] sm:$0x1]
    %s2183 = sld [smem:[#allocation3 + $0x283]]
    %s2184 = scalar_lea.vmem [#allocation6], %s2183
    %v2185 = vld [vmem:[%s2184] sm:$0x1]
    %v2187 = vrot.slane %v2179, 7
    %v2190 = vrot.slane %v2182, 6
    %v2193 = vrot.slane %v2185, 5
    %v2195 = vsel %vm412, %v2176, %v2187
    %v2196 = vsel %vm414, %v2195, %v2190
    %v2197 = vsel %vm416, %v2196, %v2193
    %2198 = vmatprep.subr.mxu0 %v92
    %2199 = vmatpush1.msra.mxu0 %v91
    %2200 = vmatprep.subr.mxu0 %v96
    %2201 = vmatpush1.msra.mxu0 %v95
    %2202 = vmatprep.subr.mxu0 %v100
    %2203 = vmatpush1.msra.mxu0 %v99
    %2204 = vmatprep.subr.mxu0 %v104
    %2205 = vmatpush1.msra.mxu0 %v103
    %2206 = vmatprep.subr.mxu0 %v108
    %2207 = vmatpush1.msra.mxu0 %v107
    %2208 = vmatprep.subr.mxu0 %v112
    %2209 = vmatpush1.msra.mxu0 %v111
    %2210 = vmatprep.subr.mxu0 %v116
    %2211 = vmatpush1.msra.mxu0 %v115
    %2212 = vmatprep.subr.mxu0 %v120
    %2213 = vmatpush1.msra.mxu0 %v119
    %2214 = vmatprep.subr.mxu0 %v124
    %2215 = vmatpush1.msra.mxu0 %v123
    %2216 = vmatprep.subr.mxu0 %v128
    %2217 = vmatpush1.msra.mxu0 %v127
    %2218 = vmatprep.subr.mxu0 %v132
    %2219 = vmatpush1.msra.mxu0 %v131
    %2220 = vmatprep.subr.mxu0 %v136
    %2221 = vmatpush1.msra.mxu0 %v135
    %2222 = vmatprep.subr.mxu0 %v140
    %2223 = vmatpush1.msra.mxu0 %v139
    %2224 = vmatprep.subr.mxu0 %v144
    %2225 = vmatpush1.msra.mxu0 %v143
    %2226 = vmatprep.subr.mxu0 %v148
    %2227 = vmatpush1.msra.mxu0 %v147
    %2228 = vmatprep.subr.mxu0 %v152
    %2229 = vmatpush1.msra.mxu0 %v151
    %2230 = vmatprep.subr.mxu0 %v156
    %2231 = vmatpush1.msra.mxu0 %v155
    %2232 = vmatprep.subr.mxu0 %v160
    %2233 = vmatpush1.msra.mxu0 %v159
    %2234 = vmatprep.subr.mxu0 %v164
    %2235 = vmatpush1.msra.mxu0 %v163
    %2236 = vmatprep.subr.mxu0 %v168
    %2237 = vmatpush1.msra.mxu0 %v167
    %2238 = vmatprep.subr.mxu0 %v172
    %2239 = vmatpush1.msra.mxu0 %v171
    %2240 = vmatprep.subr.mxu0 %v176
    %2241 = vmatpush1.msra.mxu0 %v175
    %2242 = vmatprep.subr.mxu0 %v180
    %2243 = vmatpush1.msra.mxu0 %v179
    %2244 = vmatprep.subr.mxu0 %v184
    %2245 = vmatpush1.msra.mxu0 %v183
    %2246 = vmatprep.subr.mxu0 %v188
    %2247 = vmatpush1.msra.mxu0 %v187
    %2248 = vmatprep.subr.mxu0 %v192
    %2249 = vmatpush1.msra.mxu0 %v191
    %2250 = vmatprep.subr.mxu0 %v196
    %2251 = vmatpush1.msra.mxu0 %v195
    %2252 = vmatprep.subr.mxu0 %v200
    %2253 = vmatpush1.msra.mxu0 %v199
    %2254 = vmatprep.subr.mxu0 %v204
    %2255 = vmatpush1.msra.mxu0 %v203
    %2256 = vmatprep.subr.mxu0 %v208
    %2257 = vmatpush1.msra.mxu0 %v207
    %2258 = vmatprep.subr.mxu0 %v212
    %2259 = vmatpush1.msra.mxu0 %v211
    %2260 = vmatprep.subr.mxu0 %v216
    %2261 = vmatpush1.msra.mxu0 %v215
    %2262 = vmatprep.mubr.f32.mxu0 %v2007
    %2263 = vmatmul.mubr.f32.gmra.mrb[0].mxu0 %v2197
    %v2264 = vpop.f32.mrb[0].mxu0
    %v2265 = vadd.f32 %v352, %v2264
    %v2266 = vpop.f32.mrb[0].mxu0
    %v2267 = vadd.f32 %v356, %v2266
    %2268 = vdwg.mxu0
    %2269 = vmatprep.subr.mxu0 %v94
    %2270 = vmatpush1.msra.mxu0 %v93
    %2271 = vmatprep.subr.mxu0 %v98
    %2272 = vmatpush1.msra.mxu0 %v97
    %2273 = vmatprep.subr.mxu0 %v102
    %2274 = vmatpush1.msra.mxu0 %v101
    %2275 = vmatprep.subr.mxu0 %v106
    %2276 = vmatpush1.msra.mxu0 %v105
    %2277 = vmatprep.subr.mxu0 %v110
    %2278 = vmatpush1.msra.mxu0 %v109
    %2279 = vmatprep.subr.mxu0 %v114
    %2280 = vmatpush1.msra.mxu0 %v113
    %2281 = vmatprep.subr.mxu0 %v118
    %2282 = vmatpush1.msra.mxu0 %v117
    %2283 = vmatprep.subr.mxu0 %v122
    %2284 = vmatpush1.msra.mxu0 %v121
    %2285 = vmatprep.subr.mxu0 %v126
    %2286 = vmatpush1.msra.mxu0 %v125
    %2287 = vmatprep.subr.mxu0 %v130
    %2288 = vmatpush1.msra.mxu0 %v129
    %2289 = vmatprep.subr.mxu0 %v134
    %2290 = vmatpush1.msra.mxu0 %v133
    %2291 = vmatprep.subr.mxu0 %v138
    %2292 = vmatpush1.msra.mxu0 %v137
    %2293 = vmatprep.subr.mxu0 %v142
    %2294 = vmatpush1.msra.mxu0 %v141
    %2295 = vmatprep.subr.mxu0 %v146
    %2296 = vmatpush1.msra.mxu0 %v145
    %2297 = vmatprep.subr.mxu0 %v150
    %2298 = vmatpush1.msra.mxu0 %v149
    %2299 = vmatprep.subr.mxu0 %v154
    %2300 = vmatpush1.msra.mxu0 %v153
    %2301 = vmatprep.subr.mxu0 %v158
    %2302 = vmatpush1.msra.mxu0 %v157
    %2303 = vmatprep.subr.mxu0 %v162
    %2304 = vmatpush1.msra.mxu0 %v161
    %2305 = vmatprep.subr.mxu0 %v166
    %2306 = vmatpush1.msra.mxu0 %v165
    %2307 = vmatprep.subr.mxu0 %v170
    %2308 = vmatpush1.msra.mxu0 %v169
    %2309 = vmatprep.subr.mxu0 %v174
    %2310 = vmatpush1.msra.mxu0 %v173
    %2311 = vmatprep.subr.mxu0 %v178
    %2312 = vmatpush1.msra.mxu0 %v177
    %2313 = vmatprep.subr.mxu0 %v182
    %2314 = vmatpush1.msra.mxu0 %v181
    %2315 = vmatprep.subr.mxu0 %v186
    %2316 = vmatpush1.msra.mxu0 %v185
    %2317 = vmatprep.subr.mxu0 %v190
    %2318 = vmatpush1.msra.mxu0 %v189
    %2319 = vmatprep.subr.mxu0 %v194
    %2320 = vmatpush1.msra.mxu0 %v193
    %2321 = vmatprep.subr.mxu0 %v198
    %2322 = vmatpush1.msra.mxu0 %v197
    %2323 = vmatprep.subr.mxu0 %v202
    %2324 = vmatpush1.msra.mxu0 %v201
    %2325 = vmatprep.subr.mxu0 %v206
    %2326 = vmatpush1.msra.mxu0 %v205
    %2327 = vmatprep.subr.mxu0 %v210
    %2328 = vmatpush1.msra.mxu0 %v209
    %2329 = vmatprep.subr.mxu0 %v214
    %2330 = vmatpush1.msra.mxu0 %v213
    %2331 = vmatprep.subr.mxu0 %v218
    %2332 = vmatpush1.msra.mxu0 %v217
    %2333 = vmatprep.mubr.f32.mxu0 %v2007
    %2334 = vmatmul.mubr.f32.gmra.mrb[0].mxu0 %v2197
    %v2335 = vpop.f32.mrb[0].mxu0
    %v2336 = vadd.f32 %v360, %v2335
    %v2337 = vpop.f32.mrb[0].mxu0
    %v2338 = vadd.f32 %v364, %v2337
    %2339 = vdwg.mxu0
    %v2340 = vxor.u32 %v2265, 2147483648
    %v2341 = vmul.f32 %v2340, 1.442695
    %v2342 = vpow.pop %v2341
    %v2343 = vadd.f32 %v2342, 1.0
    %v2344 = vrcp.pop %v2343
    %v2345 = vmul.f32 1.0, %v2344
    %v2346 = vxor.u32 %v2267, 2147483648
    %v2347 = vmul.f32 %v2346, 1.442695
    %v2348 = vpow.pop %v2347
    %v2349 = vadd.f32 %v2348, 1.0
    %v2350 = vrcp.pop %v2349
    %v2351 = vmul.f32 1.0, %v2350
    %v2352 = vtanh.pop %v2336
    %v2353 = vxor.u32 %v2338, 2147483648
    %v2354 = vmul.f32 %v2353, 1.442695
    %v2355 = vpow.pop %v2354
    %v2356 = vadd.f32 %v2355, 1.0
    %v2357 = vrcp.pop %v2356
    %v2358 = vmul.f32 1.0, %v2357
    %v2359 = vmul.f32 %v2351, %v2005
    %v2360 = vmul.f32 %v2345, %v2352
    %v2361 = vadd.f32 %v2359, %v2360
    %v2362 = vtanh.pop %v2361
    %v2363 = vmul.f32 %v2358, %v2362
    %2364 = vmatprep.subr.mxu0 %v220
    %2365 = vmatpush1.msra.mxu0 %v219
    %2366 = vmatprep.subr.mxu0 %v224
    %2367 = vmatpush1.msra.mxu0 %v223
    %2368 = vmatprep.subr.mxu0 %v228
    %2369 = vmatpush1.msra.mxu0 %v227
    %2370 = vmatprep.subr.mxu0 %v232
    %2371 = vmatpush1.msra.mxu0 %v231
    %2372 = vmatprep.subr.mxu0 %v236
    %2373 = vmatpush1.msra.mxu0 %v235
    %2374 = vmatprep.subr.mxu0 %v240
    %2375 = vmatpush1.msra.mxu0 %v239
    %2376 = vmatprep.subr.mxu0 %v244
    %2377 = vmatpush1.msra.mxu0 %v243
    %2378 = vmatprep.subr.mxu0 %v248
    %2379 = vmatpush1.msra.mxu0 %v247
    %2380 = vmatprep.subr.mxu0 %v252
    %2381 = vmatpush1.msra.mxu0 %v251
    %2382 = vmatprep.subr.mxu0 %v256
    %2383 = vmatpush1.msra.mxu0 %v255
    %2384 = vmatprep.subr.mxu0 %v260
    %2385 = vmatpush1.msra.mxu0 %v259
    %2386 = vmatprep.subr.mxu0 %v264
    %2387 = vmatpush1.msra.mxu0 %v263
    %2388 = vmatprep.subr.mxu0 %v268
    %2389 = vmatpush1.msra.mxu0 %v267
    %2390 = vmatprep.subr.mxu0 %v272
    %2391 = vmatpush1.msra.mxu0 %v271
    %2392 = vmatprep.subr.mxu0 %v276
    %2393 = vmatpush1.msra.mxu0 %v275
    %2394 = vmatprep.subr.mxu0 %v280
    %2395 = vmatpush1.msra.mxu0 %v279
    %2396 = vmatprep.subr.mxu0 %v284
    %2397 = vmatpush1.msra.mxu0 %v283
    %2398 = vmatprep.subr.mxu0 %v288
    %2399 = vmatpush1.msra.mxu0 %v287
    %2400 = vmatprep.subr.mxu0 %v292
    %2401 = vmatpush1.msra.mxu0 %v291
    %2402 = vmatprep.subr.mxu0 %v296
    %2403 = vmatpush1.msra.mxu0 %v295
    %2404 = vmatprep.subr.mxu0 %v300
    %2405 = vmatpush1.msra.mxu0 %v299
    %2406 = vmatprep.subr.mxu0 %v304
    %2407 = vmatpush1.msra.mxu0 %v303
    %2408 = vmatprep.subr.mxu0 %v308
    %2409 = vmatpush1.msra.mxu0 %v307
    %2410 = vmatprep.subr.mxu0 %v312
    %2411 = vmatpush1.msra.mxu0 %v311
    %2412 = vmatprep.subr.mxu0 %v316
    %2413 = vmatpush1.msra.mxu0 %v315
    %2414 = vmatprep.subr.mxu0 %v320
    %2415 = vmatpush1.msra.mxu0 %v319
    %2416 = vmatprep.subr.mxu0 %v324
    %2417 = vmatpush1.msra.mxu0 %v323
    %2418 = vmatprep.subr.mxu0 %v328
    %2419 = vmatpush1.msra.mxu0 %v327
    %2420 = vmatprep.subr.mxu0 %v332
    %2421 = vmatpush1.msra.mxu0 %v331
    %2422 = vmatprep.subr.mxu0 %v336
    %2423 = vmatpush1.msra.mxu0 %v335
    %2424 = vmatprep.subr.mxu0 %v340
    %2425 = vmatpush1.msra.mxu0 %v339
    %2426 = vmatprep.subr.mxu0 %v344
    %2427 = vmatpush1.msra.mxu0 %v343
    %2428 = vmatprep.mubr.f32.mxu0 %v2173
    %2429 = vmatmul.mubr.f32.gmra.mrb[0].mxu0 %v2363
    %v2430 = vpop.f32.mrb[0].mxu0
    %v2431 = vadd.f32 %v374, %v2430
    %v2432 = vpop.f32.mrb[0].mxu0
    %v2433 = vadd.f32 %v378, %v2432
    %2434 = vdwg.mxu0
    %2435 = vmatprep.subr.mxu0 %v222
    %2436 = vmatpush1.msra.mxu0 %v221
    %2437 = vmatprep.subr.mxu0 %v226
    %2438 = vmatpush1.msra.mxu0 %v225
    %2439 = vmatprep.subr.mxu0 %v230
    %2440 = vmatpush1.msra.mxu0 %v229
    %2441 = vmatprep.subr.mxu0 %v234
    %2442 = vmatpush1.msra.mxu0 %v233
    %2443 = vmatprep.subr.mxu0 %v238
    %2444 = vmatpush1.msra.mxu0 %v237
    %2445 = vmatprep.subr.mxu0 %v242
    %2446 = vmatpush1.msra.mxu0 %v241
    %2447 = vmatprep.subr.mxu0 %v246
    %2448 = vmatpush1.msra.mxu0 %v245
    %2449 = vmatprep.subr.mxu0 %v250
    %2450 = vmatpush1.msra.mxu0 %v249
    %2451 = vmatprep.subr.mxu0 %v254
    %2452 = vmatpush1.msra.mxu0 %v253
    %2453 = vmatprep.subr.mxu0 %v258
    %2454 = vmatpush1.msra.mxu0 %v257
    %2455 = vmatprep.subr.mxu0 %v262
    %2456 = vmatpush1.msra.mxu0 %v261
    %2457 = vmatprep.subr.mxu0 %v266
    %2458 = vmatpush1.msra.mxu0 %v265
    %2459 = vmatprep.subr.mxu0 %v270
    %2460 = vmatpush1.msra.mxu0 %v269
    %2461 = vmatprep.subr.mxu0 %v274
    %2462 = vmatpush1.msra.mxu0 %v273
    %2463 = vmatprep.subr.mxu0 %v278
    %2464 = vmatpush1.msra.mxu0 %v277
    %2465 = vmatprep.subr.mxu0 %v282
    %2466 = vmatpush1.msra.mxu0 %v281
    %2467 = vmatprep.subr.mxu0 %v286
    %2468 = vmatpush1.msra.mxu0 %v285
    %2469 = vmatprep.subr.mxu0 %v290
    %2470 = vmatpush1.msra.mxu0 %v289
    %2471 = vmatprep.subr.mxu0 %v294
    %2472 = vmatpush1.msra.mxu0 %v293
    %2473 = vmatprep.subr.mxu0 %v298
    %2474 = vmatpush1.msra.mxu0 %v297
    %2475 = vmatprep.subr.mxu0 %v302
    %2476 = vmatpush1.msra.mxu0 %v301
    %2477 = vmatprep.subr.mxu0 %v306
    %2478 = vmatpush1.msra.mxu0 %v305
    %2479 = vmatprep.subr.mxu0 %v310
    %2480 = vmatpush1.msra.mxu0 %v309
    %2481 = vmatprep.subr.mxu0 %v314
    %2482 = vmatpush1.msra.mxu0 %v313
    %2483 = vmatprep.subr.mxu0 %v318
    %2484 = vmatpush1.msra.mxu0 %v317
    %2485 = vmatprep.subr.mxu0 %v322
    %2486 = vmatpush1.msra.mxu0 %v321
    %2487 = vmatprep.subr.mxu0 %v326
    %2488 = vmatpush1.msra.mxu0 %v325
    %2489 = vmatprep.subr.mxu0 %v330
    %2490 = vmatpush1.msra.mxu0 %v329
    %2491 = vmatprep.subr.mxu0 %v334
    %2492 = vmatpush1.msra.mxu0 %v333
    %2493 = vmatprep.subr.mxu0 %v338
    %2494 = vmatpush1.msra.mxu0 %v337
    %2495 = vmatprep.subr.mxu0 %v342
    %2496 = vmatpush1.msra.mxu0 %v341
    %2497 = vmatprep.subr.mxu0 %v346
    %2498 = vmatpush1.msra.mxu0 %v345
    %2499 = vmatprep.mubr.f32.mxu0 %v2173
    %2500 = vmatmul.mubr.f32.gmra.mrb[0].mxu0 %v2363
    %v2501 = vpop.f32.mrb[0].mxu0
    %v2502 = vadd.f32 %v382, %v2501
    %v2503 = vpop.f32.mrb[0].mxu0
    %v2504 = vadd.f32 %v386, %v2503
    %2505 = vdwg.mxu0
    %v2506 = vxor.u32 %v2431, 2147483648
    %v2507 = vmul.f32 %v2506, 1.442695
    %v2508 = vpow.pop %v2507
    %v2509 = vadd.f32 %v2508, 1.0
    %v2510 = vrcp.pop %v2509
    %v2511 = vmul.f32 1.0, %v2510
    %v2512 = vxor.u32 %v2433, 2147483648
    %v2513 = vmul.f32 %v2512, 1.442695
    %v2514 = vpow.pop %v2513
    %v2515 = vadd.f32 %v2514, 1.0
    %v2516 = vrcp.pop %v2515
    %v2517 = vmul.f32 1.0, %v2516
    %v2518 = vtanh.pop %v2502
    %v2519 = vxor.u32 %v2504, 2147483648
    %v2520 = vmul.f32 %v2519, 1.442695
    %v2521 = vpow.pop %v2520
    %v2522 = vadd.f32 %v2521, 1.0
    %v2523 = vrcp.pop %v2522
    %v2524 = vmul.f32 1.0, %v2523
    %v2525 = vmul.f32 %v2517, %v2171
    %v2526 = vmul.f32 %v2511, %v2518
    %v2527 = vadd.f32 %v2525, %v2526
    %v2528 = vtanh.pop %v2527
    %v2529 = vmul.f32 %v2524, %v2528
    %s2530 = sld [smem:[#allocation3 + $0x300]]
    %s2531 = scalar_lea.vmem [#allocation6], %s2530
    %v2532 = vld [vmem:[%s2531] sm:$0x1]
    %s2533 = sld [smem:[#allocation3 + $0x301]]
    %s2534 = scalar_lea.vmem [#allocation6], %s2533
    %v2535 = vld [vmem:[%s2534] sm:$0x1]
    %s2536 = sld [smem:[#allocation3 + $0x302]]
    %s2537 = scalar_lea.vmem [#allocation6], %s2536
    %v2538 = vld [vmem:[%s2537] sm:$0x1]
    %s2539 = sld [smem:[#allocation3 + $0x303]]
    %s2540 = scalar_lea.vmem [#allocation6], %s2539
    %v2541 = vld [vmem:[%s2540] sm:$0x1]
    %v2543 = vrot.slane %v2535, 7
    %v2546 = vrot.slane %v2538, 6
    %v2549 = vrot.slane %v2541, 5
    %v2551 = vsel %vm412, %v2532, %v2543
    %v2552 = vsel %vm414, %v2551, %v2546
    %v2553 = vsel %vm416, %v2552, %v2549
    %2554 = vmatprep.subr.mxu0 %v92
    %2555 = vmatpush1.msra.mxu0 %v91
    %2556 = vmatprep.subr.mxu0 %v96
    %2557 = vmatpush1.msra.mxu0 %v95
    %2558 = vmatprep.subr.mxu0 %v100
    %2559 = vmatpush1.msra.mxu0 %v99
    %2560 = vmatprep.subr.mxu0 %v104
    %2561 = vmatpush1.msra.mxu0 %v103
    %2562 = vmatprep.subr.mxu0 %v108
    %2563 = vmatpush1.msra.mxu0 %v107
    %2564 = vmatprep.subr.mxu0 %v112
    %2565 = vmatpush1.msra.mxu0 %v111
    %2566 = vmatprep.subr.mxu0 %v116
    %2567 = vmatpush1.msra.mxu0 %v115
    %2568 = vmatprep.subr.mxu0 %v120
    %2569 = vmatpush1.msra.mxu0 %v119
    %2570 = vmatprep.subr.mxu0 %v124
    %2571 = vmatpush1.msra.mxu0 %v123
    %2572 = vmatprep.subr.mxu0 %v128
    %2573 = vmatpush1.msra.mxu0 %v127
    %2574 = vmatprep.subr.mxu0 %v132
    %2575 = vmatpush1.msra.mxu0 %v131
    %2576 = vmatprep.subr.mxu0 %v136
    %2577 = vmatpush1.msra.mxu0 %v135
    %2578 = vmatprep.subr.mxu0 %v140
    %2579 = vmatpush1.msra.mxu0 %v139
    %2580 = vmatprep.subr.mxu0 %v144
    %2581 = vmatpush1.msra.mxu0 %v143
    %2582 = vmatprep.subr.mxu0 %v148
    %2583 = vmatpush1.msra.mxu0 %v147
    %2584 = vmatprep.subr.mxu0 %v152
    %2585 = vmatpush1.msra.mxu0 %v151
    %2586 = vmatprep.subr.mxu0 %v156
    %2587 = vmatpush1.msra.mxu0 %v155
    %2588 = vmatprep.subr.mxu0 %v160
    %2589 = vmatpush1.msra.mxu0 %v159
    %2590 = vmatprep.subr.mxu0 %v164
    %2591 = vmatpush1.msra.mxu0 %v163
    %2592 = vmatprep.subr.mxu0 %v168
    %2593 = vmatpush1.msra.mxu0 %v167
    %2594 = vmatprep.subr.mxu0 %v172
    %2595 = vmatpush1.msra.mxu0 %v171
    %2596 = vmatprep.subr.mxu0 %v176
    %2597 = vmatpush1.msra.mxu0 %v175
    %2598 = vmatprep.subr.mxu0 %v180
    %2599 = vmatpush1.msra.mxu0 %v179
    %2600 = vmatprep.subr.mxu0 %v184
    %2601 = vmatpush1.msra.mxu0 %v183
    %2602 = vmatprep.subr.mxu0 %v188
    %2603 = vmatpush1.msra.mxu0 %v187
    %2604 = vmatprep.subr.mxu0 %v192
    %2605 = vmatpush1.msra.mxu0 %v191
    %2606 = vmatprep.subr.mxu0 %v196
    %2607 = vmatpush1.msra.mxu0 %v195
    %2608 = vmatprep.subr.mxu0 %v200
    %2609 = vmatpush1.msra.mxu0 %v199
    %2610 = vmatprep.subr.mxu0 %v204
    %2611 = vmatpush1.msra.mxu0 %v203
    %2612 = vmatprep.subr.mxu0 %v208
    %2613 = vmatpush1.msra.mxu0 %v207
    %2614 = vmatprep.subr.mxu0 %v212
    %2615 = vmatpush1.msra.mxu0 %v211
    %2616 = vmatprep.subr.mxu0 %v216
    %2617 = vmatpush1.msra.mxu0 %v215
    %2618 = vmatprep.mubr.f32.mxu0 %v2363
    %2619 = vmatmul.mubr.f32.gmra.mrb[0].mxu0 %v2553
    %v2620 = vpop.f32.mrb[0].mxu0
    %v2621 = vadd.f32 %v352, %v2620
    %v2622 = vpop.f32.mrb[0].mxu0
    %v2623 = vadd.f32 %v356, %v2622
    %2624 = vdwg.mxu0
    %2625 = vmatprep.subr.mxu0 %v94
    %2626 = vmatpush1.msra.mxu0 %v93
    %2627 = vmatprep.subr.mxu0 %v98
    %2628 = vmatpush1.msra.mxu0 %v97
    %2629 = vmatprep.subr.mxu0 %v102
    %2630 = vmatpush1.msra.mxu0 %v101
    %2631 = vmatprep.subr.mxu0 %v106
    %2632 = vmatpush1.msra.mxu0 %v105
    %2633 = vmatprep.subr.mxu0 %v110
    %2634 = vmatpush1.msra.mxu0 %v109
    %2635 = vmatprep.subr.mxu0 %v114
    %2636 = vmatpush1.msra.mxu0 %v113
    %2637 = vmatprep.subr.mxu0 %v118
    %2638 = vmatpush1.msra.mxu0 %v117
    %2639 = vmatprep.subr.mxu0 %v122
    %2640 = vmatpush1.msra.mxu0 %v121
    %2641 = vmatprep.subr.mxu0 %v126
    %2642 = vmatpush1.msra.mxu0 %v125
    %2643 = vmatprep.subr.mxu0 %v130
    %2644 = vmatpush1.msra.mxu0 %v129
    %2645 = vmatprep.subr.mxu0 %v134
    %2646 = vmatpush1.msra.mxu0 %v133
    %2647 = vmatprep.subr.mxu0 %v138
    %2648 = vmatpush1.msra.mxu0 %v137
    %2649 = vmatprep.subr.mxu0 %v142
    %2650 = vmatpush1.msra.mxu0 %v141
    %2651 = vmatprep.subr.mxu0 %v146
    %2652 = vmatpush1.msra.mxu0 %v145
    %2653 = vmatprep.subr.mxu0 %v150
    %2654 = vmatpush1.msra.mxu0 %v149
    %2655 = vmatprep.subr.mxu0 %v154
    %2656 = vmatpush1.msra.mxu0 %v153
    %2657 = vmatprep.subr.mxu0 %v158
    %2658 = vmatpush1.msra.mxu0 %v157
    %2659 = vmatprep.subr.mxu0 %v162
    %2660 = vmatpush1.msra.mxu0 %v161
    %2661 = vmatprep.subr.mxu0 %v166
    %2662 = vmatpush1.msra.mxu0 %v165
    %2663 = vmatprep.subr.mxu0 %v170
    %2664 = vmatpush1.msra.mxu0 %v169
    %2665 = vmatprep.subr.mxu0 %v174
    %2666 = vmatpush1.msra.mxu0 %v173
    %2667 = vmatprep.subr.mxu0 %v178
    %2668 = vmatpush1.msra.mxu0 %v177
    %2669 = vmatprep.subr.mxu0 %v182
    %2670 = vmatpush1.msra.mxu0 %v181
    %2671 = vmatprep.subr.mxu0 %v186
    %2672 = vmatpush1.msra.mxu0 %v185
    %2673 = vmatprep.subr.mxu0 %v190
    %2674 = vmatpush1.msra.mxu0 %v189
    %2675 = vmatprep.subr.mxu0 %v194
    %2676 = vmatpush1.msra.mxu0 %v193
    %2677 = vmatprep.subr.mxu0 %v198
    %2678 = vmatpush1.msra.mxu0 %v197
    %2679 = vmatprep.subr.mxu0 %v202
    %2680 = vmatpush1.msra.mxu0 %v201
    %2681 = vmatprep.subr.mxu0 %v206
    %2682 = vmatpush1.msra.mxu0 %v205
    %2683 = vmatprep.subr.mxu0 %v210
    %2684 = vmatpush1.msra.mxu0 %v209
    %2685 = vmatprep.subr.mxu0 %v214
    %2686 = vmatpush1.msra.mxu0 %v213
    %2687 = vmatprep.subr.mxu0 %v218
    %2688 = vmatpush1.msra.mxu0 %v217
    %2689 = vmatprep.mubr.f32.mxu0 %v2363
    %2690 = vmatmul.mubr.f32.gmra.mrb[0].mxu0 %v2553
    %v2691 = vpop.f32.mrb[0].mxu0
    %v2692 = vadd.f32 %v360, %v2691
    %v2693 = vpop.f32.mrb[0].mxu0
    %v2694 = vadd.f32 %v364, %v2693
    %2695 = vdwg.mxu0
    %v2696 = vxor.u32 %v2621, 2147483648
    %v2697 = vmul.f32 %v2696, 1.442695
    %v2698 = vpow.pop %v2697
    %v2699 = vadd.f32 %v2698, 1.0
    %v2700 = vrcp.pop %v2699
    %v2701 = vmul.f32 1.0, %v2700
    %v2702 = vxor.u32 %v2623, 2147483648
    %v2703 = vmul.f32 %v2702, 1.442695
    %v2704 = vpow.pop %v2703
    %v2705 = vadd.f32 %v2704, 1.0
    %v2706 = vrcp.pop %v2705
    %v2707 = vmul.f32 1.0, %v2706
    %v2708 = vtanh.pop %v2692
    %v2709 = vxor.u32 %v2694, 2147483648
    %v2710 = vmul.f32 %v2709, 1.442695
    %v2711 = vpow.pop %v2710
    %v2712 = vadd.f32 %v2711, 1.0
    %v2713 = vrcp.pop %v2712
    %v2714 = vmul.f32 1.0, %v2713
    %v2715 = vmul.f32 %v2707, %v2361
    %v2716 = vmul.f32 %v2701, %v2708
    %v2717 = vadd.f32 %v2715, %v2716
    %v2718 = vtanh.pop %v2717
    %v2719 = vmul.f32 %v2714, %v2718
    %2720 = vmatprep.subr.mxu0 %v220
    %2721 = vmatpush1.msra.mxu0 %v219
    %2722 = vmatprep.subr.mxu0 %v224
    %2723 = vmatpush1.msra.mxu0 %v223
    %2724 = vmatprep.subr.mxu0 %v228
    %2725 = vmatpush1.msra.mxu0 %v227
    %2726 = vmatprep.subr.mxu0 %v232
    %2727 = vmatpush1.msra.mxu0 %v231
    %2728 = vmatprep.subr.mxu0 %v236
    %2729 = vmatpush1.msra.mxu0 %v235
    %2730 = vmatprep.subr.mxu0 %v240
    %2731 = vmatpush1.msra.mxu0 %v239
    %2732 = vmatprep.subr.mxu0 %v244
    %2733 = vmatpush1.msra.mxu0 %v243
    %2734 = vmatprep.subr.mxu0 %v248
    %2735 = vmatpush1.msra.mxu0 %v247
    %2736 = vmatprep.subr.mxu0 %v252
    %2737 = vmatpush1.msra.mxu0 %v251
    %2738 = vmatprep.subr.mxu0 %v256
    %2739 = vmatpush1.msra.mxu0 %v255
    %2740 = vmatprep.subr.mxu0 %v260
    %2741 = vmatpush1.msra.mxu0 %v259
    %2742 = vmatprep.subr.mxu0 %v264
    %2743 = vmatpush1.msra.mxu0 %v263
    %2744 = vmatprep.subr.mxu0 %v268
    %2745 = vmatpush1.msra.mxu0 %v267
    %2746 = vmatprep.subr.mxu0 %v272
    %2747 = vmatpush1.msra.mxu0 %v271
    %2748 = vmatprep.subr.mxu0 %v276
    %2749 = vmatpush1.msra.mxu0 %v275
    %2750 = vmatprep.subr.mxu0 %v280
    %2751 = vmatpush1.msra.mxu0 %v279
    %2752 = vmatprep.subr.mxu0 %v284
    %2753 = vmatpush1.msra.mxu0 %v283
    %2754 = vmatprep.subr.mxu0 %v288
    %2755 = vmatpush1.msra.mxu0 %v287
    %2756 = vmatprep.subr.mxu0 %v292
    %2757 = vmatpush1.msra.mxu0 %v291
    %2758 = vmatprep.subr.mxu0 %v296
    %2759 = vmatpush1.msra.mxu0 %v295
    %2760 = vmatprep.subr.mxu0 %v300
    %2761 = vmatpush1.msra.mxu0 %v299
    %2762 = vmatprep.subr.mxu0 %v304
    %2763 = vmatpush1.msra.mxu0 %v303
    %2764 = vmatprep.subr.mxu0 %v308
    %2765 = vmatpush1.msra.mxu0 %v307
    %2766 = vmatprep.subr.mxu0 %v312
    %2767 = vmatpush1.msra.mxu0 %v311
    %2768 = vmatprep.subr.mxu0 %v316
    %2769 = vmatpush1.msra.mxu0 %v315
    %2770 = vmatprep.subr.mxu0 %v320
    %2771 = vmatpush1.msra.mxu0 %v319
    %2772 = vmatprep.subr.mxu0 %v324
    %2773 = vmatpush1.msra.mxu0 %v323
    %2774 = vmatprep.subr.mxu0 %v328
    %2775 = vmatpush1.msra.mxu0 %v327
    %2776 = vmatprep.subr.mxu0 %v332
    %2777 = vmatpush1.msra.mxu0 %v331
    %2778 = vmatprep.subr.mxu0 %v336
    %2779 = vmatpush1.msra.mxu0 %v335
    %2780 = vmatprep.subr.mxu0 %v340
    %2781 = vmatpush1.msra.mxu0 %v339
    %2782 = vmatprep.subr.mxu0 %v344
    %2783 = vmatpush1.msra.mxu0 %v343
    %2784 = vmatprep.mubr.f32.mxu0 %v2529
    %2785 = vmatmul.mubr.f32.gmra.mrb[0].mxu0 %v2719
    %v2786 = vpop.f32.mrb[0].mxu0
    %v2787 = vadd.f32 %v374, %v2786
    %v2788 = vpop.f32.mrb[0].mxu0
    %v2789 = vadd.f32 %v378, %v2788
    %2790 = vdwg.mxu0
    %2791 = vmatprep.subr.mxu0 %v222
    %2792 = vmatpush1.msra.mxu0 %v221
    %2793 = vmatprep.subr.mxu0 %v226
    %2794 = vmatpush1.msra.mxu0 %v225
    %2795 = vmatprep.subr.mxu0 %v230
    %2796 = vmatpush1.msra.mxu0 %v229
    %2797 = vmatprep.subr.mxu0 %v234
    %2798 = vmatpush1.msra.mxu0 %v233
    %2799 = vmatprep.subr.mxu0 %v238
    %2800 = vmatpush1.msra.mxu0 %v237
    %2801 = vmatprep.subr.mxu0 %v242
    %2802 = vmatpush1.msra.mxu0 %v241
    %2803 = vmatprep.subr.mxu0 %v246
    %2804 = vmatpush1.msra.mxu0 %v245
    %2805 = vmatprep.subr.mxu0 %v250
    %2806 = vmatpush1.msra.mxu0 %v249
    %2807 = vmatprep.subr.mxu0 %v254
    %2808 = vmatpush1.msra.mxu0 %v253
    %2809 = vmatprep.subr.mxu0 %v258
    %2810 = vmatpush1.msra.mxu0 %v257
    %2811 = vmatprep.subr.mxu0 %v262
    %2812 = vmatpush1.msra.mxu0 %v261
    %2813 = vmatprep.subr.mxu0 %v266
    %2814 = vmatpush1.msra.mxu0 %v265
    %2815 = vmatprep.subr.mxu0 %v270
    %2816 = vmatpush1.msra.mxu0 %v269
    %2817 = vmatprep.subr.mxu0 %v274
    %2818 = vmatpush1.msra.mxu0 %v273
    %2819 = vmatprep.subr.mxu0 %v278
    %2820 = vmatpush1.msra.mxu0 %v277
    %2821 = vmatprep.subr.mxu0 %v282
    %2822 = vmatpush1.msra.mxu0 %v281
    %2823 = vmatprep.subr.mxu0 %v286
    %2824 = vmatpush1.msra.mxu0 %v285
    %2825 = vmatprep.subr.mxu0 %v290
    %2826 = vmatpush1.msra.mxu0 %v289
    %2827 = vmatprep.subr.mxu0 %v294
    %2828 = vmatpush1.msra.mxu0 %v293
    %2829 = vmatprep.subr.mxu0 %v298
    %2830 = vmatpush1.msra.mxu0 %v297
    %2831 = vmatprep.subr.mxu0 %v302
    %2832 = vmatpush1.msra.mxu0 %v301
    %2833 = vmatprep.subr.mxu0 %v306
    %2834 = vmatpush1.msra.mxu0 %v305
    %2835 = vmatprep.subr.mxu0 %v310
    %2836 = vmatpush1.msra.mxu0 %v309
    %2837 = vmatprep.subr.mxu0 %v314
    %2838 = vmatpush1.msra.mxu0 %v313
    %2839 = vmatprep.subr.mxu0 %v318
    %2840 = vmatpush1.msra.mxu0 %v317
    %2841 = vmatprep.subr.mxu0 %v322
    %2842 = vmatpush1.msra.mxu0 %v321
    %2843 = vmatprep.subr.mxu0 %v326
    %2844 = vmatpush1.msra.mxu0 %v325
    %2845 = vmatprep.subr.mxu0 %v330
    %2846 = vmatpush1.msra.mxu0 %v329
    %2847 = vmatprep.subr.mxu0 %v334
    %2848 = vmatpush1.msra.mxu0 %v333
    %2849 = vmatprep.subr.mxu0 %v338
    %2850 = vmatpush1.msra.mxu0 %v337
    %2851 = vmatprep.subr.mxu0 %v342
    %2852 = vmatpush1.msra.mxu0 %v341
    %2853 = vmatprep.subr.mxu0 %v346
    %2854 = vmatpush1.msra.mxu0 %v345
    %2855 = vmatprep.mubr.f32.mxu0 %v2529
    %2856 = vmatmul.mubr.f32.gmra.mrb[0].mxu0 %v2719
    %v2857 = vpop.f32.mrb[0].mxu0
    %v2858 = vadd.f32 %v382, %v2857
    %v2859 = vpop.f32.mrb[0].mxu0
    %v2860 = vadd.f32 %v386, %v2859
    %2861 = vdwg.mxu0
    %v2862 = vxor.u32 %v2787, 2147483648
    %v2863 = vmul.f32 %v2862, 1.442695
    %v2864 = vpow.pop %v2863
    %v2865 = vadd.f32 %v2864, 1.0
    %v2866 = vrcp.pop %v2865
    %v2867 = vmul.f32 1.0, %v2866
    %v2868 = vxor.u32 %v2789, 2147483648
    %v2869 = vmul.f32 %v2868, 1.442695
    %v2870 = vpow.pop %v2869
    %v2871 = vadd.f32 %v2870, 1.0
    %v2872 = vrcp.pop %v2871
    %v2873 = vmul.f32 1.0, %v2872
    %v2874 = vtanh.pop %v2858
    %v2875 = vxor.u32 %v2860, 2147483648
    %v2876 = vmul.f32 %v2875, 1.442695
    %v2877 = vpow.pop %v2876
    %v2878 = vadd.f32 %v2877, 1.0
    %v2879 = vrcp.pop %v2878
    %v2880 = vmul.f32 1.0, %v2879
    %v2881 = vmul.f32 %v2873, %v2527
    %v2882 = vmul.f32 %v2867, %v2874
    %v2883 = vadd.f32 %v2881, %v2882
    %v2884 = vtanh.pop %v2883
    %v2885 = vmul.f32 %v2880, %v2884
    %s2886 = sld [smem:[#allocation3 + $0x380]]
    %s2887 = scalar_lea.vmem [#allocation6], %s2886
    %v2888 = vld [vmem:[%s2887] sm:$0x1]
    %s2889 = sld [smem:[#allocation3 + $0x381]]
    %s2890 = scalar_lea.vmem [#allocation6], %s2889
    %v2891 = vld [vmem:[%s2890] sm:$0x1]
    %s2892 = sld [smem:[#allocation3 + $0x382]]
    %s2893 = scalar_lea.vmem [#allocation6], %s2892
    %v2894 = vld [vmem:[%s2893] sm:$0x1]
    %s2895 = sld [smem:[#allocation3 + $0x383]]
    %s2896 = scalar_lea.vmem [#allocation6], %s2895
    %v2897 = vld [vmem:[%s2896] sm:$0x1]
    %v2899 = vrot.slane %v2891, 7
    %v2902 = vrot.slane %v2894, 6
    %v2905 = vrot.slane %v2897, 5
    %v2907 = vsel %vm412, %v2888, %v2899
    %v2908 = vsel %vm414, %v2907, %v2902
    %v2909 = vsel %vm416, %v2908, %v2905
    %2910 = vmatprep.subr.mxu0 %v92
    %2911 = vmatpush1.msra.mxu0 %v91
    %2912 = vmatprep.subr.mxu0 %v96
    %2913 = vmatpush1.msra.mxu0 %v95
    %2914 = vmatprep.subr.mxu0 %v100
    %2915 = vmatpush1.msra.mxu0 %v99
    %2916 = vmatprep.subr.mxu0 %v104
    %2917 = vmatpush1.msra.mxu0 %v103
    %2918 = vmatprep.subr.mxu0 %v108
    %2919 = vmatpush1.msra.mxu0 %v107
    %2920 = vmatprep.subr.mxu0 %v112
    %2921 = vmatpush1.msra.mxu0 %v111
    %2922 = vmatprep.subr.mxu0 %v116
    %2923 = vmatpush1.msra.mxu0 %v115
    %2924 = vmatprep.subr.mxu0 %v120
    %2925 = vmatpush1.msra.mxu0 %v119
    %2926 = vmatprep.subr.mxu0 %v124
    %2927 = vmatpush1.msra.mxu0 %v123
    %2928 = vmatprep.subr.mxu0 %v128
    %2929 = vmatpush1.msra.mxu0 %v127
    %2930 = vmatprep.subr.mxu0 %v132
    %2931 = vmatpush1.msra.mxu0 %v131
    %2932 = vmatprep.subr.mxu0 %v136
    %2933 = vmatpush1.msra.mxu0 %v135
    %2934 = vmatprep.subr.mxu0 %v140
    %2935 = vmatpush1.msra.mxu0 %v139
    %2936 = vmatprep.subr.mxu0 %v144
    %2937 = vmatpush1.msra.mxu0 %v143
    %2938 = vmatprep.subr.mxu0 %v148
    %2939 = vmatpush1.msra.mxu0 %v147
    %2940 = vmatprep.subr.mxu0 %v152
    %2941 = vmatpush1.msra.mxu0 %v151
    %2942 = vmatprep.subr.mxu0 %v156
    %2943 = vmatpush1.msra.mxu0 %v155
    %2944 = vmatprep.subr.mxu0 %v160
    %2945 = vmatpush1.msra.mxu0 %v159
    %2946 = vmatprep.subr.mxu0 %v164
    %2947 = vmatpush1.msra.mxu0 %v163
    %2948 = vmatprep.subr.mxu0 %v168
    %2949 = vmatpush1.msra.mxu0 %v167
    %2950 = vmatprep.subr.mxu0 %v172
    %2951 = vmatpush1.msra.mxu0 %v171
    %2952 = vmatprep.subr.mxu0 %v176
    %2953 = vmatpush1.msra.mxu0 %v175
    %2954 = vmatprep.subr.mxu0 %v180
    %2955 = vmatpush1.msra.mxu0 %v179
    %2956 = vmatprep.subr.mxu0 %v184
    %2957 = vmatpush1.msra.mxu0 %v183
    %2958 = vmatprep.subr.mxu0 %v188
    %2959 = vmatpush1.msra.mxu0 %v187
    %2960 = vmatprep.subr.mxu0 %v192
    %2961 = vmatpush1.msra.mxu0 %v191
    %2962 = vmatprep.subr.mxu0 %v196
    %2963 = vmatpush1.msra.mxu0 %v195
    %2964 = vmatprep.subr.mxu0 %v200
    %2965 = vmatpush1.msra.mxu0 %v199
    %2966 = vmatprep.subr.mxu0 %v204
    %2967 = vmatpush1.msra.mxu0 %v203
    %2968 = vmatprep.subr.mxu0 %v208
    %2969 = vmatpush1.msra.mxu0 %v207
    %2970 = vmatprep.subr.mxu0 %v212
    %2971 = vmatpush1.msra.mxu0 %v211
    %2972 = vmatprep.subr.mxu0 %v216
    %2973 = vmatpush1.msra.mxu0 %v215
    %2974 = vmatprep.mubr.f32.mxu0 %v2719
    %2975 = vmatmul.mubr.f32.gmra.mrb[0].mxu0 %v2909
    %v2976 = vpop.f32.mrb[0].mxu0
    %v2977 = vadd.f32 %v352, %v2976
    %v2978 = vpop.f32.mrb[0].mxu0
    %v2979 = vadd.f32 %v356, %v2978
    %2980 = vdwg.mxu0
    %2981 = vmatprep.subr.mxu0 %v94
    %2982 = vmatpush1.msra.mxu0 %v93
    %2983 = vmatprep.subr.mxu0 %v98
    %2984 = vmatpush1.msra.mxu0 %v97
    %2985 = vmatprep.subr.mxu0 %v102
    %2986 = vmatpush1.msra.mxu0 %v101
    %2987 = vmatprep.subr.mxu0 %v106
    %2988 = vmatpush1.msra.mxu0 %v105
    %2989 = vmatprep.subr.mxu0 %v110
    %2990 = vmatpush1.msra.mxu0 %v109
    %2991 = vmatprep.subr.mxu0 %v114
    %2992 = vmatpush1.msra.mxu0 %v113
    %2993 = vmatprep.subr.mxu0 %v118
    %2994 = vmatpush1.msra.mxu0 %v117
    %2995 = vmatprep.subr.mxu0 %v122
    %2996 = vmatpush1.msra.mxu0 %v121
    %2997 = vmatprep.subr.mxu0 %v126
    %2998 = vmatpush1.msra.mxu0 %v125
    %2999 = vmatprep.subr.mxu0 %v130
    %3000 = vmatpush1.msra.mxu0 %v129
    %3001 = vmatprep.subr.mxu0 %v134
    %3002 = vmatpush1.msra.mxu0 %v133
    %3003 = vmatprep.subr.mxu0 %v138
    %3004 = vmatpush1.msra.mxu0 %v137
    %3005 = vmatprep.subr.mxu0 %v142
    %3006 = vmatpush1.msra.mxu0 %v141
    %3007 = vmatprep.subr.mxu0 %v146
    %3008 = vmatpush1.msra.mxu0 %v145
    %3009 = vmatprep.subr.mxu0 %v150
    %3010 = vmatpush1.msra.mxu0 %v149
    %3011 = vmatprep.subr.mxu0 %v154
    %3012 = vmatpush1.msra.mxu0 %v153
    %3013 = vmatprep.subr.mxu0 %v158
    %3014 = vmatpush1.msra.mxu0 %v157
    %3015 = vmatprep.subr.mxu0 %v162
    %3016 = vmatpush1.msra.mxu0 %v161
    %3017 = vmatprep.subr.mxu0 %v166
    %3018 = vmatpush1.msra.mxu0 %v165
    %3019 = vmatprep.subr.mxu0 %v170
    %3020 = vmatpush1.msra.mxu0 %v169
    %3021 = vmatprep.subr.mxu0 %v174
    %3022 = vmatpush1.msra.mxu0 %v173
    %3023 = vmatprep.subr.mxu0 %v178
    %3024 = vmatpush1.msra.mxu0 %v177
    %3025 = vmatprep.subr.mxu0 %v182
    %3026 = vmatpush1.msra.mxu0 %v181
    %3027 = vmatprep.subr.mxu0 %v186
    %3028 = vmatpush1.msra.mxu0 %v185
    %3029 = vmatprep.subr.mxu0 %v190
    %3030 = vmatpush1.msra.mxu0 %v189
    %3031 = vmatprep.subr.mxu0 %v194
    %3032 = vmatpush1.msra.mxu0 %v193
    %3033 = vmatprep.subr.mxu0 %v198
    %3034 = vmatpush1.msra.mxu0 %v197
    %3035 = vmatprep.subr.mxu0 %v202
    %3036 = vmatpush1.msra.mxu0 %v201
    %3037 = vmatprep.subr.mxu0 %v206
    %3038 = vmatpush1.msra.mxu0 %v205
    %3039 = vmatprep.subr.mxu0 %v210
    %3040 = vmatpush1.msra.mxu0 %v209
    %3041 = vmatprep.subr.mxu0 %v214
    %3042 = vmatpush1.msra.mxu0 %v213
    %3043 = vmatprep.subr.mxu0 %v218
    %3044 = vmatpush1.msra.mxu0 %v217
    %3045 = vmatprep.mubr.f32.mxu0 %v2719
    %3046 = vmatmul.mubr.f32.gmra.mrb[0].mxu0 %v2909
    %v3047 = vpop.f32.mrb[0].mxu0
    %v3048 = vadd.f32 %v360, %v3047
    %v3049 = vpop.f32.mrb[0].mxu0
    %v3050 = vadd.f32 %v364, %v3049
    %3051 = vdwg.mxu0
    %v3052 = vxor.u32 %v2977, 2147483648
    %v3053 = vmul.f32 %v3052, 1.442695
    %v3054 = vpow.pop %v3053
    %v3055 = vadd.f32 %v3054, 1.0
    %v3056 = vrcp.pop %v3055
    %v3057 = vmul.f32 1.0, %v3056
    %v3058 = vxor.u32 %v2979, 2147483648
    %v3059 = vmul.f32 %v3058, 1.442695
    %v3060 = vpow.pop %v3059
    %v3061 = vadd.f32 %v3060, 1.0
    %v3062 = vrcp.pop %v3061
    %v3063 = vmul.f32 1.0, %v3062
    %v3064 = vtanh.pop %v3048
    %v3065 = vxor.u32 %v3050, 2147483648
    %v3066 = vmul.f32 %v3065, 1.442695
    %v3067 = vpow.pop %v3066
    %v3068 = vadd.f32 %v3067, 1.0
    %v3069 = vrcp.pop %v3068
    %v3070 = vmul.f32 1.0, %v3069
    %v3071 = vmul.f32 %v3063, %v2717
    %v3072 = vmul.f32 %v3057, %v3064
    %v3073 = vadd.f32 %v3071, %v3072
    %v3074 = vtanh.pop %v3073
    %v3075 = vmul.f32 %v3070, %v3074
    %3076 = vmatprep.subr.mxu0 %v220
    %3077 = vmatpush1.msra.mxu0 %v219
    %3078 = vmatprep.subr.mxu0 %v224
    %3079 = vmatpush1.msra.mxu0 %v223
    %3080 = vmatprep.subr.mxu0 %v228
    %3081 = vmatpush1.msra.mxu0 %v227
    %3082 = vmatprep.subr.mxu0 %v232
    %3083 = vmatpush1.msra.mxu0 %v231
    %3084 = vmatprep.subr.mxu0 %v236
    %3085 = vmatpush1.msra.mxu0 %v235
    %3086 = vmatprep.subr.mxu0 %v240
    %3087 = vmatpush1.msra.mxu0 %v239
    %3088 = vmatprep.subr.mxu0 %v244
    %3089 = vmatpush1.msra.mxu0 %v243
    %3090 = vmatprep.subr.mxu0 %v248
    %3091 = vmatpush1.msra.mxu0 %v247
    %3092 = vmatprep.subr.mxu0 %v252
    %3093 = vmatpush1.msra.mxu0 %v251
    %3094 = vmatprep.subr.mxu0 %v256
    %3095 = vmatpush1.msra.mxu0 %v255
    %3096 = vmatprep.subr.mxu0 %v260
    %3097 = vmatpush1.msra.mxu0 %v259
    %3098 = vmatprep.subr.mxu0 %v264
    %3099 = vmatpush1.msra.mxu0 %v263
    %3100 = vmatprep.subr.mxu0 %v268
    %3101 = vmatpush1.msra.mxu0 %v267
    %3102 = vmatprep.subr.mxu0 %v272
    %3103 = vmatpush1.msra.mxu0 %v271
    %3104 = vmatprep.subr.mxu0 %v276
    %3105 = vmatpush1.msra.mxu0 %v275
    %3106 = vmatprep.subr.mxu0 %v280
    %3107 = vmatpush1.msra.mxu0 %v279
    %3108 = vmatprep.subr.mxu0 %v284
    %3109 = vmatpush1.msra.mxu0 %v283
    %3110 = vmatprep.subr.mxu0 %v288
    %3111 = vmatpush1.msra.mxu0 %v287
    %3112 = vmatprep.subr.mxu0 %v292
    %3113 = vmatpush1.msra.mxu0 %v291
    %3114 = vmatprep.subr.mxu0 %v296
    %3115 = vmatpush1.msra.mxu0 %v295
    %3116 = vmatprep.subr.mxu0 %v300
    %3117 = vmatpush1.msra.mxu0 %v299
    %3118 = vmatprep.subr.mxu0 %v304
    %3119 = vmatpush1.msra.mxu0 %v303
    %3120 = vmatprep.subr.mxu0 %v308
    %3121 = vmatpush1.msra.mxu0 %v307
    %3122 = vmatprep.subr.mxu0 %v312
    %3123 = vmatpush1.msra.mxu0 %v311
    %3124 = vmatprep.subr.mxu0 %v316
    %3125 = vmatpush1.msra.mxu0 %v315
    %3126 = vmatprep.subr.mxu0 %v320
    %3127 = vmatpush1.msra.mxu0 %v319
    %3128 = vmatprep.subr.mxu0 %v324
    %3129 = vmatpush1.msra.mxu0 %v323
    %3130 = vmatprep.subr.mxu0 %v328
    %3131 = vmatpush1.msra.mxu0 %v327
    %3132 = vmatprep.subr.mxu0 %v332
    %3133 = vmatpush1.msra.mxu0 %v331
    %3134 = vmatprep.subr.mxu0 %v336
    %3135 = vmatpush1.msra.mxu0 %v335
    %3136 = vmatprep.subr.mxu0 %v340
    %3137 = vmatpush1.msra.mxu0 %v339
    %3138 = vmatprep.subr.mxu0 %v344
    %3139 = vmatpush1.msra.mxu0 %v343
    %3140 = vmatprep.mubr.f32.mxu0 %v2885
    %3141 = vmatmul.mubr.f32.gmra.mrb[0].mxu0 %v3075
    %v3142 = vpop.f32.mrb[0].mxu0
    %v3143 = vadd.f32 %v374, %v3142
    %v3144 = vpop.f32.mrb[0].mxu0
    %v3145 = vadd.f32 %v378, %v3144
    %3146 = vdwg.mxu0
    %3147 = vmatprep.subr.mxu0 %v222
    %3148 = vmatpush1.msra.mxu0 %v221
    %3149 = vmatprep.subr.mxu0 %v226
    %3150 = vmatpush1.msra.mxu0 %v225
    %3151 = vmatprep.subr.mxu0 %v230
    %3152 = vmatpush1.msra.mxu0 %v229
    %3153 = vmatprep.subr.mxu0 %v234
    %3154 = vmatpush1.msra.mxu0 %v233
    %3155 = vmatprep.subr.mxu0 %v238
    %3156 = vmatpush1.msra.mxu0 %v237
    %3157 = vmatprep.subr.mxu0 %v242
    %3158 = vmatpush1.msra.mxu0 %v241
    %3159 = vmatprep.subr.mxu0 %v246
    %3160 = vmatpush1.msra.mxu0 %v245
    %3161 = vmatprep.subr.mxu0 %v250
    %3162 = vmatpush1.msra.mxu0 %v249
    %3163 = vmatprep.subr.mxu0 %v254
    %3164 = vmatpush1.msra.mxu0 %v253
    %3165 = vmatprep.subr.mxu0 %v258
    %3166 = vmatpush1.msra.mxu0 %v257
    %3167 = vmatprep.subr.mxu0 %v262
    %3168 = vmatpush1.msra.mxu0 %v261
    %3169 = vmatprep.subr.mxu0 %v266
    %3170 = vmatpush1.msra.mxu0 %v265
    %3171 = vmatprep.subr.mxu0 %v270
    %3172 = vmatpush1.msra.mxu0 %v269
    %3173 = vmatprep.subr.mxu0 %v274
    %3174 = vmatpush1.msra.mxu0 %v273
    %3175 = vmatprep.subr.mxu0 %v278
    %3176 = vmatpush1.msra.mxu0 %v277
    %3177 = vmatprep.subr.mxu0 %v282
    %3178 = vmatpush1.msra.mxu0 %v281
    %3179 = vmatprep.subr.mxu0 %v286
    %3180 = vmatpush1.msra.mxu0 %v285
    %3181 = vmatprep.subr.mxu0 %v290
    %3182 = vmatpush1.msra.mxu0 %v289
    %3183 = vmatprep.subr.mxu0 %v294
    %3184 = vmatpush1.msra.mxu0 %v293
    %3185 = vmatprep.subr.mxu0 %v298
    %3186 = vmatpush1.msra.mxu0 %v297
    %3187 = vmatprep.subr.mxu0 %v302
    %3188 = vmatpush1.msra.mxu0 %v301
    %3189 = vmatprep.subr.mxu0 %v306
    %3190 = vmatpush1.msra.mxu0 %v305
    %3191 = vmatprep.subr.mxu0 %v310
    %3192 = vmatpush1.msra.mxu0 %v309
    %3193 = vmatprep.subr.mxu0 %v314
    %3194 = vmatpush1.msra.mxu0 %v313
    %3195 = vmatprep.subr.mxu0 %v318
    %3196 = vmatpush1.msra.mxu0 %v317
    %3197 = vmatprep.subr.mxu0 %v322
    %3198 = vmatpush1.msra.mxu0 %v321
    %3199 = vmatprep.subr.mxu0 %v326
    %3200 = vmatpush1.msra.mxu0 %v325
    %3201 = vmatprep.subr.mxu0 %v330
    %3202 = vmatpush1.msra.mxu0 %v329
    %3203 = vmatprep.subr.mxu0 %v334
    %3204 = vmatpush1.msra.mxu0 %v333
    %3205 = vmatprep.subr.mxu0 %v338
    %3206 = vmatpush1.msra.mxu0 %v337
    %3207 = vmatprep.subr.mxu0 %v342
    %3208 = vmatpush1.msra.mxu0 %v341
    %3209 = vmatprep.subr.mxu0 %v346
    %3210 = vmatpush1.msra.mxu0 %v345
    %3211 = vmatprep.mubr.f32.mxu0 %v2885
    %3212 = vmatmul.mubr.f32.gmra.mrb[0].mxu0 %v3075
    %v3213 = vpop.f32.mrb[0].mxu0
    %v3214 = vadd.f32 %v382, %v3213
    %v3215 = vpop.f32.mrb[0].mxu0
    %v3216 = vadd.f32 %v386, %v3215
    %3217 = vdwg.mxu0
    %v3218 = vxor.u32 %v3143, 2147483648
    %v3219 = vmul.f32 %v3218, 1.442695
    %v3220 = vpow.pop %v3219
    %v3221 = vadd.f32 %v3220, 1.0
    %v3222 = vrcp.pop %v3221
    %v3223 = vmul.f32 1.0, %v3222
    %v3224 = vxor.u32 %v3145, 2147483648
    %v3225 = vmul.f32 %v3224, 1.442695
    %v3226 = vpow.pop %v3225
    %v3227 = vadd.f32 %v3226, 1.0
    %v3228 = vrcp.pop %v3227
    %v3229 = vmul.f32 1.0, %v3228
    %v3230 = vtanh.pop %v3214
    %v3231 = vxor.u32 %v3216, 2147483648
    %v3232 = vmul.f32 %v3231, 1.442695
    %v3233 = vpow.pop %v3232
    %v3234 = vadd.f32 %v3233, 1.0
    %v3235 = vrcp.pop %v3234
    %v3236 = vmul.f32 1.0, %v3235
    %v3237 = vmul.f32 %v3229, %v2883
    %v3238 = vmul.f32 %v3223, %v3230
    %v3239 = vadd.f32 %v3237, %v3238
    %v3240 = vtanh.pop %v3239
    %v3241 = vmul.f32 %v3236, %v3240
    %v3242 = vld [vmem:[%s6] sm:$0xff]
    %v3243 = vld [vmem:[%s6 + $0x8] sm:$0xff]
    %v3244 = vld [vmem:[%s6 + $0x10] sm:$0xff]
    %v3245 = vld [vmem:[%s6 + $0x18] sm:$0xff]
    %v3246 = vld [vmem:[%s6 + $0x20] sm:$0xff]
    %v3247 = vld [vmem:[%s6 + $0x28] sm:$0xff]
    %v3248 = vld [vmem:[%s6 + $0x30] sm:$0xff]
    %v3249 = vld [vmem:[%s6 + $0x38] sm:$0xff]
    %v3250 = vld [vmem:[%s6 + $0x40] sm:$0xff]
    %v3251 = vld [vmem:[%s6 + $0x48] sm:$0xff]
    %v3252 = vld [vmem:[%s6 + $0x50] sm:$0xff]
    %v3253 = vld [vmem:[%s6 + $0x58] sm:$0xff]
    %v3254 = vld [vmem:[%s6 + $0x60] sm:$0xff]
    %v3255 = vld [vmem:[%s6 + $0x68] sm:$0xff]
    %v3256 = vld [vmem:[%s6 + $0x70] sm:$0xff]
    %v3257 = vld [vmem:[%s6 + $0x78] sm:$0xff]
    %v3258 = vld [vmem:[%s7] sm:$0x1]
    %v3260 = vlaneseq
    %v3261 = vshrl.u32 %v3260, 7
    %v3262 = vsub.s32 0, %v3261
    %v3263 = vrot.slane %v3258, %v3262
    %3265 = vmatprep.subr.mxu0 0.0
    %3266 = vmatpush1.msra.mxu0 %v3242
    %3267 = vmatprep.subr.mxu0 0.0
    %3268 = vmatpush1.msra.mxu0 %v3243
    %3269 = vmatprep.subr.mxu0 0.0
    %3270 = vmatpush1.msra.mxu0 %v3244
    %3271 = vmatprep.subr.mxu0 0.0
    %3272 = vmatpush1.msra.mxu0 %v3245
    %3273 = vmatprep.subr.mxu0 0.0
    %3274 = vmatpush1.msra.mxu0 %v3246
    %3275 = vmatprep.subr.mxu0 0.0
    %3276 = vmatpush1.msra.mxu0 %v3247
    %3277 = vmatprep.subr.mxu0 0.0
    %3278 = vmatpush1.msra.mxu0 %v3248
    %3279 = vmatprep.subr.mxu0 0.0
    %3280 = vmatpush1.msra.mxu0 %v3249
    %3281 = vmatprep.subr.mxu0 0.0
    %3282 = vmatpush1.msra.mxu0 %v3250
    %3283 = vmatprep.subr.mxu0 0.0
    %3284 = vmatpush1.msra.mxu0 %v3251
    %3285 = vmatprep.subr.mxu0 0.0
    %3286 = vmatpush1.msra.mxu0 %v3252
    %3287 = vmatprep.subr.mxu0 0.0
    %3288 = vmatpush1.msra.mxu0 %v3253
    %3289 = vmatprep.subr.mxu0 0.0
    %3290 = vmatpush1.msra.mxu0 %v3254
    %3291 = vmatprep.subr.mxu0 0.0
    %3292 = vmatpush1.msra.mxu0 %v3255
    %3293 = vmatprep.subr.mxu0 0.0
    %3294 = vmatpush1.msra.mxu0 %v3256
    %3295 = vmatprep.subr.mxu0 0.0
    %3296 = vmatpush1.msra.mxu0 %v3257
    %3297 = vmatprep.subr.mxu0 0.0
    %3298 = vmatpush1.msra.mxu0 0.0
    %3299 = vmatprep.subr.mxu0 0.0
    %3300 = vmatpush1.msra.mxu0 0.0
    %3301 = vmatprep.subr.mxu0 0.0
    %3302 = vmatpush1.msra.mxu0 0.0
    %3303 = vmatprep.subr.mxu0 0.0
    %3304 = vmatpush1.msra.mxu0 0.0
    %3305 = vmatprep.subr.mxu0 0.0
    %3306 = vmatpush1.msra.mxu0 0.0
    %3307 = vmatprep.subr.mxu0 0.0
    %3308 = vmatpush1.msra.mxu0 0.0
    %3309 = vmatprep.subr.mxu0 0.0
    %3310 = vmatpush1.msra.mxu0 0.0
    %3311 = vmatprep.subr.mxu0 0.0
    %3312 = vmatpush1.msra.mxu0 0.0
    %3313 = vmatprep.subr.mxu0 0.0
    %3314 = vmatpush1.msra.mxu0 0.0
    %3315 = vmatprep.subr.mxu0 0.0
    %3316 = vmatpush1.msra.mxu0 0.0
    %3317 = vmatprep.subr.mxu0 0.0
    %3318 = vmatpush1.msra.mxu0 0.0
    %3319 = vmatprep.subr.mxu0 0.0
    %3320 = vmatpush1.msra.mxu0 0.0
    %3321 = vmatprep.subr.mxu0 0.0
    %3322 = vmatpush1.msra.mxu0 0.0
    %3323 = vmatprep.subr.mxu0 0.0
    %3324 = vmatpush1.msra.mxu0 0.0
    %3325 = vmatprep.subr.mxu0 0.0
    %3326 = vmatpush1.msra.mxu0 0.0
    %3327 = vmatprep.subr.mxu0 0.0
    %3328 = vmatpush1.msra.mxu0 0.0
    %3329 = vmatprep.mubr.f32.mxu0 0.0
    %3330 = vmatmul.mubr.f32.gmra.mrb[0].mxu0 %v3241
    %v3331 = vpop.f32.mrb[0].mxu0
    %v3332 = vadd.f32 %v3263, %v3331
    %v3333 = vpop.f32.mrb[0].mxu0
    %3334 = vdwg.mxu0
    %v3335 = vmax.f32 %v3332, 0.0
    %v3336 = vld [vmem:[%s8] sm:$0xff]
    %v3337 = vld [vmem:[%s8 + $0x8] sm:$0xff]
    %v3338 = vld [vmem:[%s8 + $0x10] sm:$0xff]
    %v3339 = vld [vmem:[%s8 + $0x18] sm:$0xff]
    %v3340 = vld [vmem:[%s8 + $0x20] sm:$0xff]
    %v3341 = vld [vmem:[%s8 + $0x28] sm:$0xff]
    %v3342 = vld [vmem:[%s8 + $0x30] sm:$0xff]
    %v3343 = vld [vmem:[%s8 + $0x38] sm:$0xff]
    %v3344 = vld [vmem:[%s8 + $0x40] sm:$0xff]
    %v3345 = vld [vmem:[%s8 + $0x48] sm:$0xff]
    %v3346 = vld [vmem:[%s8 + $0x50] sm:$0xff]
    %v3347 = vld [vmem:[%s8 + $0x58] sm:$0xff]
    %v3348 = vld [vmem:[%s8 + $0x60] sm:$0xff]
    %v3349 = vld [vmem:[%s8 + $0x68] sm:$0xff]
    %v3350 = vld [vmem:[%s8 + $0x70] sm:$0xff]
    %v3351 = vld [vmem:[%s8 + $0x78] sm:$0xff]
    %v3352 = vld [vmem:[#allocation2] sm:$0x1]
    %v3354 = vlaneseq
    %v3355 = vshrl.u32 %v3354, 7
    %v3356 = vsub.s32 0, %v3355
    %v3357 = vrot.slane %v3352, %v3356
    %3359 = vmatprep.subr.mxu0 0.0
    %3360 = vmatpush1.msra.mxu0 %v3336
    %3361 = vmatprep.subr.mxu0 0.0
    %3362 = vmatpush1.msra.mxu0 %v3337
    %3363 = vmatprep.subr.mxu0 0.0
    %3364 = vmatpush1.msra.mxu0 %v3338
    %3365 = vmatprep.subr.mxu0 0.0
    %3366 = vmatpush1.msra.mxu0 %v3339
    %3367 = vmatprep.subr.mxu0 0.0
    %3368 = vmatpush1.msra.mxu0 %v3340
    %3369 = vmatprep.subr.mxu0 0.0
    %3370 = vmatpush1.msra.mxu0 %v3341
    %3371 = vmatprep.subr.mxu0 0.0
    %3372 = vmatpush1.msra.mxu0 %v3342
    %3373 = vmatprep.subr.mxu0 0.0
    %3374 = vmatpush1.msra.mxu0 %v3343
    %3375 = vmatprep.subr.mxu0 0.0
    %3376 = vmatpush1.msra.mxu0 %v3344
    %3377 = vmatprep.subr.mxu0 0.0
    %3378 = vmatpush1.msra.mxu0 %v3345
    %3379 = vmatprep.subr.mxu0 0.0
    %3380 = vmatpush1.msra.mxu0 %v3346
    %3381 = vmatprep.subr.mxu0 0.0
    %3382 = vmatpush1.msra.mxu0 %v3347
    %3383 = vmatprep.subr.mxu0 0.0
    %3384 = vmatpush1.msra.mxu0 %v3348
    %3385 = vmatprep.subr.mxu0 0.0
    %3386 = vmatpush1.msra.mxu0 %v3349
    %3387 = vmatprep.subr.mxu0 0.0
    %3388 = vmatpush1.msra.mxu0 %v3350
    %3389 = vmatprep.subr.mxu0 0.0
    %3390 = vmatpush1.msra.mxu0 %v3351
    %3391 = vmatprep.subr.mxu0 0.0
    %3392 = vmatpush1.msra.mxu0 0.0
    %3393 = vmatprep.subr.mxu0 0.0
    %3394 = vmatpush1.msra.mxu0 0.0
    %3395 = vmatprep.subr.mxu0 0.0
    %3396 = vmatpush1.msra.mxu0 0.0
    %3397 = vmatprep.subr.mxu0 0.0
    %3398 = vmatpush1.msra.mxu0 0.0
    %3399 = vmatprep.subr.mxu0 0.0
    %3400 = vmatpush1.msra.mxu0 0.0
    %3401 = vmatprep.subr.mxu0 0.0
    %3402 = vmatpush1.msra.mxu0 0.0
    %3403 = vmatprep.subr.mxu0 0.0
    %3404 = vmatpush1.msra.mxu0 0.0
    %3405 = vmatprep.subr.mxu0 0.0
    %3406 = vmatpush1.msra.mxu0 0.0
    %3407 = vmatprep.subr.mxu0 0.0
    %3408 = vmatpush1.msra.mxu0 0.0
    %3409 = vmatprep.subr.mxu0 0.0
    %3410 = vmatpush1.msra.mxu0 0.0
    %3411 = vmatprep.subr.mxu0 0.0
    %3412 = vmatpush1.msra.mxu0 0.0
    %3413 = vmatprep.subr.mxu0 0.0
    %3414 = vmatpush1.msra.mxu0 0.0
    %3415 = vmatprep.subr.mxu0 0.0
    %3416 = vmatpush1.msra.mxu0 0.0
    %3417 = vmatprep.subr.mxu0 0.0
    %3418 = vmatpush1.msra.mxu0 0.0
    %3419 = vmatprep.subr.mxu0 0.0
    %3420 = vmatpush1.msra.mxu0 0.0
    %3421 = vmatprep.subr.mxu0 0.0
    %3422 = vmatpush1.msra.mxu0 0.0
    %3423 = vmatprep.mubr.f32.mxu0 0.0
    %3424 = vmatmul.mubr.f32.gmra.mrb[0].mxu0 %v3335
    %v3425 = vpop.f32.mrb[0].mxu0
    %v3426 = vadd.f32 %v3357, %v3425
    %v3427 = vpop.f32.mrb[0].mxu0
    %3428 = vdwg.mxu0
    %v3429 = vxor.u32 %v3426, 2147483648
    %v3430 = vmul.f32 %v3429, 1.442695
    %v3431 = vpow.pop %v3430
    %v3432 = vadd.f32 %v3431, 1.0
    %v3433 = vrcp.pop %v3432
    %v3434 = vmul.f32 1.0, %v3433
    %vm3435 = vcmask 3072
    %3436 = vst.msk [vmem:[%s10] sm:$0xf] %vm3435, %v3434
    // Predicated region
    $region58: #{net_forward.1} parent=1 // pred_check
      _
    $region59: #{net_forward.1} parent=1 // pred_check_branch
      %3438 = sbr.rel (0) target = $region61
    $region60: #{net_forward.1} parent=1 // pred_region
      _
    $region61: #{net_forward.1} parent=1 // pred_fallthru
      _
    // Predicated region
    $region62: #{net_forward.1} parent=1 // pred_check
      _
    $region63: #{net_forward.1} parent=1 // pred_check_branch
      %3440 = sbr.rel (0) target = $region65
    $region64: #{net_forward.1} parent=1 // pred_region
      _
    $region65: #{net_forward.1} parent=1 // pred_fallthru
      _
    %3441 = vsyncpa [#allocation4], 1
    %3442 = vsyncpa [#allocation8], 1
    %3443 = vsyncpa [#allocation5], 1

</llo_original>
